<compile_context>
chip_gen: v7x
topology: tpu7x:2x2x1
jax: 0.10.0
libtpu: 0.0.40
codegen_flags: <defaults>
</compile_context>

<pallas_src>
import functools

import jax
import jax.numpy as jnp
from jax import lax
from jax.experimental import pallas as pl
from jax.experimental.pallas import tpu as pltpu


# -----------------------------------------------------------------------------
# Pallas kernel: Attention forward for one (bt, C, HW) batch tile
# -----------------------------------------------------------------------------
def _attention_kernel(x_ref, w1t_ref, w2t_ref, k7m_ref, k7a_ref,
                      k3am_ref, k3aa_ref, k3b_ref, bias_ref, o_ref):
    f32 = jnp.float32
    bf16 = jnp.bfloat16

    x = x_ref[...]                                       # (bt, C, HW) f32
    bt, c, hw = x.shape
    inv_hw = 1.0 / float(hw)
    inv_c = 1.0 / float(c)

    # ---------------- Channel attention ----------------
    avg_c = jnp.sum(x, axis=2) * inv_hw                  # (bt, C)
    max_c = jnp.max(x, axis=2)                           # (bt, C)
    pooled = jnp.concatenate([avg_c, max_c], axis=0)     # (2*bt, C)
    hidden = jnp.maximum(
        jnp.dot(pooled.astype(bf16), w1t_ref[...],
                preferred_element_type=f32), 0.0)        # (2*bt, Cr)
    fc = jnp.dot(hidden.astype(bf16), w2t_ref[...],
                 preferred_element_type=f32)             # (2*bt, C)
    v_ch = jax.nn.sigmoid(fc[:bt] + fc[bt:])             # (bt, C)

    out1 = x * v_ch[:, :, None]                          # gating multiply #1

    # --------- Channel-pooled maps (computed once, reused algebraically) -----
    m1 = jnp.max(out1, axis=1)                           # (bt, HW)
    a1 = jnp.sum(out1, axis=1) * inv_c                   # (bt, HW)

    # ---------------- Spatial attention: 7x7 conv as two MXU dots ------------
    pre7 = (jnp.dot(m1.astype(bf16), k7m_ref[...], preferred_element_type=f32)
            + jnp.dot(a1.astype(bf16), k7a_ref[...], preferred_element_type=f32)
            + bias_ref[0])
    v_sp = jax.nn.sigmoid(pre7)                          # (bt, HW)

    # ---------------- "Spectial" attention (3x3 -> ReLU -> 3x3) --------------
    # v_sp > 0 and is channel-independent, so max/mean over channels of
    # (out1 * v_sp) are exactly v_sp * m1 and v_sp * a1.
    m2 = v_sp * m1
    a2 = v_sp * a1
    hmid = jnp.maximum(
        jnp.dot(m2.astype(bf16), k3am_ref[...], preferred_element_type=f32)
        + jnp.dot(a2.astype(bf16), k3aa_ref[...], preferred_element_type=f32)
        + bias_ref[1], 0.0)                              # (bt, HW)
    v_sc = jax.nn.sigmoid(
        jnp.dot(hmid.astype(bf16), k3b_ref[...], preferred_element_type=f32)
        + bias_ref[2])                                   # (bt, HW)

    # Single fused gating multiply for the spatial * spectial gates.
    gate = (v_sp * v_sc)[:, None, :]                     # (bt, 1, HW)
    o_ref[...] = (out1 * gate).astype(o_ref.dtype)


# -----------------------------------------------------------------------------
# Plain-JAX parameter packing (outside the kernel)
# -----------------------------------------------------------------------------
def _conv_channel_matrix(w_kk, hh, ww):
    """Dense (HW, HW) linear operator of a zero-padded 'same' conv for one
    input channel: out_flat = in_flat @ M."""
    k = w_kk.shape[0]
    p = k // 2
    hw = hh * ww
    idx = jnp.arange(hw)
    yi = (idx // ww)[:, None]
    xi = (idx % ww)[:, None]
    yo = (idx // ww)[None, :]
    xo = (idx % ww)[None, :]
    dy = yi - yo + p
    dx = xi - xo + p
    valid = (dy >= 0) & (dy < k) & (dx >= 0) & (dx < k)
    dyc = jnp.clip(dy, 0, k - 1)
    dxc = jnp.clip(dx, 0, k - 1)
    return jnp.where(valid, w_kk[dyc, dxc], 0.0).astype(jnp.float32)


def pack_attention_params(w1, w2, w7, b7, w3a, b3a, w3b, b3b, h, w):
    """Pack PyTorch-layout params into kernel-friendly (bf16) operators."""
    wdt = jnp.bfloat16
    w1t = jnp.asarray(w1, jnp.float32).T.astype(wdt)          # (C, Cr) = W1.T
    w2t = jnp.asarray(w2, jnp.float32).T.astype(wdt)          # (Cr, C) = W2.T
    w7f = jnp.asarray(w7, jnp.float32)
    w3af = jnp.asarray(w3a, jnp.float32)
    w3bf = jnp.asarray(w3b, jnp.float32)
    # torch.cat((max, avg), dim=1): in-channel 0 = max map, 1 = avg map.
    k7m = _conv_channel_matrix(w7f[0, 0], h, w).astype(wdt)   # (HW, HW)
    k7a = _conv_channel_matrix(w7f[0, 1], h, w).astype(wdt)
    k3am = _conv_channel_matrix(w3af[0, 0], h, w).astype(wdt)
    k3aa = _conv_channel_matrix(w3af[0, 1], h, w).astype(wdt)
    k3b = _conv_channel_matrix(w3bf[0, 0], h, w).astype(wdt)
    biases = jnp.stack([jnp.asarray(b7), jnp.asarray(b3a),
                        jnp.asarray(b3b)]).astype(jnp.float32)
    return w1t, w2t, k7m, k7a, k3am, k3aa, k3b, biases


# -----------------------------------------------------------------------------
# Device info / tile selection
# -----------------------------------------------------------------------------
@functools.lru_cache(maxsize=None)
def _device_info():
    vmem_cap = 64 << 20                       # conservative fallback
    try:
        info = pltpu.get_tpu_info()
        vmem_cap = int(getattr(info, "vmem_capacity_bytes", vmem_cap))
    except Exception:
        pass
    n_cores = 1
    try:
        kind = jax.devices()[0].device_kind.lower()
        if "v7" in kind or "tpu7" in kind:
            n_cores = 2
    except Exception:
        pass
    return vmem_cap, n_cores


def _pick_batch_tile(b, c, hw, n_cores, vmem_cap, weight_bytes):
    """Largest divisor of b whose (bt, C, HW) f32 block fits the VMEM target.

    Single-TC chips get the biggest possible block (the grid is a serial
    loop); dual-TC chips only shard the batch when each core's block is
    still >= 512 KiB.
    """
    padded_c = ((c + 7) // 8) * 8                     # sublane padding of C
    per_image = padded_c * hw * 4                     # f32 block bytes / image
    budget = max(per_image,
                 int(vmem_cap * 7 // 8) - 2 * weight_bytes - (8 << 20))
    target = min(16 << 20, max(per_image, budget // 6))
    bt_cap = max(1, min(b, target // per_image))
    if n_cores >= 2 and b >= 2:
        per_core = (b + n_cores - 1) // n_cores
        if per_core * per_image >= (512 << 10):
            bt_cap = min(bt_cap, per_core)
    bt = 1
    for cand in range(1, min(b, bt_cap) + 1):
        if b % cand == 0:
            bt = cand
    return bt


# -----------------------------------------------------------------------------
# Wrapper
# -----------------------------------------------------------------------------
def _forward_impl(x, w1t, w2t, k7m, k7a, k3am, k3aa, k3b, biases,
                  single_buffer):
    b, c, h, w = x.shape
    hw = h * w
    cr = w1t.shape[1]

    # Free, layout-preserving reshape -> lane-dense (HW multiple of 128 here).
    x_flat = x.reshape(b, c, hw)

    vmem_cap, n_cores = _device_info()
    weight_bytes = sum(int(a.size) * a.dtype.itemsize
                       for a in (w1t, w2t, k7m, k7a, k3am, k3aa, k3b))
    bt = _pick_batch_tile(b, c, hw, n_cores, vmem_cap, weight_bytes)
    grid = (b // bt,)

    padded_c = ((c + 7) // 8) * 8
    block_bytes = bt * padded_c * hw * 4
    vmem_needed = 4 * block_bytes + 2 * weight_bytes + (2 << 20)
    vmem_limit = int(min(max(int(vmem_needed * 1.5), 32 << 20),
                         (vmem_cap * 7) // 8))

    def const_spec(shape):
        idx = lambda i: (0,) * len(shape)
        if single_buffer:
            # Constant across the grid -> no need for double buffering.
            return pl.BlockSpec(shape, idx, pipeline_mode=pl.Buffered(1))
        return pl.BlockSpec(shape, idx)

    in_specs = [
        pl.BlockSpec((bt, c, hw), lambda i: (i, 0, 0)),      # x
        const_spec((c, cr)),                                 # W1.T
        const_spec((cr, c)),                                 # W2.T
        const_spec((hw, hw)),                                # 7x7 op (max ch)
        const_spec((hw, hw)),                                # 7x7 op (avg ch)
        const_spec((hw, hw)),                                # 3x3a op (max ch)
        const_spec((hw, hw)),                                # 3x3a op (avg ch)
        const_spec((hw, hw)),                                # 3x3b op
        pl.BlockSpec(memory_space=pltpu.MemorySpace.SMEM),   # biases (3,)
    ]

    out_flat = pl.pallas_call(
        _attention_kernel,
        out_shape=jax.ShapeDtypeStruct((b, c, hw), x.dtype),
        grid=grid,
        in_specs=in_specs,
        out_specs=pl.BlockSpec((bt, c, hw), lambda i: (i, 0, 0)),
        compiler_params=pltpu.CompilerParams(
            dimension_semantics=("parallel",),
            vmem_limit_bytes=vmem_limit),
    )(x_flat, w1t, w2t, k7m, k7a, k3am, k3aa, k3b, biases)

    return out_flat.reshape(b, c, h, w)


_forward_jit = jax.jit(_forward_impl, static_argnums=(9,))
_WEIGHT_SINGLE_BUFFER = True


def attention_forward(x, w1t, w2t, k7m, k7a, k3am, k3aa, k3b, biases):
    global _WEIGHT_SINGLE_BUFFER
    args = (x, w1t, w2t, k7m, k7a, k3am, k3aa, k3b, biases)
    if _WEIGHT_SINGLE_BUFFER:
        try:
            return _forward_jit(*args, True)
        except Exception:
            # pipeline_mode / Buffered(1) unsupported -> default buffering.
            _WEIGHT_SINGLE_BUFFER = False
    return _forward_jit(*args, False)


# -----------------------------------------------------------------------------
# Pure-JAX reference (mirrors the PyTorch module) for verification
# -----------------------------------------------------------------------------
def attention_reference(x, w1, w2, w7, b7, w3a, b3a, w3b, b3b):
    dn = ("NCHW", "OIHW", "NCHW")
    hp = lax.Precision.HIGHEST

    def fc(v):  # v: (B, C)
        h1 = jnp.maximum(jnp.dot(v, w1.T, precision=hp), 0.0)
        return jnp.dot(h1, w2.T, precision=hp)

    # channel attention
    avg = jnp.mean(x, axis=(2, 3))
    mx = jnp.max(x, axis=(2, 3))
    v = jax.nn.sigmoid(fc(avg) + fc(mx))[:, :, None, None]
    out = x * v
    # spatial attention (7x7)
    avg_s = jnp.mean(out, axis=1, keepdims=True)
    max_s = jnp.max(out, axis=1, keepdims=True)
    inp = jnp.concatenate([max_s, avg_s], axis=1)
    vs = lax.conv_general_dilated(inp, w7, (1, 1), [(3, 3), (3, 3)],
                                  dimension_numbers=dn, precision=hp) + b7
    out = out * jax.nn.sigmoid(vs)
    # "spectial" attention (3x3 -> relu -> 3x3)
    avg_s = jnp.mean(out, axis=1, keepdims=True)
    max_s = jnp.max(out, axis=1, keepdims=True)
    inp = jnp.concatenate([max_s, avg_s], axis=1)
    hmid = jnp.maximum(
        lax.conv_general_dilated(inp, w3a, (1, 1), [(1, 1), (1, 1)],
                                 dimension_numbers=dn, precision=hp) + b3a, 0.0)
    vs = lax.conv_general_dilated(hmid, w3b, (1, 1), [(1, 1), (1, 1)],
                                  dimension_numbers=dn, precision=hp) + b3b
    return out * jax.nn.sigmoid(vs)


# -----------------------------------------------------------------------------
if __name__ == "__main__":
    B, C, H, W = 2, 4, 16, 16
    RATIO = 2
    CR = C // RATIO

    key = jax.random.PRNGKey(0)
    k = jax.random.split(key, 8)

    x = jax.random.normal(k[0], (B, C, H, W), jnp.float32)

    # Channel attention FC weights (PyTorch nn.Linear: (out, in), no bias)
    w1 = jax.random.normal(k[1], (CR, C), jnp.float32) * 0.3
    w2 = jax.random.normal(k[2], (C, CR), jnp.float32) * 0.3
    # Spatial attention conv: Conv2d(2, 1, 7, padding=3)  (OIHW) + bias
    w7 = jax.random.normal(k[3], (1, 2, 7, 7), jnp.float32) * 0.1
    b7 = jnp.float32(0.05)
    # Spectial attention convs: Conv2d(2,1,3,p=1) -> ReLU -> Conv2d(1,1,3,p=1)
    w3a = jax.random.normal(k[4], (1, 2, 3, 3), jnp.float32) * 0.2
    b3a = jnp.float32(-0.02)
    w3b = jax.random.normal(k[5], (1, 1, 3, 3), jnp.float32) * 0.2
    b3b = jnp.float32(0.03)

    params = pack_attention_params(w1, w2, w7, b7, w3a, b3a, w3b, b3b, H, W)

    out = jax.block_until_ready(attention_forward(x, *params))

    ref = jax.block_until_ready(
        attention_reference(x, w1, w2, w7, b7, w3a, b3a, w3b, b3b))

    assert out.shape == (B, C, H, W) and out.dtype == jnp.float32
    max_err = float(jnp.max(jnp.abs(out - ref)))
    # Weights are stored in bf16 (f32 accumulation) -> relaxed tolerance.
    assert max_err < 5e-2, f"max abs err vs reference: {max_err}"

    print("KERNEL_OK")
</pallas_src>

<mosaic_0001>
module attributes {stable_mosaic.version = 11 : i64} {
  func.func @_attention_kernel(%arg0: i32, %arg1: memref<2x4x256xf32, #tpu.memory_space<vmem>>, %arg2: memref<4x2xbf16, #tpu.memory_space<vmem>>, %arg3: memref<2x4xbf16, #tpu.memory_space<vmem>>, %arg4: memref<256x256xbf16, #tpu.memory_space<vmem>>, %arg5: memref<256x256xbf16, #tpu.memory_space<vmem>>, %arg6: memref<256x256xbf16, #tpu.memory_space<vmem>>, %arg7: memref<256x256xbf16, #tpu.memory_space<vmem>>, %arg8: memref<256x256xbf16, #tpu.memory_space<vmem>>, %arg9: memref<3xf32, #tpu.memory_space<smem>>, %arg10: memref<2x4x256xf32, #tpu.memory_space<vmem>>) attributes {dimension_semantics = [#tpu.dimension_semantics<parallel>], iteration_bounds = array<i64: 1>, scalar_prefetch = 0 : i64, scratch_operands = 0 : i64, tpu.core_type = #tpu.core_type<tc>, window_params = [{transform_indices = @transform_0, window_bounds = array<i64: 2, 4, 256>}, {pipeline_mode = #tpu.pipeline_mode<synchronous>, transform_indices = @transform_1, window_bounds = array<i64: 4, 2>}, {pipeline_mode = #tpu.pipeline_mode<synchronous>, transform_indices = @transform_2, window_bounds = array<i64: 2, 4>}, {pipeline_mode = #tpu.pipeline_mode<synchronous>, transform_indices = @transform_3, window_bounds = array<i64: 256, 256>}, {pipeline_mode = #tpu.pipeline_mode<synchronous>, transform_indices = @transform_4, window_bounds = array<i64: 256, 256>}, {pipeline_mode = #tpu.pipeline_mode<synchronous>, transform_indices = @transform_5, window_bounds = array<i64: 256, 256>}, {pipeline_mode = #tpu.pipeline_mode<synchronous>, transform_indices = @transform_6, window_bounds = array<i64: 256, 256>}, {pipeline_mode = #tpu.pipeline_mode<synchronous>, transform_indices = @transform_7, window_bounds = array<i64: 256, 256>}, {transform_indices = @transform_8, window_bounds = array<i64: 3>}, {transform_indices = @transform_9, window_bounds = array<i64: 2, 4, 256>}]} {
    %c0 = arith.constant 0 : index
    %c0_0 = arith.constant 0 : index
    %c0_1 = arith.constant 0 : index
    %0 = vector.load %arg1[%c0, %c0_0, %c0_1] : memref<2x4x256xf32, #tpu.memory_space<vmem>>, vector<2x4x256xf32>
    %cst = arith.constant dense<0.000000e+00> : vector<2x4xf32>
    %1 = vector.multi_reduction <add>, %0, %cst [2] : vector<2x4x256xf32> to vector<2x4xf32>
    %cst_2 = arith.constant 3.906250e-03 : f32
    %2 = vector.broadcast %cst_2 : f32 to vector<2x4xf32>
    %3 = arith.mulf %1, %2 : vector<2x4xf32>
    %cst_3 = arith.constant dense<0xFF800000> : vector<2x4xf32>
    %4 = vector.multi_reduction <maximumf>, %0, %cst_3 [2] : vector<2x4x256xf32> to vector<2x4xf32>
    %5 = tpu.concatenate %3, %4 in 0 : vector<2x4xf32>, vector<2x4xf32> -> vector<4x4xf32>
    %6 = arith.truncf %5 : vector<4x4xf32> to vector<4x4xbf16>
    %c0_4 = arith.constant 0 : index
    %c0_5 = arith.constant 0 : index
    %7 = vector.load %arg2[%c0_4, %c0_5] : memref<4x2xbf16, #tpu.memory_space<vmem>>, vector<4x2xbf16>
    %cst_6 = arith.constant dense<0.000000e+00> : vector<4x2xf32>
    %8 = tpu.matmul %6, %7, %cst_6 {dimension_numbers = #tpu.dot_dimension_numbers<[1], [0], [0], [1], [0, 0, 1, 1], [], []>} : vector<4x4xbf16>, vector<4x2xbf16>, vector<4x2xf32> -> vector<4x2xf32>
    %cst_7 = arith.constant 0.000000e+00 : f32
    %9 = vector.broadcast %cst_7 : f32 to vector<4x2xf32>
    %10 = arith.maximumf %8, %9 : vector<4x2xf32>
    %11 = arith.truncf %10 : vector<4x2xf32> to vector<4x2xbf16>
    %c0_8 = arith.constant 0 : index
    %c0_9 = arith.constant 0 : index
    %12 = vector.load %arg3[%c0_8, %c0_9] : memref<2x4xbf16, #tpu.memory_space<vmem>>, vector<2x4xbf16>
    %cst_10 = arith.constant dense<0.000000e+00> : vector<4x4xf32>
    %13 = tpu.matmul %11, %12, %cst_10 {dimension_numbers = #tpu.dot_dimension_numbers<[1], [0], [0], [1], [0, 0, 1, 1], [], []>} : vector<4x2xbf16>, vector<2x4xbf16>, vector<4x4xf32> -> vector<4x4xf32>
    %14 = vector.extract_strided_slice %13 {offsets = [0, 0], sizes = [2, 4], strides = [1, 1]} : vector<4x4xf32> to vector<2x4xf32>
    %15 = vector.extract_strided_slice %13 {offsets = [2, 0], sizes = [2, 4], strides = [1, 1]} : vector<4x4xf32> to vector<2x4xf32>
    %16 = arith.addf %14, %15 : vector<2x4xf32>
    %17 = arith.negf %16 : vector<2x4xf32>
    %18 = math.exp %17 : vector<2x4xf32>
    %cst_11 = arith.constant 1.000000e+00 : f32
    %19 = vector.broadcast %cst_11 : f32 to vector<2x4xf32>
    %20 = arith.addf %19, %18 : vector<2x4xf32>
    %21 = arith.divf %19, %20 : vector<2x4xf32>
    %22 = vector.shape_cast %21 : vector<2x4xf32> to vector<2x4x1xf32>
    %23 = vector.broadcast %22 : vector<2x4x1xf32> to vector<2x4x256xf32>
    %24 = arith.mulf %0, %23 : vector<2x4x256xf32>
    %cst_12 = arith.constant dense<0xFF800000> : vector<2x256xf32>
    %25 = vector.multi_reduction <maximumf>, %24, %cst_12 [1] : vector<2x4x256xf32> to vector<2x256xf32>
    %cst_13 = arith.constant dense<0.000000e+00> : vector<2x256xf32>
    %26 = vector.multi_reduction <add>, %24, %cst_13 [1] : vector<2x4x256xf32> to vector<2x256xf32>
    %cst_14 = arith.constant 2.500000e-01 : f32
    %27 = vector.broadcast %cst_14 : f32 to vector<2x256xf32>
    %28 = arith.mulf %26, %27 : vector<2x256xf32>
    %29 = arith.truncf %25 : vector<2x256xf32> to vector<2x256xbf16>
    %c0_15 = arith.constant 0 : index
    %c0_16 = arith.constant 0 : index
    %30 = vector.load %arg4[%c0_15, %c0_16] : memref<256x256xbf16, #tpu.memory_space<vmem>>, vector<256x256xbf16>
    %cst_17 = arith.constant dense<0.000000e+00> : vector<2x256xf32>
    %31 = tpu.matmul %29, %30, %cst_17 {dimension_numbers = #tpu.dot_dimension_numbers<[1], [0], [0], [1], [0, 0, 1, 1], [], []>} : vector<2x256xbf16>, vector<256x256xbf16>, vector<2x256xf32> -> vector<2x256xf32>
    %32 = arith.truncf %28 : vector<2x256xf32> to vector<2x256xbf16>
    %c0_18 = arith.constant 0 : index
    %c0_19 = arith.constant 0 : index
    %33 = vector.load %arg5[%c0_18, %c0_19] : memref<256x256xbf16, #tpu.memory_space<vmem>>, vector<256x256xbf16>
    %cst_20 = arith.constant dense<0.000000e+00> : vector<2x256xf32>
    %34 = tpu.matmul %32, %33, %cst_20 {dimension_numbers = #tpu.dot_dimension_numbers<[1], [0], [0], [1], [0, 0, 1, 1], [], []>} : vector<2x256xbf16>, vector<256x256xbf16>, vector<2x256xf32> -> vector<2x256xf32>
    %35 = arith.addf %31, %34 : vector<2x256xf32>
    %c0_21 = arith.constant 0 : index
    %36 = memref.load %arg9[%c0_21] : memref<3xf32, #tpu.memory_space<smem>>
    %37 = vector.broadcast %36 : f32 to vector<2x256xf32>
    %38 = arith.addf %35, %37 : vector<2x256xf32>
    %39 = arith.negf %38 : vector<2x256xf32>
    %40 = math.exp %39 : vector<2x256xf32>
    %cst_22 = arith.constant 1.000000e+00 : f32
    %41 = vector.broadcast %cst_22 : f32 to vector<2x256xf32>
    %42 = arith.addf %41, %40 : vector<2x256xf32>
    %43 = arith.divf %41, %42 : vector<2x256xf32>
    %44 = arith.mulf %43, %25 : vector<2x256xf32>
    %45 = arith.mulf %43, %28 : vector<2x256xf32>
    %46 = arith.truncf %44 : vector<2x256xf32> to vector<2x256xbf16>
    %c0_23 = arith.constant 0 : index
    %c0_24 = arith.constant 0 : index
    %47 = vector.load %arg6[%c0_23, %c0_24] : memref<256x256xbf16, #tpu.memory_space<vmem>>, vector<256x256xbf16>
    %cst_25 = arith.constant dense<0.000000e+00> : vector<2x256xf32>
    %48 = tpu.matmul %46, %47, %cst_25 {dimension_numbers = #tpu.dot_dimension_numbers<[1], [0], [0], [1], [0, 0, 1, 1], [], []>} : vector<2x256xbf16>, vector<256x256xbf16>, vector<2x256xf32> -> vector<2x256xf32>
    %49 = arith.truncf %45 : vector<2x256xf32> to vector<2x256xbf16>
    %c0_26 = arith.constant 0 : index
    %c0_27 = arith.constant 0 : index
    %50 = vector.load %arg7[%c0_26, %c0_27] : memref<256x256xbf16, #tpu.memory_space<vmem>>, vector<256x256xbf16>
    %cst_28 = arith.constant dense<0.000000e+00> : vector<2x256xf32>
    %51 = tpu.matmul %49, %50, %cst_28 {dimension_numbers = #tpu.dot_dimension_numbers<[1], [0], [0], [1], [0, 0, 1, 1], [], []>} : vector<2x256xbf16>, vector<256x256xbf16>, vector<2x256xf32> -> vector<2x256xf32>
    %52 = arith.addf %48, %51 : vector<2x256xf32>
    %c1 = arith.constant 1 : index
    %53 = memref.load %arg9[%c1] : memref<3xf32, #tpu.memory_space<smem>>
    %54 = vector.broadcast %53 : f32 to vector<2x256xf32>
    %55 = arith.addf %52, %54 : vector<2x256xf32>
    %cst_29 = arith.constant 0.000000e+00 : f32
    %56 = vector.broadcast %cst_29 : f32 to vector<2x256xf32>
    %57 = arith.maximumf %55, %56 : vector<2x256xf32>
    %58 = arith.truncf %57 : vector<2x256xf32> to vector<2x256xbf16>
    %c0_30 = arith.constant 0 : index
    %c0_31 = arith.constant 0 : index
    %59 = vector.load %arg8[%c0_30, %c0_31] : memref<256x256xbf16, #tpu.memory_space<vmem>>, vector<256x256xbf16>
    %cst_32 = arith.constant dense<0.000000e+00> : vector<2x256xf32>
    %60 = tpu.matmul %58, %59, %cst_32 {dimension_numbers = #tpu.dot_dimension_numbers<[1], [0], [0], [1], [0, 0, 1, 1], [], []>} : vector<2x256xbf16>, vector<256x256xbf16>, vector<2x256xf32> -> vector<2x256xf32>
    %c2 = arith.constant 2 : index
    %61 = memref.load %arg9[%c2] : memref<3xf32, #tpu.memory_space<smem>>
    %62 = vector.broadcast %61 : f32 to vector<2x256xf32>
    %63 = arith.addf %60, %62 : vector<2x256xf32>
    %64 = arith.negf %63 : vector<2x256xf32>
    %65 = math.exp %64 : vector<2x256xf32>
    %cst_33 = arith.constant 1.000000e+00 : f32
    %66 = vector.broadcast %cst_33 : f32 to vector<2x256xf32>
    %67 = arith.addf %66, %65 : vector<2x256xf32>
    %68 = arith.divf %66, %67 : vector<2x256xf32>
    %69 = arith.mulf %43, %68 : vector<2x256xf32>
    %70 = vector.shape_cast %69 : vector<2x256xf32> to vector<2x1x256xf32>
    %71 = vector.broadcast %70 : vector<2x1x256xf32> to vector<2x4x256xf32>
    %72 = arith.mulf %24, %71 : vector<2x4x256xf32>
    %c0_34 = arith.constant 0 : index
    %c0_35 = arith.constant 0 : index
    %c0_36 = arith.constant 0 : index
    %73 = vector.load %arg10[%c0_34, %c0_35, %c0_36] : memref<2x4x256xf32, #tpu.memory_space<vmem>>, vector<2x4x256xf32>
    tpu.vector_store %arg10[%c0_34, %c0_35, %c0_36], %72 {strides = array<i32>} : memref<2x4x256xf32, #tpu.memory_space<vmem>>, vector<2x4x256xf32>,
    return
  }
  func.func @transform_0(%arg0: i32) -> (i32, i32, i32) {
    %c0_i32 = arith.constant 0 : i32
    %c0_i32_0 = arith.constant 0 : i32
    %c0_i32_1 = arith.constant 0 : i32
    return %arg0, %c0_i32, %c0_i32_0 : i32, i32, i32
  }
  func.func @transform_1(%arg0: i32) -> (i32, i32) {
    %c0_i32 = arith.constant 0 : i32
    %c0_i32_0 = arith.constant 0 : i32
    %c0_i32_1 = arith.constant 0 : i32
    return %c0_i32, %c0_i32_0 : i32, i32
  }
  func.func @transform_2(%arg0: i32) -> (i32, i32) {
    %c0_i32 = arith.constant 0 : i32
    %c0_i32_0 = arith.constant 0 : i32
    %c0_i32_1 = arith.constant 0 : i32
    return %c0_i32, %c0_i32_0 : i32, i32
  }
  func.func @transform_3(%arg0: i32) -> (i32, i32) {
    %c0_i32 = arith.constant 0 : i32
    %c0_i32_0 = arith.constant 0 : i32
    %c0_i32_1 = arith.constant 0 : i32
    return %c0_i32, %c0_i32_0 : i32, i32
  }
  func.func @transform_4(%arg0: i32) -> (i32, i32) {
    %c0_i32 = arith.constant 0 : i32
    %c0_i32_0 = arith.constant 0 : i32
    %c0_i32_1 = arith.constant 0 : i32
    return %c0_i32, %c0_i32_0 : i32, i32
  }
  func.func @transform_5(%arg0: i32) -> (i32, i32) {
    %c0_i32 = arith.constant 0 : i32
    %c0_i32_0 = arith.constant 0 : i32
    %c0_i32_1 = arith.constant 0 : i32
    return %c0_i32, %c0_i32_0 : i32, i32
  }
  func.func @transform_6(%arg0: i32) -> (i32, i32) {
    %c0_i32 = arith.constant 0 : i32
    %c0_i32_0 = arith.constant 0 : i32
    %c0_i32_1 = arith.constant 0 : i32
    return %c0_i32, %c0_i32_0 : i32, i32
  }
  func.func @transform_7(%arg0: i32) -> (i32, i32) {
    %c0_i32 = arith.constant 0 : i32
    %c0_i32_0 = arith.constant 0 : i32
    %c0_i32_1 = arith.constant 0 : i32
    return %c0_i32, %c0_i32_0 : i32, i32
  }
  func.func @transform_8(%arg0: i32) -> i32 {
    %c0_i32 = arith.constant 0 : i32
    %c0_i32_0 = arith.constant 0 : i32
    return %c0_i32 : i32
  }
  func.func @transform_9(%arg0: i32) -> (i32, i32, i32) {
    %c0_i32 = arith.constant 0 : i32
    %c0_i32_0 = arith.constant 0 : i32
    %c0_i32_1 = arith.constant 0 : i32
    return %arg0, %c0_i32, %c0_i32_0 : i32, i32, i32
  }
}

module attributes {stable_mosaic.version = 11 : i64} {
  func.func @_attention_kernel(%arg0: i32, %arg1: memref<2x4x256xf32, #tpu.memory_space<vmem>>, %arg2: memref<4x2xbf16, #tpu.memory_space<vmem>>, %arg3: memref<2x4xbf16, #tpu.memory_space<vmem>>, %arg4: memref<256x256xbf16, #tpu.memory_space<vmem>>, %arg5: memref<256x256xbf16, #tpu.memory_space<vmem>>, %arg6: memref<256x256xbf16, #tpu.memory_space<vmem>>, %arg7: memref<256x256xbf16, #tpu.memory_space<vmem>>, %arg8: memref<256x256xbf16, #tpu.memory_space<vmem>>, %arg9: memref<3xf32, #tpu.memory_space<smem>>, %arg10: memref<2x4x256xf32, #tpu.memory_space<vmem>>) attributes {dimension_semantics = [#tpu.dimension_semantics<parallel>], iteration_bounds = array<i64: 1>, scalar_prefetch = 0 : i64, scratch_operands = 0 : i64, tpu.core_type = #tpu.core_type<tc>, window_params = [{transform_indices = @transform_0, window_bounds = array<i64: 2, 4, 256>}, {pipeline_mode = #tpu.pipeline_mode<synchronous>, transform_indices = @transform_1, window_bounds = array<i64: 4, 2>}, {pipeline_mode = #tpu.pipeline_mode<synchronous>, transform_indices = @transform_2, window_bounds = array<i64: 2, 4>}, {pipeline_mode = #tpu.pipeline_mode<synchronous>, transform_indices = @transform_3, window_bounds = array<i64: 256, 256>}, {pipeline_mode = #tpu.pipeline_mode<synchronous>, transform_indices = @transform_4, window_bounds = array<i64: 256, 256>}, {pipeline_mode = #tpu.pipeline_mode<synchronous>, transform_indices = @transform_5, window_bounds = array<i64: 256, 256>}, {pipeline_mode = #tpu.pipeline_mode<synchronous>, transform_indices = @transform_6, window_bounds = array<i64: 256, 256>}, {pipeline_mode = #tpu.pipeline_mode<synchronous>, transform_indices = @transform_7, window_bounds = array<i64: 256, 256>}, {transform_indices = @transform_8, window_bounds = array<i64: 3>}, {transform_indices = @transform_9, window_bounds = array<i64: 2, 4, 256>}]} {
    %c0 = arith.constant 0 : index
    %c0_0 = arith.constant 0 : index
    %c0_1 = arith.constant 0 : index
    %0 = vector.load %arg1[%c0, %c0_0, %c0_1] : memref<2x4x256xf32, #tpu.memory_space<vmem>>, vector<2x4x256xf32>
    %cst = arith.constant dense<0.000000e+00> : vector<2x4xf32>
    %1 = vector.multi_reduction <add>, %0, %cst [2] : vector<2x4x256xf32> to vector<2x4xf32>
    %cst_2 = arith.constant 3.906250e-03 : f32
    %2 = vector.broadcast %cst_2 : f32 to vector<2x4xf32>
    %3 = arith.mulf %1, %2 : vector<2x4xf32>
    %cst_3 = arith.constant dense<0xFF800000> : vector<2x4xf32>
    %4 = vector.multi_reduction <maximumf>, %0, %cst_3 [2] : vector<2x4x256xf32> to vector<2x4xf32>
    %5 = tpu.concatenate %3, %4 in 0 : vector<2x4xf32>, vector<2x4xf32> -> vector<4x4xf32>
    %6 = arith.truncf %5 : vector<4x4xf32> to vector<4x4xbf16>
    %c0_4 = arith.constant 0 : index
    %c0_5 = arith.constant 0 : index
    %7 = vector.load %arg2[%c0_4, %c0_5] : memref<4x2xbf16, #tpu.memory_space<vmem>>, vector<4x2xbf16>
    %cst_6 = arith.constant dense<0.000000e+00> : vector<4x2xf32>
    %8 = tpu.matmul %6, %7, %cst_6 {dimension_numbers = #tpu.dot_dimension_numbers<[1], [0], [0], [1], [0, 0, 1, 1], [], []>} : vector<4x4xbf16>, vector<4x2xbf16>, vector<4x2xf32> -> vector<4x2xf32>
    %cst_7 = arith.constant 0.000000e+00 : f32
    %9 = vector.broadcast %cst_7 : f32 to vector<4x2xf32>
    %10 = arith.maximumf %8, %9 : vector<4x2xf32>
    %11 = arith.truncf %10 : vector<4x2xf32> to vector<4x2xbf16>
    %c0_8 = arith.constant 0 : index
    %c0_9 = arith.constant 0 : index
    %12 = vector.load %arg3[%c0_8, %c0_9] : memref<2x4xbf16, #tpu.memory_space<vmem>>, vector<2x4xbf16>
    %cst_10 = arith.constant dense<0.000000e+00> : vector<4x4xf32>
    %13 = tpu.matmul %11, %12, %cst_10 {dimension_numbers = #tpu.dot_dimension_numbers<[1], [0], [0], [1], [0, 0, 1, 1], [], []>} : vector<4x2xbf16>, vector<2x4xbf16>, vector<4x4xf32> -> vector<4x4xf32>
    %14 = vector.extract_strided_slice %13 {offsets = [0, 0], sizes = [2, 4], strides = [1, 1]} : vector<4x4xf32> to vector<2x4xf32>
    %15 = vector.extract_strided_slice %13 {offsets = [2, 0], sizes = [2, 4], strides = [1, 1]} : vector<4x4xf32> to vector<2x4xf32>
    %16 = arith.addf %14, %15 : vector<2x4xf32>
    %17 = arith.negf %16 : vector<2x4xf32>
    %18 = math.exp %17 : vector<2x4xf32>
    %cst_11 = arith.constant 1.000000e+00 : f32
    %19 = vector.broadcast %cst_11 : f32 to vector<2x4xf32>
    %20 = arith.addf %19, %18 : vector<2x4xf32>
    %21 = arith.divf %19, %20 : vector<2x4xf32>
    %22 = vector.shape_cast %21 : vector<2x4xf32> to vector<2x4x1xf32>
    %23 = vector.broadcast %22 : vector<2x4x1xf32> to vector<2x4x256xf32>
    %24 = arith.mulf %0, %23 : vector<2x4x256xf32>
    %cst_12 = arith.constant dense<0xFF800000> : vector<2x256xf32>
    %25 = vector.multi_reduction <maximumf>, %24, %cst_12 [1] : vector<2x4x256xf32> to vector<2x256xf32>
    %cst_13 = arith.constant dense<0.000000e+00> : vector<2x256xf32>
    %26 = vector.multi_reduction <add>, %24, %cst_13 [1] : vector<2x4x256xf32> to vector<2x256xf32>
    %cst_14 = arith.constant 2.500000e-01 : f32
    %27 = vector.broadcast %cst_14 : f32 to vector<2x256xf32>
    %28 = arith.mulf %26, %27 : vector<2x256xf32>
    %29 = arith.truncf %25 : vector<2x256xf32> to vector<2x256xbf16>
    %c0_15 = arith.constant 0 : index
    %c0_16 = arith.constant 0 : index
    %30 = vector.load %arg4[%c0_15, %c0_16] : memref<256x256xbf16, #tpu.memory_space<vmem>>, vector<256x256xbf16>
    %cst_17 = arith.constant dense<0.000000e+00> : vector<2x256xf32>
    %31 = tpu.matmul %29, %30, %cst_17 {dimension_numbers = #tpu.dot_dimension_numbers<[1], [0], [0], [1], [0, 0, 1, 1], [], []>} : vector<2x256xbf16>, vector<256x256xbf16>, vector<2x256xf32> -> vector<2x256xf32>
    %32 = arith.truncf %28 : vector<2x256xf32> to vector<2x256xbf16>
    %c0_18 = arith.constant 0 : index
    %c0_19 = arith.constant 0 : index
    %33 = vector.load %arg5[%c0_18, %c0_19] : memref<256x256xbf16, #tpu.memory_space<vmem>>, vector<256x256xbf16>
    %cst_20 = arith.constant dense<0.000000e+00> : vector<2x256xf32>
    %34 = tpu.matmul %32, %33, %cst_20 {dimension_numbers = #tpu.dot_dimension_numbers<[1], [0], [0], [1], [0, 0, 1, 1], [], []>} : vector<2x256xbf16>, vector<256x256xbf16>, vector<2x256xf32> -> vector<2x256xf32>
    %35 = arith.addf %31, %34 : vector<2x256xf32>
    %c0_21 = arith.constant 0 : index
    %36 = memref.load %arg9[%c0_21] : memref<3xf32, #tpu.memory_space<smem>>
    %37 = vector.broadcast %36 : f32 to vector<2x256xf32>
    %38 = arith.addf %35, %37 : vector<2x256xf32>
    %39 = arith.negf %38 : vector<2x256xf32>
    %40 = math.exp %39 : vector<2x256xf32>
    %cst_22 = arith.constant 1.000000e+00 : f32
    %41 = vector.broadcast %cst_22 : f32 to vector<2x256xf32>
    %42 = arith.addf %41, %40 : vector<2x256xf32>
    %43 = arith.divf %41, %42 : vector<2x256xf32>
    %44 = arith.mulf %43, %25 : vector<2x256xf32>
    %45 = arith.mulf %43, %28 : vector<2x256xf32>
    %46 = arith.truncf %44 : vector<2x256xf32> to vector<2x256xbf16>
    %c0_23 = arith.constant 0 : index
    %c0_24 = arith.constant 0 : index
    %47 = vector.load %arg6[%c0_23, %c0_24] : memref<256x256xbf16, #tpu.memory_space<vmem>>, vector<256x256xbf16>
    %cst_25 = arith.constant dense<0.000000e+00> : vector<2x256xf32>
    %48 = tpu.matmul %46, %47, %cst_25 {dimension_numbers = #tpu.dot_dimension_numbers<[1], [0], [0], [1], [0, 0, 1, 1], [], []>} : vector<2x256xbf16>, vector<256x256xbf16>, vector<2x256xf32> -> vector<2x256xf32>
    %49 = arith.truncf %45 : vector<2x256xf32> to vector<2x256xbf16>
    %c0_26 = arith.constant 0 : index
    %c0_27 = arith.constant 0 : index
    %50 = vector.load %arg7[%c0_26, %c0_27] : memref<256x256xbf16, #tpu.memory_space<vmem>>, vector<256x256xbf16>
    %cst_28 = arith.constant dense<0.000000e+00> : vector<2x256xf32>
    %51 = tpu.matmul %49, %50, %cst_28 {dimension_numbers = #tpu.dot_dimension_numbers<[1], [0], [0], [1], [0, 0, 1, 1], [], []>} : vector<2x256xbf16>, vector<256x256xbf16>, vector<2x256xf32> -> vector<2x256xf32>
    %52 = arith.addf %48, %51 : vector<2x256xf32>
    %c1 = arith.constant 1 : index
    %53 = memref.load %arg9[%c1] : memref<3xf32, #tpu.memory_space<smem>>
    %54 = vector.broadcast %53 : f32 to vector<2x256xf32>
    %55 = arith.addf %52, %54 : vector<2x256xf32>
    %cst_29 = arith.constant 0.000000e+00 : f32
    %56 = vector.broadcast %cst_29 : f32 to vector<2x256xf32>
    %57 = arith.maximumf %55, %56 : vector<2x256xf32>
    %58 = arith.truncf %57 : vector<2x256xf32> to vector<2x256xbf16>
    %c0_30 = arith.constant 0 : index
    %c0_31 = arith.constant 0 : index
    %59 = vector.load %arg8[%c0_30, %c0_31] : memref<256x256xbf16, #tpu.memory_space<vmem>>, vector<256x256xbf16>
    %cst_32 = arith.constant dense<0.000000e+00> : vector<2x256xf32>
    %60 = tpu.matmul %58, %59, %cst_32 {dimension_numbers = #tpu.dot_dimension_numbers<[1], [0], [0], [1], [0, 0, 1, 1], [], []>} : vector<2x256xbf16>, vector<256x256xbf16>, vector<2x256xf32> -> vector<2x256xf32>
    %c2 = arith.constant 2 : index
    %61 = memref.load %arg9[%c2] : memref<3xf32, #tpu.memory_space<smem>>
    %62 = vector.broadcast %61 : f32 to vector<2x256xf32>
    %63 = arith.addf %60, %62 : vector<2x256xf32>
    %64 = arith.negf %63 : vector<2x256xf32>
    %65 = math.exp %64 : vector<2x256xf32>
    %cst_33 = arith.constant 1.000000e+00 : f32
    %66 = vector.broadcast %cst_33 : f32 to vector<2x256xf32>
    %67 = arith.addf %66, %65 : vector<2x256xf32>
    %68 = arith.divf %66, %67 : vector<2x256xf32>
    %69 = arith.mulf %43, %68 : vector<2x256xf32>
    %70 = vector.shape_cast %69 : vector<2x256xf32> to vector<2x1x256xf32>
    %71 = vector.broadcast %70 : vector<2x1x256xf32> to vector<2x4x256xf32>
    %72 = arith.mulf %24, %71 : vector<2x4x256xf32>
    %c0_34 = arith.constant 0 : index
    %c0_35 = arith.constant 0 : index
    %c0_36 = arith.constant 0 : index
    %73 = vector.load %arg10[%c0_34, %c0_35, %c0_36] : memref<2x4x256xf32, #tpu.memory_space<vmem>>, vector<2x4x256xf32>
    tpu.vector_store %arg10[%c0_34, %c0_35, %c0_36], %72 {strides = array<i32>} : memref<2x4x256xf32, #tpu.memory_space<vmem>>, vector<2x4x256xf32>,
    return
  }
  func.func @transform_0(%arg0: i32) -> (i32, i32, i32) {
    %c0_i32 = arith.constant 0 : i32
    %c0_i32_0 = arith.constant 0 : i32
    %c0_i32_1 = arith.constant 0 : i32
    return %arg0, %c0_i32, %c0_i32_0 : i32, i32, i32
  }
  func.func @transform_1(%arg0: i32) -> (i32, i32) {
    %c0_i32 = arith.constant 0 : i32
    %c0_i32_0 = arith.constant 0 : i32
    %c0_i32_1 = arith.constant 0 : i32
    return %c0_i32, %c0_i32_0 : i32, i32
  }
  func.func @transform_2(%arg0: i32) -> (i32, i32) {
    %c0_i32 = arith.constant 0 : i32
    %c0_i32_0 = arith.constant 0 : i32
    %c0_i32_1 = arith.constant 0 : i32
    return %c0_i32, %c0_i32_0 : i32, i32
  }
  func.func @transform_3(%arg0: i32) -> (i32, i32) {
    %c0_i32 = arith.constant 0 : i32
    %c0_i32_0 = arith.constant 0 : i32
    %c0_i32_1 = arith.constant 0 : i32
    return %c0_i32, %c0_i32_0 : i32, i32
  }
  func.func @transform_4(%arg0: i32) -> (i32, i32) {
    %c0_i32 = arith.constant 0 : i32
    %c0_i32_0 = arith.constant 0 : i32
    %c0_i32_1 = arith.constant 0 : i32
    return %c0_i32, %c0_i32_0 : i32, i32
  }
  func.func @transform_5(%arg0: i32) -> (i32, i32) {
    %c0_i32 = arith.constant 0 : i32
    %c0_i32_0 = arith.constant 0 : i32
    %c0_i32_1 = arith.constant 0 : i32
    return %c0_i32, %c0_i32_0 : i32, i32
  }
  func.func @transform_6(%arg0: i32) -> (i32, i32) {
    %c0_i32 = arith.constant 0 : i32
    %c0_i32_0 = arith.constant 0 : i32
    %c0_i32_1 = arith.constant 0 : i32
    return %c0_i32, %c0_i32_0 : i32, i32
  }
  func.func @transform_7(%arg0: i32) -> (i32, i32) {
    %c0_i32 = arith.constant 0 : i32
    %c0_i32_0 = arith.constant 0 : i32
    %c0_i32_1 = arith.constant 0 : i32
    return %c0_i32, %c0_i32_0 : i32, i32
  }
  func.func @transform_8(%arg0: i32) -> i32 {
    %c0_i32 = arith.constant 0 : i32
    %c0_i32_0 = arith.constant 0 : i32
    return %c0_i32 : i32
  }
  func.func @transform_9(%arg0: i32) -> (i32, i32, i32) {
    %c0_i32 = arith.constant 0 : i32
    %c0_i32_0 = arith.constant 0 : i32
    %c0_i32_1 = arith.constant 0 : i32
    return %arg0, %c0_i32, %c0_i32_0 : i32, i32, i32
  }
}

</mosaic_0001>

<llo_original>
// kernel: _forward_impl.1
$region0: #{_forward_impl.1}
  #allocation0 [shape = 'u32[]', space=smem, size = 0x4, offset = 0x4, fixed_abs, tag = 'smem constant byte address 0x4 - core index']
  #allocation1 [shape = 'u32[144,128]{1,0:T(1,128)}', space=vmem, size = 0x12000, scoped, tag = 'internal scratch']
  %s0 = inlined_call_operand.vmem [shape: f32[2,4,256], index: 0, kind: input, shape index: {}]
  %s1 = inlined_call_operand.vmem [shape: bf16[4,2], index: 1, kind: input, shape index: {}]
  %s2 = inlined_call_operand.vmem [shape: bf16[2,4], index: 2, kind: input, shape index: {}]
  %s3 = inlined_call_operand.hbm [shape: bf16[256,256], index: 3, kind: input, shape index: {}]
  %s4 = inlined_call_operand.hbm [shape: bf16[256,256], index: 4, kind: input, shape index: {}]
  %s5 = inlined_call_operand.hbm [shape: bf16[256,256], index: 5, kind: input, shape index: {}]
  %s6 = inlined_call_operand.hbm [shape: bf16[256,256], index: 6, kind: input, shape index: {}]
  %s7 = inlined_call_operand.hbm [shape: bf16[256,256], index: 7, kind: input, shape index: {}]
  %s8 = inlined_call_operand.vmem [shape: f32[3], index: 8, kind: input, shape index: {}]
  %s9 = inlined_call_operand.vmem [shape: f32[2,4,256], index: 9, kind: output, shape index: {}]
  %s10 = sld [smem:[#allocation0]]
  $region70: #{_forward_impl.1} parent=0
    _
  %s12 = ssub.s32 1, %s10
  %s13 = scalar_select 0, %s12, %s10
  $region1: #{_forward_impl.1} parent=0
    #allocation2 [shape = 'u8[131072]{0}', space=vmem, size = 0x20000, scoped, tag = 'input window, operand 3, single buffered']
    #allocation3 [shape = 's32[1]{0}', space=sflag, size = 0x4, scoped, tag = 'scoped memory for _forward_impl.1']
    #allocation4 [shape = 's32[1]{0}', space=sflag, size = 0x4, scoped, tag = 'scoped memory for _forward_impl.1']
    #allocation5 [shape = 'u8[131072]{0}', space=vmem, size = 0x20000, scoped, tag = 'input window, operand 4, single buffered']
    #allocation6 [shape = 's32[1]{0}', space=sflag, size = 0x4, scoped, tag = 'scoped memory for _forward_impl.1']
    #allocation7 [shape = 'u8[131072]{0}', space=vmem, size = 0x20000, scoped, tag = 'input window, operand 5, single buffered']
    #allocation8 [shape = 'u8[131072]{0}', space=vmem, size = 0x20000, scoped, tag = 'input window, operand 6, single buffered']
    #allocation9 [shape = 's32[1]{0}', space=sflag, size = 0x4, scoped, tag = 'scoped memory for _forward_impl.1']
    #allocation10 [shape = 'u8[131072]{0}', space=vmem, size = 0x20000, scoped, tag = 'input window, operand 7, single buffered']
    #allocation11 [shape = 'u8[512]{0}', space=smem, size = 0x200, scoped, tag = 'input window, operand 8, single buffered']
    %14 = vsyncpa [#allocation3], 0
    %15 = vsyncpa [#allocation6], 0
    %16 = vsyncpa [#allocation9], 0
    %17 = vsyncpa [#allocation4], 0
    // Predicated region
    $region2: #{_forward_impl.1} parent=1 // pred_check
      _
    $region3: #{_forward_impl.1} parent=1 // pred_check_branch
      %19 = sbr.rel (0) target = $region5
    $region4: #{_forward_impl.1} parent=1 // pred_region
      _
    $region5: #{_forward_impl.1} parent=1 // pred_fallthru
      _
    // Predicated region
    $region6: #{_forward_impl.1} parent=1 // pred_check
      _
    $region7: #{_forward_impl.1} parent=1 // pred_check_branch
      %21 = sbr.rel (0) target = $region9
    $region8: #{_forward_impl.1} parent=1 // pred_region
      _
    $region9: #{_forward_impl.1} parent=1 // pred_fallthru
      _
    // Predicated region
    $region10: #{_forward_impl.1} parent=1 // pred_check
      _
    $region11: #{_forward_impl.1} parent=1 // pred_check_branch
      %23 = sbr.rel (0) target = $region13
    $region12: #{_forward_impl.1} parent=1 // pred_region
      _
    $region13: #{_forward_impl.1} parent=1 // pred_fallthru
      _
    // Predicated region
    $region14: #{_forward_impl.1} parent=1 // pred_check
      _
    $region15: #{_forward_impl.1} parent=1 // pred_check_branch
      %25 = sbr.rel (0) target = $region17
    $region16: #{_forward_impl.1} parent=1 // pred_region
      %s27 = ssub.s32 4096, 4096
      %28 = vsyncadd [#allocation3], %s27
      %s29 = sshll.u32 [#allocation2], 4
      %s30 = int_to_ptr.vmem [resolvable:$true] %s29
      %35 = dma.hbm_to_vmem [thread:$0]  %s3, 4096, %s30, [#allocation3], 128, 128, 8
    $region17: #{_forward_impl.1} parent=1 // pred_fallthru
      _
    // Predicated region
    $region18: #{_forward_impl.1} parent=1 // pred_check
      _
    $region19: #{_forward_impl.1} parent=1 // pred_check_branch
      %37 = sbr.rel (0) target = $region21
    $region20: #{_forward_impl.1} parent=1 // pred_region
      %s39 = ssub.s32 4096, 4096
      %40 = vsyncadd [#allocation6], %s39
      %s41 = sshll.u32 [#allocation5], 4
      %s42 = int_to_ptr.vmem [resolvable:$true] %s41
      %47 = dma.hbm_to_vmem [thread:$0]  %s4, 4096, %s42, [#allocation6], 128, 128, 8
    $region21: #{_forward_impl.1} parent=1 // pred_fallthru
      _
    // Predicated region
    $region22: #{_forward_impl.1} parent=1 // pred_check
      _
    $region23: #{_forward_impl.1} parent=1 // pred_check_branch
      %49 = sbr.rel (0) target = $region25
    $region24: #{_forward_impl.1} parent=1 // pred_region
      %s51 = ssub.s32 4096, 4096
      %52 = vsyncadd [#allocation6], %s51
      %s53 = sshll.u32 [#allocation7], 4
      %s54 = int_to_ptr.vmem [resolvable:$true] %s53
      %59 = dma.hbm_to_vmem [thread:$0]  %s5, 4096, %s54, [#allocation6], 128, 128, 8
    $region25: #{_forward_impl.1} parent=1 // pred_fallthru
      _
    // Predicated region
    $region26: #{_forward_impl.1} parent=1 // pred_check
      _
    $region27: #{_forward_impl.1} parent=1 // pred_check_branch
      %61 = sbr.rel (0) target = $region29
    $region28: #{_forward_impl.1} parent=1 // pred_region
      %s63 = ssub.s32 4096, 4096
      %64 = vsyncadd [#allocation9], %s63
      %s65 = sshll.u32 [#allocation8], 4
      %s66 = int_to_ptr.vmem [resolvable:$true] %s65
      %71 = dma.hbm_to_vmem [thread:$0]  %s6, 4096, %s66, [#allocation9], 128, 128, 8
    $region29: #{_forward_impl.1} parent=1 // pred_fallthru
      _
    // Predicated region
    $region30: #{_forward_impl.1} parent=1 // pred_check
      _
    $region31: #{_forward_impl.1} parent=1 // pred_check_branch
      %73 = sbr.rel (0) target = $region33
    $region32: #{_forward_impl.1} parent=1 // pred_region
      %s75 = ssub.s32 4096, 4096
      %76 = vsyncadd [#allocation9], %s75
      %s77 = sshll.u32 [#allocation10], 4
      %s78 = int_to_ptr.vmem [resolvable:$true] %s77
      %83 = dma.hbm_to_vmem [thread:$0]  %s7, 4096, %s78, [#allocation9], 128, 128, 8
    $region33: #{_forward_impl.1} parent=1 // pred_fallthru
      _
    // Predicated region
    $region34: #{_forward_impl.1} parent=1 // pred_check
      _
    $region35: #{_forward_impl.1} parent=1 // pred_check_branch
      %85 = sbr.rel (0) target = $region37
    $region36: #{_forward_impl.1} parent=1 // pred_region
      %s87 = ssub.s32 16, 16
      %88 = vsyncadd [#allocation4], %s87
      %s90 = sshll.u32 %s8, 4
      %s91 = int_to_ptr.vmem [resolvable:$true] %s90
      %93 = dma.vmem_to_smem %s91, 16, [#allocation11], [#allocation4]
    $region37: #{_forward_impl.1} parent=1 // pred_fallthru
      _
    // Predicated region
    $region38: #{_forward_impl.1} parent=1 // pred_check
      _
    $region39: #{_forward_impl.1} parent=1 // pred_check_branch
      %95 = sbr.rel (0) target = $region41
    $region40: #{_forward_impl.1} parent=1 // pred_region
      %96 = dma.done [#allocation3], 4096
    $region41: #{_forward_impl.1} parent=1 // pred_fallthru
      _
    // Predicated region
    $region42: #{_forward_impl.1} parent=1 // pred_check
      _
    $region43: #{_forward_impl.1} parent=1 // pred_check_branch
      %98 = sbr.rel (0) target = $region45
    $region44: #{_forward_impl.1} parent=1 // pred_region
      %99 = dma.done [#allocation6], 4096
    $region45: #{_forward_impl.1} parent=1 // pred_fallthru
      _
    // Predicated region
    $region46: #{_forward_impl.1} parent=1 // pred_check
      _
    $region47: #{_forward_impl.1} parent=1 // pred_check_branch
      %101 = sbr.rel (0) target = $region49
    $region48: #{_forward_impl.1} parent=1 // pred_region
      %102 = dma.done [#allocation6], 4096
    $region49: #{_forward_impl.1} parent=1 // pred_fallthru
      _
    // Predicated region
    $region50: #{_forward_impl.1} parent=1 // pred_check
      _
    $region51: #{_forward_impl.1} parent=1 // pred_check_branch
      %104 = sbr.rel (0) target = $region53
    $region52: #{_forward_impl.1} parent=1 // pred_region
      %105 = dma.done [#allocation9], 4096
    $region53: #{_forward_impl.1} parent=1 // pred_fallthru
      _
    // Predicated region
    $region54: #{_forward_impl.1} parent=1 // pred_check
      _
    $region55: #{_forward_impl.1} parent=1 // pred_check_branch
      %107 = sbr.rel (0) target = $region57
    $region56: #{_forward_impl.1} parent=1 // pred_region
      %108 = dma.done [#allocation9], 4096
    $region57: #{_forward_impl.1} parent=1 // pred_fallthru
      _
    // Predicated region
    $region58: #{_forward_impl.1} parent=1 // pred_check
      _
    $region59: #{_forward_impl.1} parent=1 // pred_check_branch
      %110 = sbr.rel (0) target = $region61
    $region60: #{_forward_impl.1} parent=1 // pred_region
      %111 = dma.done [#allocation4], 16
    $region61: #{_forward_impl.1} parent=1 // pred_fallthru
      _
    %112 = sfence
    %v114 = vld [vmem:[%s0] sm:$0xff]
    %v115 = vld [vmem:[%s0 + $0x8] sm:$0xff]
    %v118 = vcombine.high %v114, %v114
    %v119 = vcombine.high %v115, %v115
    %vm122 = vcmask 1043456
    %v123 = vsel %vm122, %v114, 0.0
    %v124 = vsel %vm122, %v118, 0.0
    %v125 = vadd.f32 %v123, %v124
    %126 = vadd.xlane.f32.xlu0 %v125
    %v127 = vpop.xlane.xlu0 %126
    %v128 = vsel %vm122, %v115, 0.0
    %v129 = vsel %vm122, %v119, 0.0
    %v130 = vadd.f32 %v128, %v129
    %131 = vadd.xlane.f32.xlu0 %v130
    %v132 = vpop.xlane.xlu0 %131
    %v133 = vmul.f32 %v127, 0.00390625
    %v134 = vmul.f32 %v132, 0.00390625
    %v135 = vsel %vm122, %v114, -inf
    %v136 = vsel %vm122, %v118, -inf
    %v137 = vmax.f32 %v135, %v136
    %138 = vmax.xlane.f32.xlu0 %v137
    %v139 = vpop.xlane.xlu0 %138
    %v140 = vsel %vm122, %v115, -inf
    %v141 = vsel %vm122, %v119, -inf
    %v142 = vmax.f32 %v140, %v141
    %143 = vmax.xlane.f32.xlu0 %v142
    %v144 = vpop.xlane.xlu0 %143
    %v147 = vlaneseq
    %v148 = vand.u32 %v147, 127
    %v149 = vlaneseq
    %v150 = vshrl.u32 %v149, 7
    %v151 = vsub.s32 %v148, %v150
    %v152 = vrot.slane %v133, %v151
    %v153 = vlaneseq
    %v154 = vshrl.u32 %v153, 7
    %v155 = vsub.s32 %v148, %v154
    %v156 = vrot.slane %v134, %v155
    %vm157 = vcmask 1041409
    %v158 = vsel %vm157, %v156, %v152
    %v162 = vlaneseq
    %v163 = vshrl.u32 %v162, 7
    %v164 = vsub.s32 %v148, %v163
    %v165 = vrot.slane %v139, %v164
    %v166 = vlaneseq
    %v167 = vshrl.u32 %v166, 7
    %v168 = vsub.s32 %v148, %v167
    %v169 = vrot.slane %v144, %v168
    %vm170 = vcmask 1043459
    %v171 = vsel %vm170, %v169, %v165
    %vm173 = vcmask 1041408
    %v174 = vsel %vm173, %v158, %v171
    %v175 = vpack.c.bf16 %v174, %v174
    %v176 = vld [vmem:[%s1] sm:$0x3]
    %vm177 = vcmask 31744
    %v179 = vsel %vm177, %v175, 0
    %v182 = vsel %vm173, %v176, 0
    %184 = vmatprep.subr.bf16.mxu0 0
    %185 = vmatpush1.bf16.msra.mxu0 %v182
    %186 = vmatprep.subr.bf16.mxu0 0
    %187 = vmatpush1.bf16.msra.mxu0 0
    %188 = vmatprep.subr.bf16.mxu0 0
    %189 = vmatpush1.bf16.msra.mxu0 0
    %190 = vmatprep.subr.bf16.mxu0 0
    %191 = vmatpush1.bf16.msra.mxu0 0
    %192 = vmatprep.subr.bf16.mxu0 0
    %193 = vmatpush1.bf16.msra.mxu0 0
    %194 = vmatprep.subr.bf16.mxu0 0
    %195 = vmatpush1.bf16.msra.mxu0 0
    %196 = vmatprep.subr.bf16.mxu0 0
    %197 = vmatpush1.bf16.msra.mxu0 0
    %198 = vmatprep.subr.bf16.mxu0 0
    %199 = vmatpush1.bf16.msra.mxu0 0
    %200 = vmatprep.subr.bf16.mxu0 0
    %201 = vmatpush1.bf16.msra.mxu0 0
    %202 = vmatprep.subr.bf16.mxu0 0
    %203 = vmatpush1.bf16.msra.mxu0 0
    %204 = vmatprep.subr.bf16.mxu0 0
    %205 = vmatpush1.bf16.msra.mxu0 0
    %206 = vmatprep.subr.bf16.mxu0 0
    %207 = vmatpush1.bf16.msra.mxu0 0
    %208 = vmatprep.subr.bf16.mxu0 0
    %209 = vmatpush1.bf16.msra.mxu0 0
    %210 = vmatprep.subr.bf16.mxu0 0
    %211 = vmatpush1.bf16.msra.mxu0 0
    %212 = vmatprep.subr.bf16.mxu0 0
    %213 = vmatpush1.bf16.msra.mxu0 0
    %214 = vmatprep.subr.bf16.mxu0 0
    %215 = vmatpush1.bf16.msra.mxu0 0
    %216 = vmatprep.mubr.bf16.mxu0 0
    %217 = vmatmul.mubr.bf16.gmra.mrb[0].mxu0 %v179
    %v218 = vpop.f32.mrb[0].mxu0
    %v219 = vadd.f32 0.0, %v218
    %v220 = vpop.f32.mrb[0].mxu0
    %v221 = vpop.f32.mrb[0].mxu0
    %v222 = vpop.f32.mrb[0].mxu0
    %223 = vdwg.mxu0
    %v224 = vmax.f32 %v219, 0.0
    %v225 = vpack.c.bf16 %v224, %v224
    %v226 = vld [vmem:[%s2] sm:$0x1]
    %vm227 = vcmask 15360
    %v229 = vsel %vm227, %v225, 0
    %vm231 = vcmask 1040384
    %v233 = vsel %vm231, %v226, 0
    %235 = vmatprep.subr.bf16.mxu0 0
    %236 = vmatpush1.bf16.msra.mxu0 %v233
    %237 = vmatprep.subr.bf16.mxu0 0
    %238 = vmatpush1.bf16.msra.mxu0 0
    %239 = vmatprep.subr.bf16.mxu0 0
    %240 = vmatpush1.bf16.msra.mxu0 0
    %241 = vmatprep.subr.bf16.mxu0 0
    %242 = vmatpush1.bf16.msra.mxu0 0
    %243 = vmatprep.subr.bf16.mxu0 0
    %244 = vmatpush1.bf16.msra.mxu0 0
    %245 = vmatprep.subr.bf16.mxu0 0
    %246 = vmatpush1.bf16.msra.mxu0 0
    %247 = vmatprep.subr.bf16.mxu0 0
    %248 = vmatpush1.bf16.msra.mxu0 0
    %249 = vmatprep.subr.bf16.mxu0 0
    %250 = vmatpush1.bf16.msra.mxu0 0
    %251 = vmatprep.subr.bf16.mxu0 0
    %252 = vmatpush1.bf16.msra.mxu0 0
    %253 = vmatprep.subr.bf16.mxu0 0
    %254 = vmatpush1.bf16.msra.mxu0 0
    %255 = vmatprep.subr.bf16.mxu0 0
    %256 = vmatpush1.bf16.msra.mxu0 0
    %257 = vmatprep.subr.bf16.mxu0 0
    %258 = vmatpush1.bf16.msra.mxu0 0
    %259 = vmatprep.subr.bf16.mxu0 0
    %260 = vmatpush1.bf16.msra.mxu0 0
    %261 = vmatprep.subr.bf16.mxu0 0
    %262 = vmatpush1.bf16.msra.mxu0 0
    %263 = vmatprep.subr.bf16.mxu0 0
    %264 = vmatpush1.bf16.msra.mxu0 0
    %265 = vmatprep.subr.bf16.mxu0 0
    %266 = vmatpush1.bf16.msra.mxu0 0
    %267 = vmatprep.mubr.bf16.mxu0 0
    %268 = vmatmul.mubr.bf16.gmra.mrb[0].mxu0 %v229
    %v269 = vpop.f32.mrb[0].mxu0
    %v270 = vadd.f32 0.0, %v269
    %v271 = vpop.f32.mrb[0].mxu0
    %v272 = vpop.f32.mrb[0].mxu0
    %v273 = vpop.f32.mrb[0].mxu0
    %274 = vdwg.mxu0
    %v276 = vrot.slane %v270, 2
    %v278 = vadd.f32 %v270, %v276
    %v279 = vxor.u32 %v278, 2147483648
    %v280 = vmul.f32 %v279, 1.442695
    %v281 = vpow.pop %v280
    %v282 = vadd.f32 %v281, 1.0
    %v283 = vrcp.pop %v282
    %v284 = vmul.f32 1.0, %v283
    %v285 = vlaneseq
    %v286 = vshrl.u32 %v285, 7
    %v287 = vsub.s32 0, %v286
    %v288 = vrot.slane %v284, %v287
    %290 = vbcast.lane.b32.xlu0 %v288, 256
    %v291 = vpop.permute.xlu0 %290
    %v292 = vlaneseq
    %v293 = vshrl.u32 %v292, 7
    %v294 = vsub.s32 1, %v293
    %v295 = vrot.slane %v284, %v294
    %297 = vbcast.lane.b32.xlu0 %v295, 256
    %v298 = vpop.permute.xlu0 %297
    %v302 = vunpack.c.l.s4 839922192
    %v303 = vunpack.c.0.s8 %v302
    %v304 = vlaneseq
    %v305 = vshrl.u32 %v304, 7
    %v306 = vsub.s32 %v303, %v305
    %v307 = vrot.slane %v291, %v306
    %v309 = vunpack.c.l.s4 839922192
    %v310 = vunpack.c.0.s8 %v309
    %v311 = vlaneseq
    %v312 = vshrl.u32 %v311, 7
    %v313 = vsub.s32 %v310, %v312
    %v314 = vrot.slane %v298, %v313
    %v317 = vmul.f32 %v114, %v307
    %v318 = vmul.f32 %v115, %v314
    %v321 = vcombine.high %v317, %v317
    %v322 = vcombine.high %v318, %v318
    %v325 = vsel %vm122, %v317, -inf
    %v326 = vrot.slane %v325, 4
    %v327 = vmax.f32 %v325, %v326
    %v328 = vrot.slane %v327, 2
    %v329 = vmax.f32 %v327, %v328
    %v330 = vrot.slane %v329, 1
    %v331 = vmax.f32 %v329, %v330
    %v332 = vsel %vm122, %v321, -inf
    %v333 = vrot.slane %v332, 4
    %v334 = vmax.f32 %v332, %v333
    %v335 = vrot.slane %v334, 2
    %v336 = vmax.f32 %v334, %v335
    %v337 = vrot.slane %v336, 1
    %v338 = vmax.f32 %v336, %v337
    %v339 = vsel %vm122, %v318, -inf
    %v340 = vrot.slane %v339, 4
    %v341 = vmax.f32 %v339, %v340
    %v342 = vrot.slane %v341, 2
    %v343 = vmax.f32 %v341, %v342
    %v344 = vrot.slane %v343, 1
    %v345 = vmax.f32 %v343, %v344
    %v346 = vsel %vm122, %v322, -inf
    %v347 = vrot.slane %v346, 4
    %v348 = vmax.f32 %v346, %v347
    %v349 = vrot.slane %v348, 2
    %v350 = vmax.f32 %v348, %v349
    %v351 = vrot.slane %v350, 1
    %v352 = vmax.f32 %v350, %v351
    %v353 = vsel %vm122, %v317, 0.0
    %v354 = vrot.slane %v353, 4
    %v355 = vadd.f32 %v353, %v354
    %v356 = vrot.slane %v355, 2
    %v357 = vadd.f32 %v355, %v356
    %v358 = vrot.slane %v357, 1
    %v359 = vadd.f32 %v357, %v358
    %v360 = vsel %vm122, %v321, 0.0
    %v361 = vrot.slane %v360, 4
    %v362 = vadd.f32 %v360, %v361
    %v363 = vrot.slane %v362, 2
    %v364 = vadd.f32 %v362, %v363
    %v365 = vrot.slane %v364, 1
    %v366 = vadd.f32 %v364, %v365
    %v367 = vsel %vm122, %v318, 0.0
    %v368 = vrot.slane %v367, 4
    %v369 = vadd.f32 %v367, %v368
    %v370 = vrot.slane %v369, 2
    %v371 = vadd.f32 %v369, %v370
    %v372 = vrot.slane %v371, 1
    %v373 = vadd.f32 %v371, %v372
    %v374 = vsel %vm122, %v322, 0.0
    %v375 = vrot.slane %v374, 4
    %v376 = vadd.f32 %v374, %v375
    %v377 = vrot.slane %v376, 2
    %v378 = vadd.f32 %v376, %v377
    %v379 = vrot.slane %v378, 1
    %v380 = vadd.f32 %v378, %v379
    %v381 = vmul.f32 %v359, 0.25
    %v382 = vmul.f32 %v366, 0.25
    %v383 = vmul.f32 %v373, 0.25
    %v384 = vmul.f32 %v380, 0.25
    %v385 = vpack.c.bf16 %v331, %v331
    %v386 = vpack.c.bf16 %v338, %v338
    %v387 = vpack.c.bf16 %v345, %v345
    %v388 = vpack.c.bf16 %v352, %v352
    %v389 = vld [vmem:[#allocation2] sm:$0xff]
    %v390 = vld [vmem:[#allocation2 + $0x8] sm:$0xff]
    %v391 = vld [vmem:[#allocation2 + $0x10] sm:$0xff]
    %v392 = vld [vmem:[#allocation2 + $0x18] sm:$0xff]
    %v393 = vld [vmem:[#allocation2 + $0x20] sm:$0xff]
    %v394 = vld [vmem:[#allocation2 + $0x28] sm:$0xff]
    %v395 = vld [vmem:[#allocation2 + $0x30] sm:$0xff]
    %v396 = vld [vmem:[#allocation2 + $0x38] sm:$0xff]
    %v397 = vld [vmem:[#allocation2 + $0x40] sm:$0xff]
    %v398 = vld [vmem:[#allocation2 + $0x48] sm:$0xff]
    %v399 = vld [vmem:[#allocation2 + $0x50] sm:$0xff]
    %v400 = vld [vmem:[#allocation2 + $0x58] sm:$0xff]
    %v401 = vld [vmem:[#allocation2 + $0x60] sm:$0xff]
    %v402 = vld [vmem:[#allocation2 + $0x68] sm:$0xff]
    %v403 = vld [vmem:[#allocation2 + $0x70] sm:$0xff]
    %v404 = vld [vmem:[#allocation2 + $0x78] sm:$0xff]
    %v405 = vld [vmem:[#allocation2 + $0x80] sm:$0xff]
    %v406 = vld [vmem:[#allocation2 + $0x88] sm:$0xff]
    %v407 = vld [vmem:[#allocation2 + $0x90] sm:$0xff]
    %v408 = vld [vmem:[#allocation2 + $0x98] sm:$0xff]
    %v409 = vld [vmem:[#allocation2 + $0xa0] sm:$0xff]
    %v410 = vld [vmem:[#allocation2 + $0xa8] sm:$0xff]
    %v411 = vld [vmem:[#allocation2 + $0xb0] sm:$0xff]
    %v412 = vld [vmem:[#allocation2 + $0xb8] sm:$0xff]
    %v413 = vld [vmem:[#allocation2 + $0xc0] sm:$0xff]
    %v414 = vld [vmem:[#allocation2 + $0xc8] sm:$0xff]
    %v415 = vld [vmem:[#allocation2 + $0xd0] sm:$0xff]
    %v416 = vld [vmem:[#allocation2 + $0xd8] sm:$0xff]
    %v417 = vld [vmem:[#allocation2 + $0xe0] sm:$0xff]
    %v418 = vld [vmem:[#allocation2 + $0xe8] sm:$0xff]
    %v419 = vld [vmem:[#allocation2 + $0xf0] sm:$0xff]
    %v420 = vld [vmem:[#allocation2 + $0xf8] sm:$0xff]
    %v421 = vpack.c.bf16 %v381, %v381
    %v422 = vpack.c.bf16 %v382, %v382
    %v423 = vpack.c.bf16 %v383, %v383
    %v424 = vpack.c.bf16 %v384, %v384
    %v425 = vld [vmem:[#allocation5] sm:$0xff]
    %v426 = vld [vmem:[#allocation5 + $0x8] sm:$0xff]
    %v427 = vld [vmem:[#allocation5 + $0x10] sm:$0xff]
    %v428 = vld [vmem:[#allocation5 + $0x18] sm:$0xff]
    %v429 = vld [vmem:[#allocation5 + $0x20] sm:$0xff]
    %v430 = vld [vmem:[#allocation5 + $0x28] sm:$0xff]
    %v431 = vld [vmem:[#allocation5 + $0x30] sm:$0xff]
    %v432 = vld [vmem:[#allocation5 + $0x38] sm:$0xff]
    %v433 = vld [vmem:[#allocation5 + $0x40] sm:$0xff]
    %v434 = vld [vmem:[#allocation5 + $0x48] sm:$0xff]
    %v435 = vld [vmem:[#allocation5 + $0x50] sm:$0xff]
    %v436 = vld [vmem:[#allocation5 + $0x58] sm:$0xff]
    %v437 = vld [vmem:[#allocation5 + $0x60] sm:$0xff]
    %v438 = vld [vmem:[#allocation5 + $0x68] sm:$0xff]
    %v439 = vld [vmem:[#allocation5 + $0x70] sm:$0xff]
    %v440 = vld [vmem:[#allocation5 + $0x78] sm:$0xff]
    %v441 = vld [vmem:[#allocation5 + $0x80] sm:$0xff]
    %v442 = vld [vmem:[#allocation5 + $0x88] sm:$0xff]
    %v443 = vld [vmem:[#allocation5 + $0x90] sm:$0xff]
    %v444 = vld [vmem:[#allocation5 + $0x98] sm:$0xff]
    %v445 = vld [vmem:[#allocation5 + $0xa0] sm:$0xff]
    %v446 = vld [vmem:[#allocation5 + $0xa8] sm:$0xff]
    %v447 = vld [vmem:[#allocation5 + $0xb0] sm:$0xff]
    %v448 = vld [vmem:[#allocation5 + $0xb8] sm:$0xff]
    %v449 = vld [vmem:[#allocation5 + $0xc0] sm:$0xff]
    %v450 = vld [vmem:[#allocation5 + $0xc8] sm:$0xff]
    %v451 = vld [vmem:[#allocation5 + $0xd0] sm:$0xff]
    %v452 = vld [vmem:[#allocation5 + $0xd8] sm:$0xff]
    %v453 = vld [vmem:[#allocation5 + $0xe0] sm:$0xff]
    %v454 = vld [vmem:[#allocation5 + $0xe8] sm:$0xff]
    %v455 = vld [vmem:[#allocation5 + $0xf0] sm:$0xff]
    %v456 = vld [vmem:[#allocation5 + $0xf8] sm:$0xff]
    %v461 = vunpack.c.l.b16 %v421
    %v462 = vunpack.c.l.b16 %v422
    %v463 = vunpack.c.l.b16 %v423
    %v464 = vunpack.c.l.b16 %v424
    %v465 = vsel %vm157, %v463, %v461
    %v466 = vsel %vm157, %v464, %v462
    %v467 = vpack.c.b16 %v465, %v465
    %v468 = vpack.c.b16 %v466, %v466
    %v503 = vunpack.c.l.b16 %v425
    %v504 = vunpack.c.h.b16 %v425
    %v505 = vunpack.c.l.b16 %v426
    %v506 = vunpack.c.h.b16 %v426
    %v507 = vunpack.c.l.b16 %v427
    %v508 = vunpack.c.h.b16 %v427
    %v509 = vunpack.c.l.b16 %v428
    %v510 = vunpack.c.h.b16 %v428
    %v511 = vunpack.c.l.b16 %v429
    %v512 = vunpack.c.h.b16 %v429
    %v513 = vunpack.c.l.b16 %v430
    %v514 = vunpack.c.h.b16 %v430
    %v515 = vunpack.c.l.b16 %v431
    %v516 = vunpack.c.h.b16 %v431
    %v517 = vunpack.c.l.b16 %v432
    %v518 = vunpack.c.h.b16 %v432
    %v519 = vunpack.c.l.b16 %v433
    %v520 = vunpack.c.h.b16 %v433
    %v521 = vunpack.c.l.b16 %v434
    %v522 = vunpack.c.h.b16 %v434
    %v523 = vunpack.c.l.b16 %v435
    %v524 = vunpack.c.h.b16 %v435
    %v525 = vunpack.c.l.b16 %v436
    %v526 = vunpack.c.h.b16 %v436
    %v527 = vunpack.c.l.b16 %v437
    %v528 = vunpack.c.h.b16 %v437
    %v529 = vunpack.c.l.b16 %v438
    %v530 = vunpack.c.h.b16 %v438
    %v531 = vunpack.c.l.b16 %v439
    %v532 = vunpack.c.h.b16 %v439
    %v533 = vunpack.c.l.b16 %v440
    %v534 = vunpack.c.h.b16 %v440
    %v535 = vunpack.c.l.b16 %v441
    %v536 = vunpack.c.h.b16 %v441
    %v537 = vunpack.c.l.b16 %v442
    %v538 = vunpack.c.h.b16 %v442
    %v539 = vunpack.c.l.b16 %v443
    %v540 = vunpack.c.h.b16 %v443
    %v541 = vunpack.c.l.b16 %v444
    %v542 = vunpack.c.h.b16 %v444
    %v543 = vunpack.c.l.b16 %v445
    %v544 = vunpack.c.h.b16 %v445
    %v545 = vunpack.c.l.b16 %v446
    %v546 = vunpack.c.h.b16 %v446
    %v547 = vunpack.c.l.b16 %v447
    %v548 = vunpack.c.h.b16 %v447
    %v549 = vunpack.c.l.b16 %v448
    %v550 = vunpack.c.h.b16 %v448
    %v551 = vunpack.c.l.b16 %v449
    %v552 = vunpack.c.h.b16 %v449
    %v553 = vunpack.c.l.b16 %v450
    %v554 = vunpack.c.h.b16 %v450
    %v555 = vunpack.c.l.b16 %v451
    %v556 = vunpack.c.h.b16 %v451
    %v557 = vunpack.c.l.b16 %v452
    %v558 = vunpack.c.h.b16 %v452
    %v559 = vunpack.c.l.b16 %v453
    %v560 = vunpack.c.h.b16 %v453
    %v561 = vunpack.c.l.b16 %v454
    %v562 = vunpack.c.h.b16 %v454
    %v563 = vunpack.c.l.b16 %v455
    %v564 = vunpack.c.h.b16 %v455
    %v565 = vunpack.c.l.b16 %v456
    %v566 = vunpack.c.h.b16 %v456
    %v567 = vpack.c.b16 %v505, %v503
    %v568 = vpack.c.b16 %v506, %v504
    %v569 = vpack.c.b16 %v509, %v507
    %v570 = vpack.c.b16 %v510, %v508
    %v571 = vpack.c.b16 %v513, %v511
    %v572 = vpack.c.b16 %v514, %v512
    %v573 = vpack.c.b16 %v517, %v515
    %v574 = vpack.c.b16 %v518, %v516
    %v575 = vpack.c.b16 %v521, %v519
    %v576 = vpack.c.b16 %v522, %v520
    %v577 = vpack.c.b16 %v525, %v523
    %v578 = vpack.c.b16 %v526, %v524
    %v579 = vpack.c.b16 %v529, %v527
    %v580 = vpack.c.b16 %v530, %v528
    %v581 = vpack.c.b16 %v533, %v531
    %v582 = vpack.c.b16 %v534, %v532
    %v583 = vpack.c.b16 %v537, %v535
    %v584 = vpack.c.b16 %v538, %v536
    %v585 = vpack.c.b16 %v541, %v539
    %v586 = vpack.c.b16 %v542, %v540
    %v587 = vpack.c.b16 %v545, %v543
    %v588 = vpack.c.b16 %v546, %v544
    %v589 = vpack.c.b16 %v549, %v547
    %v590 = vpack.c.b16 %v550, %v548
    %v591 = vpack.c.b16 %v553, %v551
    %v592 = vpack.c.b16 %v554, %v552
    %v593 = vpack.c.b16 %v557, %v555
    %v594 = vpack.c.b16 %v558, %v556
    %v595 = vpack.c.b16 %v561, %v559
    %v596 = vpack.c.b16 %v562, %v560
    %v597 = vpack.c.b16 %v565, %v563
    %v598 = vpack.c.b16 %v566, %v564
    %631 = vmatprep.subr.bf16.mxu0 %v568
    %632 = vmatpush1.bf16.msra.mxu0 %v567
    %633 = vmatprep.subr.bf16.mxu0 %v570
    %634 = vmatpush1.bf16.msra.mxu0 %v569
    %635 = vmatprep.subr.bf16.mxu0 %v572
    %636 = vmatpush1.bf16.msra.mxu0 %v571
    %637 = vmatprep.subr.bf16.mxu0 %v574
    %638 = vmatpush1.bf16.msra.mxu0 %v573
    %639 = vmatprep.subr.bf16.mxu0 %v576
    %640 = vmatpush1.bf16.msra.mxu0 %v575
    %641 = vmatprep.subr.bf16.mxu0 %v578
    %642 = vmatpush1.bf16.msra.mxu0 %v577
    %643 = vmatprep.subr.bf16.mxu0 %v580
    %644 = vmatpush1.bf16.msra.mxu0 %v579
    %645 = vmatprep.subr.bf16.mxu0 %v582
    %646 = vmatpush1.bf16.msra.mxu0 %v581
    %647 = vmatprep.subr.bf16.mxu0 %v584
    %648 = vmatpush1.bf16.msra.mxu0 %v583
    %649 = vmatprep.subr.bf16.mxu0 %v586
    %650 = vmatpush1.bf16.msra.mxu0 %v585
    %651 = vmatprep.subr.bf16.mxu0 %v588
    %652 = vmatpush1.bf16.msra.mxu0 %v587
    %653 = vmatprep.subr.bf16.mxu0 %v590
    %654 = vmatpush1.bf16.msra.mxu0 %v589
    %655 = vmatprep.subr.bf16.mxu0 %v592
    %656 = vmatpush1.bf16.msra.mxu0 %v591
    %657 = vmatprep.subr.bf16.mxu0 %v594
    %658 = vmatpush1.bf16.msra.mxu0 %v593
    %659 = vmatprep.subr.bf16.mxu0 %v596
    %660 = vmatpush1.bf16.msra.mxu0 %v595
    %661 = vmatprep.subr.bf16.mxu0 %v598
    %662 = vmatpush1.bf16.msra.mxu0 %v597
    %663 = vmatprep.mubr.bf16.mxu0 %v468
    %664 = vmatmul.mubr.bf16.gmra.mrb[0].mxu0 %v467
    %v665 = vpop.f32.mrb[0].mxu0
    %v666 = vadd.f32 0.0, %v665
    %v667 = vpop.f32.mrb[0].mxu0
    %v668 = vadd.f32 0.0, %v667
    %v669 = vpop.f32.mrb[0].mxu0
    %v670 = vpop.f32.mrb[0].mxu0
    %671 = vdwg.mxu0
    %v676 = vunpack.c.l.b16 %v385
    %v677 = vunpack.c.l.b16 %v386
    %v678 = vunpack.c.l.b16 %v387
    %v679 = vunpack.c.l.b16 %v388
    %v680 = vsel %vm157, %v678, %v676
    %v681 = vsel %vm157, %v679, %v677
    %v682 = vpack.c.b16 %v680, %v680
    %v683 = vpack.c.b16 %v681, %v681
    %v718 = vunpack.c.l.b16 %v389
    %v719 = vunpack.c.h.b16 %v389
    %v720 = vunpack.c.l.b16 %v390
    %v721 = vunpack.c.h.b16 %v390
    %v722 = vunpack.c.l.b16 %v391
    %v723 = vunpack.c.h.b16 %v391
    %v724 = vunpack.c.l.b16 %v392
    %v725 = vunpack.c.h.b16 %v392
    %v726 = vunpack.c.l.b16 %v393
    %v727 = vunpack.c.h.b16 %v393
    %v728 = vunpack.c.l.b16 %v394
    %v729 = vunpack.c.h.b16 %v394
    %v730 = vunpack.c.l.b16 %v395
    %v731 = vunpack.c.h.b16 %v395
    %v732 = vunpack.c.l.b16 %v396
    %v733 = vunpack.c.h.b16 %v396
    %v734 = vunpack.c.l.b16 %v397
    %v735 = vunpack.c.h.b16 %v397
    %v736 = vunpack.c.l.b16 %v398
    %v737 = vunpack.c.h.b16 %v398
    %v738 = vunpack.c.l.b16 %v399
    %v739 = vunpack.c.h.b16 %v399
    %v740 = vunpack.c.l.b16 %v400
    %v741 = vunpack.c.h.b16 %v400
    %v742 = vunpack.c.l.b16 %v401
    %v743 = vunpack.c.h.b16 %v401
    %v744 = vunpack.c.l.b16 %v402
    %v745 = vunpack.c.h.b16 %v402
    %v746 = vunpack.c.l.b16 %v403
    %v747 = vunpack.c.h.b16 %v403
    %v748 = vunpack.c.l.b16 %v404
    %v749 = vunpack.c.h.b16 %v404
    %v750 = vunpack.c.l.b16 %v405
    %v751 = vunpack.c.h.b16 %v405
    %v752 = vunpack.c.l.b16 %v406
    %v753 = vunpack.c.h.b16 %v406
    %v754 = vunpack.c.l.b16 %v407
    %v755 = vunpack.c.h.b16 %v407
    %v756 = vunpack.c.l.b16 %v408
    %v757 = vunpack.c.h.b16 %v408
    %v758 = vunpack.c.l.b16 %v409
    %v759 = vunpack.c.h.b16 %v409
    %v760 = vunpack.c.l.b16 %v410
    %v761 = vunpack.c.h.b16 %v410
    %v762 = vunpack.c.l.b16 %v411
    %v763 = vunpack.c.h.b16 %v411
    %v764 = vunpack.c.l.b16 %v412
    %v765 = vunpack.c.h.b16 %v412
    %v766 = vunpack.c.l.b16 %v413
    %v767 = vunpack.c.h.b16 %v413
    %v768 = vunpack.c.l.b16 %v414
    %v769 = vunpack.c.h.b16 %v414
    %v770 = vunpack.c.l.b16 %v415
    %v771 = vunpack.c.h.b16 %v415
    %v772 = vunpack.c.l.b16 %v416
    %v773 = vunpack.c.h.b16 %v416
    %v774 = vunpack.c.l.b16 %v417
    %v775 = vunpack.c.h.b16 %v417
    %v776 = vunpack.c.l.b16 %v418
    %v777 = vunpack.c.h.b16 %v418
    %v778 = vunpack.c.l.b16 %v419
    %v779 = vunpack.c.h.b16 %v419
    %v780 = vunpack.c.l.b16 %v420
    %v781 = vunpack.c.h.b16 %v420
    %v782 = vpack.c.b16 %v720, %v718
    %v783 = vpack.c.b16 %v721, %v719
    %v784 = vpack.c.b16 %v724, %v722
    %v785 = vpack.c.b16 %v725, %v723
    %v786 = vpack.c.b16 %v728, %v726
    %v787 = vpack.c.b16 %v729, %v727
    %v788 = vpack.c.b16 %v732, %v730
    %v789 = vpack.c.b16 %v733, %v731
    %v790 = vpack.c.b16 %v736, %v734
    %v791 = vpack.c.b16 %v737, %v735
    %v792 = vpack.c.b16 %v740, %v738
    %v793 = vpack.c.b16 %v741, %v739
    %v794 = vpack.c.b16 %v744, %v742
    %v795 = vpack.c.b16 %v745, %v743
    %v796 = vpack.c.b16 %v748, %v746
    %v797 = vpack.c.b16 %v749, %v747
    %v798 = vpack.c.b16 %v752, %v750
    %v799 = vpack.c.b16 %v753, %v751
    %v800 = vpack.c.b16 %v756, %v754
    %v801 = vpack.c.b16 %v757, %v755
    %v802 = vpack.c.b16 %v760, %v758
    %v803 = vpack.c.b16 %v761, %v759
    %v804 = vpack.c.b16 %v764, %v762
    %v805 = vpack.c.b16 %v765, %v763
    %v806 = vpack.c.b16 %v768, %v766
    %v807 = vpack.c.b16 %v769, %v767
    %v808 = vpack.c.b16 %v772, %v770
    %v809 = vpack.c.b16 %v773, %v771
    %v810 = vpack.c.b16 %v776, %v774
    %v811 = vpack.c.b16 %v777, %v775
    %v812 = vpack.c.b16 %v780, %v778
    %v813 = vpack.c.b16 %v781, %v779
    %846 = vmatprep.subr.bf16.mxu0 %v783
    %847 = vmatpush1.bf16.msra.mxu0 %v782
    %848 = vmatprep.subr.bf16.mxu0 %v785
    %849 = vmatpush1.bf16.msra.mxu0 %v784
    %850 = vmatprep.subr.bf16.mxu0 %v787
    %851 = vmatpush1.bf16.msra.mxu0 %v786
    %852 = vmatprep.subr.bf16.mxu0 %v789
    %853 = vmatpush1.bf16.msra.mxu0 %v788
    %854 = vmatprep.subr.bf16.mxu0 %v791
    %855 = vmatpush1.bf16.msra.mxu0 %v790
    %856 = vmatprep.subr.bf16.mxu0 %v793
    %857 = vmatpush1.bf16.msra.mxu0 %v792
    %858 = vmatprep.subr.bf16.mxu0 %v795
    %859 = vmatpush1.bf16.msra.mxu0 %v794
    %860 = vmatprep.subr.bf16.mxu0 %v797
    %861 = vmatpush1.bf16.msra.mxu0 %v796
    %862 = vmatprep.subr.bf16.mxu0 %v799
    %863 = vmatpush1.bf16.msra.mxu0 %v798
    %864 = vmatprep.subr.bf16.mxu0 %v801
    %865 = vmatpush1.bf16.msra.mxu0 %v800
    %866 = vmatprep.subr.bf16.mxu0 %v803
    %867 = vmatpush1.bf16.msra.mxu0 %v802
    %868 = vmatprep.subr.bf16.mxu0 %v805
    %869 = vmatpush1.bf16.msra.mxu0 %v804
    %870 = vmatprep.subr.bf16.mxu0 %v807
    %871 = vmatpush1.bf16.msra.mxu0 %v806
    %872 = vmatprep.subr.bf16.mxu0 %v809
    %873 = vmatpush1.bf16.msra.mxu0 %v808
    %874 = vmatprep.subr.bf16.mxu0 %v811
    %875 = vmatpush1.bf16.msra.mxu0 %v810
    %876 = vmatprep.subr.bf16.mxu0 %v813
    %877 = vmatpush1.bf16.msra.mxu0 %v812
    %878 = vmatprep.mubr.bf16.mxu0 %v683
    %879 = vmatmul.mubr.bf16.gmra.mrb[0].mxu0 %v682
    %v880 = vpop.f32.mrb[0].mxu0
    %v881 = vadd.f32 %v666, %v880
    %v882 = vpop.f32.mrb[0].mxu0
    %v883 = vadd.f32 %v668, %v882
    %v884 = vpop.f32.mrb[0].mxu0
    %v885 = vpop.f32.mrb[0].mxu0
    %886 = vdwg.mxu0
    %s887 = sld [smem:[#allocation11]]
    %v888 = vstv %s887
    %v889 = vadd.f32 %v881, %v888
    %v890 = vadd.f32 %v883, %v888
    %v891 = vxor.u32 %v889, 2147483648
    %v892 = vxor.u32 %v890, 2147483648
    %v893 = vmul.f32 %v891, 1.442695
    %v894 = vpow.pop %v893
    %v895 = vmul.f32 %v892, 1.442695
    %v896 = vpow.pop %v895
    %v897 = vadd.f32 %v894, 1.0
    %v898 = vadd.f32 %v896, 1.0
    %v899 = vrcp.pop %v897
    %v900 = vmul.f32 1.0, %v899
    %v901 = vrcp.pop %v898
    %v902 = vmul.f32 1.0, %v901
    %v907 = vsel %vm157, %v345, %v331
    %v908 = vsel %vm157, %v352, %v338
    %v911 = vmul.f32 %v900, %v907
    %v912 = vmul.f32 %v902, %v908
    %v917 = vsel %vm157, %v383, %v381
    %v918 = vsel %vm157, %v384, %v382
    %v921 = vmul.f32 %v900, %v917
    %v922 = vmul.f32 %v902, %v918
    %v923 = vpack.c.bf16 %v911, %v911
    %v924 = vpack.c.bf16 %v912, %v912
    %v925 = vld [vmem:[#allocation7] sm:$0xff]
    %v926 = vld [vmem:[#allocation7 + $0x8] sm:$0xff]
    %v927 = vld [vmem:[#allocation7 + $0x10] sm:$0xff]
    %v928 = vld [vmem:[#allocation7 + $0x18] sm:$0xff]
    %v929 = vld [vmem:[#allocation7 + $0x20] sm:$0xff]
    %v930 = vld [vmem:[#allocation7 + $0x28] sm:$0xff]
    %v931 = vld [vmem:[#allocation7 + $0x30] sm:$0xff]
    %v932 = vld [vmem:[#allocation7 + $0x38] sm:$0xff]
    %v933 = vld [vmem:[#allocation7 + $0x40] sm:$0xff]
    %v934 = vld [vmem:[#allocation7 + $0x48] sm:$0xff]
    %v935 = vld [vmem:[#allocation7 + $0x50] sm:$0xff]
    %v936 = vld [vmem:[#allocation7 + $0x58] sm:$0xff]
    %v937 = vld [vmem:[#allocation7 + $0x60] sm:$0xff]
    %v938 = vld [vmem:[#allocation7 + $0x68] sm:$0xff]
    %v939 = vld [vmem:[#allocation7 + $0x70] sm:$0xff]
    %v940 = vld [vmem:[#allocation7 + $0x78] sm:$0xff]
    %v941 = vld [vmem:[#allocation7 + $0x80] sm:$0xff]
    %v942 = vld [vmem:[#allocation7 + $0x88] sm:$0xff]
    %v943 = vld [vmem:[#allocation7 + $0x90] sm:$0xff]
    %v944 = vld [vmem:[#allocation7 + $0x98] sm:$0xff]
    %v945 = vld [vmem:[#allocation7 + $0xa0] sm:$0xff]
    %v946 = vld [vmem:[#allocation7 + $0xa8] sm:$0xff]
    %v947 = vld [vmem:[#allocation7 + $0xb0] sm:$0xff]
    %v948 = vld [vmem:[#allocation7 + $0xb8] sm:$0xff]
    %v949 = vld [vmem:[#allocation7 + $0xc0] sm:$0xff]
    %v950 = vld [vmem:[#allocation7 + $0xc8] sm:$0xff]
    %v951 = vld [vmem:[#allocation7 + $0xd0] sm:$0xff]
    %v952 = vld [vmem:[#allocation7 + $0xd8] sm:$0xff]
    %v953 = vld [vmem:[#allocation7 + $0xe0] sm:$0xff]
    %v954 = vld [vmem:[#allocation7 + $0xe8] sm:$0xff]
    %v955 = vld [vmem:[#allocation7 + $0xf0] sm:$0xff]
    %v956 = vld [vmem:[#allocation7 + $0xf8] sm:$0xff]
    %v957 = vpack.c.bf16 %v921, %v921
    %v958 = vpack.c.bf16 %v922, %v922
    %v959 = vld [vmem:[#allocation8] sm:$0xff]
    %v960 = vld [vmem:[#allocation8 + $0x8] sm:$0xff]
    %v961 = vld [vmem:[#allocation8 + $0x10] sm:$0xff]
    %v962 = vld [vmem:[#allocation8 + $0x18] sm:$0xff]
    %v963 = vld [vmem:[#allocation8 + $0x20] sm:$0xff]
    %v964 = vld [vmem:[#allocation8 + $0x28] sm:$0xff]
    %v965 = vld [vmem:[#allocation8 + $0x30] sm:$0xff]
    %v966 = vld [vmem:[#allocation8 + $0x38] sm:$0xff]
    %v967 = vld [vmem:[#allocation8 + $0x40] sm:$0xff]
    %v968 = vld [vmem:[#allocation8 + $0x48] sm:$0xff]
    %v969 = vld [vmem:[#allocation8 + $0x50] sm:$0xff]
    %v970 = vld [vmem:[#allocation8 + $0x58] sm:$0xff]
    %v971 = vld [vmem:[#allocation8 + $0x60] sm:$0xff]
    %v972 = vld [vmem:[#allocation8 + $0x68] sm:$0xff]
    %v973 = vld [vmem:[#allocation8 + $0x70] sm:$0xff]
    %v974 = vld [vmem:[#allocation8 + $0x78] sm:$0xff]
    %v975 = vld [vmem:[#allocation8 + $0x80] sm:$0xff]
    %v976 = vld [vmem:[#allocation8 + $0x88] sm:$0xff]
    %v977 = vld [vmem:[#allocation8 + $0x90] sm:$0xff]
    %v978 = vld [vmem:[#allocation8 + $0x98] sm:$0xff]
    %v979 = vld [vmem:[#allocation8 + $0xa0] sm:$0xff]
    %v980 = vld [vmem:[#allocation8 + $0xa8] sm:$0xff]
    %v981 = vld [vmem:[#allocation8 + $0xb0] sm:$0xff]
    %v982 = vld [vmem:[#allocation8 + $0xb8] sm:$0xff]
    %v983 = vld [vmem:[#allocation8 + $0xc0] sm:$0xff]
    %v984 = vld [vmem:[#allocation8 + $0xc8] sm:$0xff]
    %v985 = vld [vmem:[#allocation8 + $0xd0] sm:$0xff]
    %v986 = vld [vmem:[#allocation8 + $0xd8] sm:$0xff]
    %v987 = vld [vmem:[#allocation8 + $0xe0] sm:$0xff]
    %v988 = vld [vmem:[#allocation8 + $0xe8] sm:$0xff]
    %v989 = vld [vmem:[#allocation8 + $0xf0] sm:$0xff]
    %v990 = vld [vmem:[#allocation8 + $0xf8] sm:$0xff]
    %v1023 = vunpack.c.l.b16 %v959
    %v1024 = vunpack.c.h.b16 %v959
    %v1025 = vunpack.c.l.b16 %v960
    %v1026 = vunpack.c.h.b16 %v960
    %v1027 = vunpack.c.l.b16 %v961
    %v1028 = vunpack.c.h.b16 %v961
    %v1029 = vunpack.c.l.b16 %v962
    %v1030 = vunpack.c.h.b16 %v962
    %v1031 = vunpack.c.l.b16 %v963
    %v1032 = vunpack.c.h.b16 %v963
    %v1033 = vunpack.c.l.b16 %v964
    %v1034 = vunpack.c.h.b16 %v964
    %v1035 = vunpack.c.l.b16 %v965
    %v1036 = vunpack.c.h.b16 %v965
    %v1037 = vunpack.c.l.b16 %v966
    %v1038 = vunpack.c.h.b16 %v966
    %v1039 = vunpack.c.l.b16 %v967
    %v1040 = vunpack.c.h.b16 %v967
    %v1041 = vunpack.c.l.b16 %v968
    %v1042 = vunpack.c.h.b16 %v968
    %v1043 = vunpack.c.l.b16 %v969
    %v1044 = vunpack.c.h.b16 %v969
    %v1045 = vunpack.c.l.b16 %v970
    %v1046 = vunpack.c.h.b16 %v970
    %v1047 = vunpack.c.l.b16 %v971
    %v1048 = vunpack.c.h.b16 %v971
    %v1049 = vunpack.c.l.b16 %v972
    %v1050 = vunpack.c.h.b16 %v972
    %v1051 = vunpack.c.l.b16 %v973
    %v1052 = vunpack.c.h.b16 %v973
    %v1053 = vunpack.c.l.b16 %v974
    %v1054 = vunpack.c.h.b16 %v974
    %v1055 = vunpack.c.l.b16 %v975
    %v1056 = vunpack.c.h.b16 %v975
    %v1057 = vunpack.c.l.b16 %v976
    %v1058 = vunpack.c.h.b16 %v976
    %v1059 = vunpack.c.l.b16 %v977
    %v1060 = vunpack.c.h.b16 %v977
    %v1061 = vunpack.c.l.b16 %v978
    %v1062 = vunpack.c.h.b16 %v978
    %v1063 = vunpack.c.l.b16 %v979
    %v1064 = vunpack.c.h.b16 %v979
    %v1065 = vunpack.c.l.b16 %v980
    %v1066 = vunpack.c.h.b16 %v980
    %v1067 = vunpack.c.l.b16 %v981
    %v1068 = vunpack.c.h.b16 %v981
    %v1069 = vunpack.c.l.b16 %v982
    %v1070 = vunpack.c.h.b16 %v982
    %v1071 = vunpack.c.l.b16 %v983
    %v1072 = vunpack.c.h.b16 %v983
    %v1073 = vunpack.c.l.b16 %v984
    %v1074 = vunpack.c.h.b16 %v984
    %v1075 = vunpack.c.l.b16 %v985
    %v1076 = vunpack.c.h.b16 %v985
    %v1077 = vunpack.c.l.b16 %v986
    %v1078 = vunpack.c.h.b16 %v986
    %v1079 = vunpack.c.l.b16 %v987
    %v1080 = vunpack.c.h.b16 %v987
    %v1081 = vunpack.c.l.b16 %v988
    %v1082 = vunpack.c.h.b16 %v988
    %v1083 = vunpack.c.l.b16 %v989
    %v1084 = vunpack.c.h.b16 %v989
    %v1085 = vunpack.c.l.b16 %v990
    %v1086 = vunpack.c.h.b16 %v990
    %v1087 = vpack.c.b16 %v1025, %v1023
    %v1088 = vpack.c.b16 %v1026, %v1024
    %v1089 = vpack.c.b16 %v1029, %v1027
    %v1090 = vpack.c.b16 %v1030, %v1028
    %v1091 = vpack.c.b16 %v1033, %v1031
    %v1092 = vpack.c.b16 %v1034, %v1032
    %v1093 = vpack.c.b16 %v1037, %v1035
    %v1094 = vpack.c.b16 %v1038, %v1036
    %v1095 = vpack.c.b16 %v1041, %v1039
    %v1096 = vpack.c.b16 %v1042, %v1040
    %v1097 = vpack.c.b16 %v1045, %v1043
    %v1098 = vpack.c.b16 %v1046, %v1044
    %v1099 = vpack.c.b16 %v1049, %v1047
    %v1100 = vpack.c.b16 %v1050, %v1048
    %v1101 = vpack.c.b16 %v1053, %v1051
    %v1102 = vpack.c.b16 %v1054, %v1052
    %v1103 = vpack.c.b16 %v1057, %v1055
    %v1104 = vpack.c.b16 %v1058, %v1056
    %v1105 = vpack.c.b16 %v1061, %v1059
    %v1106 = vpack.c.b16 %v1062, %v1060
    %v1107 = vpack.c.b16 %v1065, %v1063
    %v1108 = vpack.c.b16 %v1066, %v1064
    %v1109 = vpack.c.b16 %v1069, %v1067
    %v1110 = vpack.c.b16 %v1070, %v1068
    %v1111 = vpack.c.b16 %v1073, %v1071
    %v1112 = vpack.c.b16 %v1074, %v1072
    %v1113 = vpack.c.b16 %v1077, %v1075
    %v1114 = vpack.c.b16 %v1078, %v1076
    %v1115 = vpack.c.b16 %v1081, %v1079
    %v1116 = vpack.c.b16 %v1082, %v1080
    %v1117 = vpack.c.b16 %v1085, %v1083
    %v1118 = vpack.c.b16 %v1086, %v1084
    %1151 = vmatprep.subr.bf16.mxu0 %v1088
    %1152 = vmatpush1.bf16.msra.mxu0 %v1087
    %1153 = vmatprep.subr.bf16.mxu0 %v1090
    %1154 = vmatpush1.bf16.msra.mxu0 %v1089
    %1155 = vmatprep.subr.bf16.mxu0 %v1092
    %1156 = vmatpush1.bf16.msra.mxu0 %v1091
    %1157 = vmatprep.subr.bf16.mxu0 %v1094
    %1158 = vmatpush1.bf16.msra.mxu0 %v1093
    %1159 = vmatprep.subr.bf16.mxu0 %v1096
    %1160 = vmatpush1.bf16.msra.mxu0 %v1095
    %1161 = vmatprep.subr.bf16.mxu0 %v1098
    %1162 = vmatpush1.bf16.msra.mxu0 %v1097
    %1163 = vmatprep.subr.bf16.mxu0 %v1100
    %1164 = vmatpush1.bf16.msra.mxu0 %v1099
    %1165 = vmatprep.subr.bf16.mxu0 %v1102
    %1166 = vmatpush1.bf16.msra.mxu0 %v1101
    %1167 = vmatprep.subr.bf16.mxu0 %v1104
    %1168 = vmatpush1.bf16.msra.mxu0 %v1103
    %1169 = vmatprep.subr.bf16.mxu0 %v1106
    %1170 = vmatpush1.bf16.msra.mxu0 %v1105
    %1171 = vmatprep.subr.bf16.mxu0 %v1108
    %1172 = vmatpush1.bf16.msra.mxu0 %v1107
    %1173 = vmatprep.subr.bf16.mxu0 %v1110
    %1174 = vmatpush1.bf16.msra.mxu0 %v1109
    %1175 = vmatprep.subr.bf16.mxu0 %v1112
    %1176 = vmatpush1.bf16.msra.mxu0 %v1111
    %1177 = vmatprep.subr.bf16.mxu0 %v1114
    %1178 = vmatpush1.bf16.msra.mxu0 %v1113
    %1179 = vmatprep.subr.bf16.mxu0 %v1116
    %1180 = vmatpush1.bf16.msra.mxu0 %v1115
    %1181 = vmatprep.subr.bf16.mxu0 %v1118
    %1182 = vmatpush1.bf16.msra.mxu0 %v1117
    %1183 = vmatprep.mubr.bf16.mxu0 %v958
    %1184 = vmatmul.mubr.bf16.gmra.mrb[0].mxu0 %v957
    %v1185 = vpop.f32.mrb[0].mxu0
    %v1186 = vadd.f32 0.0, %v1185
    %v1187 = vpop.f32.mrb[0].mxu0
    %v1188 = vadd.f32 0.0, %v1187
    %v1189 = vpop.f32.mrb[0].mxu0
    %v1190 = vpop.f32.mrb[0].mxu0
    %1191 = vdwg.mxu0
    %v1224 = vunpack.c.l.b16 %v925
    %v1225 = vunpack.c.h.b16 %v925
    %v1226 = vunpack.c.l.b16 %v926
    %v1227 = vunpack.c.h.b16 %v926
    %v1228 = vunpack.c.l.b16 %v927
    %v1229 = vunpack.c.h.b16 %v927
    %v1230 = vunpack.c.l.b16 %v928
    %v1231 = vunpack.c.h.b16 %v928
    %v1232 = vunpack.c.l.b16 %v929
    %v1233 = vunpack.c.h.b16 %v929
    %v1234 = vunpack.c.l.b16 %v930
    %v1235 = vunpack.c.h.b16 %v930
    %v1236 = vunpack.c.l.b16 %v931
    %v1237 = vunpack.c.h.b16 %v931
    %v1238 = vunpack.c.l.b16 %v932
    %v1239 = vunpack.c.h.b16 %v932
    %v1240 = vunpack.c.l.b16 %v933
    %v1241 = vunpack.c.h.b16 %v933
    %v1242 = vunpack.c.l.b16 %v934
    %v1243 = vunpack.c.h.b16 %v934
    %v1244 = vunpack.c.l.b16 %v935
    %v1245 = vunpack.c.h.b16 %v935
    %v1246 = vunpack.c.l.b16 %v936
    %v1247 = vunpack.c.h.b16 %v936
    %v1248 = vunpack.c.l.b16 %v937
    %v1249 = vunpack.c.h.b16 %v937
    %v1250 = vunpack.c.l.b16 %v938
    %v1251 = vunpack.c.h.b16 %v938
    %v1252 = vunpack.c.l.b16 %v939
    %v1253 = vunpack.c.h.b16 %v939
    %v1254 = vunpack.c.l.b16 %v940
    %v1255 = vunpack.c.h.b16 %v940
    %v1256 = vunpack.c.l.b16 %v941
    %v1257 = vunpack.c.h.b16 %v941
    %v1258 = vunpack.c.l.b16 %v942
    %v1259 = vunpack.c.h.b16 %v942
    %v1260 = vunpack.c.l.b16 %v943
    %v1261 = vunpack.c.h.b16 %v943
    %v1262 = vunpack.c.l.b16 %v944
    %v1263 = vunpack.c.h.b16 %v944
    %v1264 = vunpack.c.l.b16 %v945
    %v1265 = vunpack.c.h.b16 %v945
    %v1266 = vunpack.c.l.b16 %v946
    %v1267 = vunpack.c.h.b16 %v946
    %v1268 = vunpack.c.l.b16 %v947
    %v1269 = vunpack.c.h.b16 %v947
    %v1270 = vunpack.c.l.b16 %v948
    %v1271 = vunpack.c.h.b16 %v948
    %v1272 = vunpack.c.l.b16 %v949
    %v1273 = vunpack.c.h.b16 %v949
    %v1274 = vunpack.c.l.b16 %v950
    %v1275 = vunpack.c.h.b16 %v950
    %v1276 = vunpack.c.l.b16 %v951
    %v1277 = vunpack.c.h.b16 %v951
    %v1278 = vunpack.c.l.b16 %v952
    %v1279 = vunpack.c.h.b16 %v952
    %v1280 = vunpack.c.l.b16 %v953
    %v1281 = vunpack.c.h.b16 %v953
    %v1282 = vunpack.c.l.b16 %v954
    %v1283 = vunpack.c.h.b16 %v954
    %v1284 = vunpack.c.l.b16 %v955
    %v1285 = vunpack.c.h.b16 %v955
    %v1286 = vunpack.c.l.b16 %v956
    %v1287 = vunpack.c.h.b16 %v956
    %v1288 = vpack.c.b16 %v1226, %v1224
    %v1289 = vpack.c.b16 %v1227, %v1225
    %v1290 = vpack.c.b16 %v1230, %v1228
    %v1291 = vpack.c.b16 %v1231, %v1229
    %v1292 = vpack.c.b16 %v1234, %v1232
    %v1293 = vpack.c.b16 %v1235, %v1233
    %v1294 = vpack.c.b16 %v1238, %v1236
    %v1295 = vpack.c.b16 %v1239, %v1237
    %v1296 = vpack.c.b16 %v1242, %v1240
    %v1297 = vpack.c.b16 %v1243, %v1241
    %v1298 = vpack.c.b16 %v1246, %v1244
    %v1299 = vpack.c.b16 %v1247, %v1245
    %v1300 = vpack.c.b16 %v1250, %v1248
    %v1301 = vpack.c.b16 %v1251, %v1249
    %v1302 = vpack.c.b16 %v1254, %v1252
    %v1303 = vpack.c.b16 %v1255, %v1253
    %v1304 = vpack.c.b16 %v1258, %v1256
    %v1305 = vpack.c.b16 %v1259, %v1257
    %v1306 = vpack.c.b16 %v1262, %v1260
    %v1307 = vpack.c.b16 %v1263, %v1261
    %v1308 = vpack.c.b16 %v1266, %v1264
    %v1309 = vpack.c.b16 %v1267, %v1265
    %v1310 = vpack.c.b16 %v1270, %v1268
    %v1311 = vpack.c.b16 %v1271, %v1269
    %v1312 = vpack.c.b16 %v1274, %v1272
    %v1313 = vpack.c.b16 %v1275, %v1273
    %v1314 = vpack.c.b16 %v1278, %v1276
    %v1315 = vpack.c.b16 %v1279, %v1277
    %v1316 = vpack.c.b16 %v1282, %v1280
    %v1317 = vpack.c.b16 %v1283, %v1281
    %v1318 = vpack.c.b16 %v1286, %v1284
    %v1319 = vpack.c.b16 %v1287, %v1285
    %1352 = vmatprep.subr.bf16.mxu0 %v1289
    %1353 = vmatpush1.bf16.msra.mxu0 %v1288
    %1354 = vmatprep.subr.bf16.mxu0 %v1291
    %1355 = vmatpush1.bf16.msra.mxu0 %v1290
    %1356 = vmatprep.subr.bf16.mxu0 %v1293
    %1357 = vmatpush1.bf16.msra.mxu0 %v1292
    %1358 = vmatprep.subr.bf16.mxu0 %v1295
    %1359 = vmatpush1.bf16.msra.mxu0 %v1294
    %1360 = vmatprep.subr.bf16.mxu0 %v1297
    %1361 = vmatpush1.bf16.msra.mxu0 %v1296
    %1362 = vmatprep.subr.bf16.mxu0 %v1299
    %1363 = vmatpush1.bf16.msra.mxu0 %v1298
    %1364 = vmatprep.subr.bf16.mxu0 %v1301
    %1365 = vmatpush1.bf16.msra.mxu0 %v1300
    %1366 = vmatprep.subr.bf16.mxu0 %v1303
    %1367 = vmatpush1.bf16.msra.mxu0 %v1302
    %1368 = vmatprep.subr.bf16.mxu0 %v1305
    %1369 = vmatpush1.bf16.msra.mxu0 %v1304
    %1370 = vmatprep.subr.bf16.mxu0 %v1307
    %1371 = vmatpush1.bf16.msra.mxu0 %v1306
    %1372 = vmatprep.subr.bf16.mxu0 %v1309
    %1373 = vmatpush1.bf16.msra.mxu0 %v1308
    %1374 = vmatprep.subr.bf16.mxu0 %v1311
    %1375 = vmatpush1.bf16.msra.mxu0 %v1310
    %1376 = vmatprep.subr.bf16.mxu0 %v1313
    %1377 = vmatpush1.bf16.msra.mxu0 %v1312
    %1378 = vmatprep.subr.bf16.mxu0 %v1315
    %1379 = vmatpush1.bf16.msra.mxu0 %v1314
    %1380 = vmatprep.subr.bf16.mxu0 %v1317
    %1381 = vmatpush1.bf16.msra.mxu0 %v1316
    %1382 = vmatprep.subr.bf16.mxu0 %v1319
    %1383 = vmatpush1.bf16.msra.mxu0 %v1318
    %1384 = vmatprep.mubr.bf16.mxu0 %v924
    %1385 = vmatmul.mubr.bf16.gmra.mrb[0].mxu0 %v923
    %v1386 = vpop.f32.mrb[0].mxu0
    %v1387 = vadd.f32 %v1186, %v1386
    %v1388 = vpop.f32.mrb[0].mxu0
    %v1389 = vadd.f32 %v1188, %v1388
    %v1390 = vpop.f32.mrb[0].mxu0
    %v1391 = vpop.f32.mrb[0].mxu0
    %1392 = vdwg.mxu0
    %s1393 = sld [smem:[#allocation11 + $0x1]]
    %v1394 = vstv %s1393
    %v1395 = vadd.f32 %v1387, %v1394
    %v1396 = vadd.f32 %v1389, %v1394
    %v1397 = vmax.f32 %v1395, 0.0
    %v1398 = vmax.f32 %v1396, 0.0
    %v1399 = vpack.c.bf16 %v1397, %v1397
    %v1400 = vpack.c.bf16 %v1398, %v1398
    %v1401 = vld [vmem:[#allocation10] sm:$0xff]
    %v1402 = vld [vmem:[#allocation10 + $0x8] sm:$0xff]
    %v1403 = vld [vmem:[#allocation10 + $0x10] sm:$0xff]
    %v1404 = vld [vmem:[#allocation10 + $0x18] sm:$0xff]
    %v1405 = vld [vmem:[#allocation10 + $0x20] sm:$0xff]
    %v1406 = vld [vmem:[#allocation10 + $0x28] sm:$0xff]
    %v1407 = vld [vmem:[#allocation10 + $0x30] sm:$0xff]
    %v1408 = vld [vmem:[#allocation10 + $0x38] sm:$0xff]
    %v1409 = vld [vmem:[#allocation10 + $0x40] sm:$0xff]
    %v1410 = vld [vmem:[#allocation10 + $0x48] sm:$0xff]
    %v1411 = vld [vmem:[#allocation10 + $0x50] sm:$0xff]
    %v1412 = vld [vmem:[#allocation10 + $0x58] sm:$0xff]
    %v1413 = vld [vmem:[#allocation10 + $0x60] sm:$0xff]
    %v1414 = vld [vmem:[#allocation10 + $0x68] sm:$0xff]
    %v1415 = vld [vmem:[#allocation10 + $0x70] sm:$0xff]
    %v1416 = vld [vmem:[#allocation10 + $0x78] sm:$0xff]
    %v1417 = vld [vmem:[#allocation10 + $0x80] sm:$0xff]
    %v1418 = vld [vmem:[#allocation10 + $0x88] sm:$0xff]
    %v1419 = vld [vmem:[#allocation10 + $0x90] sm:$0xff]
    %v1420 = vld [vmem:[#allocation10 + $0x98] sm:$0xff]
    %v1421 = vld [vmem:[#allocation10 + $0xa0] sm:$0xff]
    %v1422 = vld [vmem:[#allocation10 + $0xa8] sm:$0xff]
    %v1423 = vld [vmem:[#allocation10 + $0xb0] sm:$0xff]
    %v1424 = vld [vmem:[#allocation10 + $0xb8] sm:$0xff]
    %v1425 = vld [vmem:[#allocation10 + $0xc0] sm:$0xff]
    %v1426 = vld [vmem:[#allocation10 + $0xc8] sm:$0xff]
    %v1427 = vld [vmem:[#allocation10 + $0xd0] sm:$0xff]
    %v1428 = vld [vmem:[#allocation10 + $0xd8] sm:$0xff]
    %v1429 = vld [vmem:[#allocation10 + $0xe0] sm:$0xff]
    %v1430 = vld [vmem:[#allocation10 + $0xe8] sm:$0xff]
    %v1431 = vld [vmem:[#allocation10 + $0xf0] sm:$0xff]
    %v1432 = vld [vmem:[#allocation10 + $0xf8] sm:$0xff]
    %s1433 = sld [smem:[#allocation11 + $0x2]]
    %v1434 = vstv %s1433
    %v1467 = vunpack.c.l.b16 %v1401
    %v1468 = vunpack.c.h.b16 %v1401
    %v1469 = vunpack.c.l.b16 %v1402
    %v1470 = vunpack.c.h.b16 %v1402
    %v1471 = vunpack.c.l.b16 %v1403
    %v1472 = vunpack.c.h.b16 %v1403
    %v1473 = vunpack.c.l.b16 %v1404
    %v1474 = vunpack.c.h.b16 %v1404
    %v1475 = vunpack.c.l.b16 %v1405
    %v1476 = vunpack.c.h.b16 %v1405
    %v1477 = vunpack.c.l.b16 %v1406
    %v1478 = vunpack.c.h.b16 %v1406
    %v1479 = vunpack.c.l.b16 %v1407
    %v1480 = vunpack.c.h.b16 %v1407
    %v1481 = vunpack.c.l.b16 %v1408
    %v1482 = vunpack.c.h.b16 %v1408
    %v1483 = vunpack.c.l.b16 %v1409
    %v1484 = vunpack.c.h.b16 %v1409
    %v1485 = vunpack.c.l.b16 %v1410
    %v1486 = vunpack.c.h.b16 %v1410
    %v1487 = vunpack.c.l.b16 %v1411
    %v1488 = vunpack.c.h.b16 %v1411
    %v1489 = vunpack.c.l.b16 %v1412
    %v1490 = vunpack.c.h.b16 %v1412
    %v1491 = vunpack.c.l.b16 %v1413
    %v1492 = vunpack.c.h.b16 %v1413
    %v1493 = vunpack.c.l.b16 %v1414
    %v1494 = vunpack.c.h.b16 %v1414
    %v1495 = vunpack.c.l.b16 %v1415
    %v1496 = vunpack.c.h.b16 %v1415
    %v1497 = vunpack.c.l.b16 %v1416
    %v1498 = vunpack.c.h.b16 %v1416
    %v1499 = vunpack.c.l.b16 %v1417
    %v1500 = vunpack.c.h.b16 %v1417
    %v1501 = vunpack.c.l.b16 %v1418
    %v1502 = vunpack.c.h.b16 %v1418
    %v1503 = vunpack.c.l.b16 %v1419
    %v1504 = vunpack.c.h.b16 %v1419
    %v1505 = vunpack.c.l.b16 %v1420
    %v1506 = vunpack.c.h.b16 %v1420
    %v1507 = vunpack.c.l.b16 %v1421
    %v1508 = vunpack.c.h.b16 %v1421
    %v1509 = vunpack.c.l.b16 %v1422
    %v1510 = vunpack.c.h.b16 %v1422
    %v1511 = vunpack.c.l.b16 %v1423
    %v1512 = vunpack.c.h.b16 %v1423
    %v1513 = vunpack.c.l.b16 %v1424
    %v1514 = vunpack.c.h.b16 %v1424
    %v1515 = vunpack.c.l.b16 %v1425
    %v1516 = vunpack.c.h.b16 %v1425
    %v1517 = vunpack.c.l.b16 %v1426
    %v1518 = vunpack.c.h.b16 %v1426
    %v1519 = vunpack.c.l.b16 %v1427
    %v1520 = vunpack.c.h.b16 %v1427
    %v1521 = vunpack.c.l.b16 %v1428
    %v1522 = vunpack.c.h.b16 %v1428
    %v1523 = vunpack.c.l.b16 %v1429
    %v1524 = vunpack.c.h.b16 %v1429
    %v1525 = vunpack.c.l.b16 %v1430
    %v1526 = vunpack.c.h.b16 %v1430
    %v1527 = vunpack.c.l.b16 %v1431
    %v1528 = vunpack.c.h.b16 %v1431
    %v1529 = vunpack.c.l.b16 %v1432
    %v1530 = vunpack.c.h.b16 %v1432
    %v1531 = vpack.c.b16 %v1469, %v1467
    %v1532 = vpack.c.b16 %v1470, %v1468
    %v1533 = vpack.c.b16 %v1473, %v1471
    %v1534 = vpack.c.b16 %v1474, %v1472
    %v1535 = vpack.c.b16 %v1477, %v1475
    %v1536 = vpack.c.b16 %v1478, %v1476
    %v1537 = vpack.c.b16 %v1481, %v1479
    %v1538 = vpack.c.b16 %v1482, %v1480
    %v1539 = vpack.c.b16 %v1485, %v1483
    %v1540 = vpack.c.b16 %v1486, %v1484
    %v1541 = vpack.c.b16 %v1489, %v1487
    %v1542 = vpack.c.b16 %v1490, %v1488
    %v1543 = vpack.c.b16 %v1493, %v1491
    %v1544 = vpack.c.b16 %v1494, %v1492
    %v1545 = vpack.c.b16 %v1497, %v1495
    %v1546 = vpack.c.b16 %v1498, %v1496
    %v1547 = vpack.c.b16 %v1501, %v1499
    %v1548 = vpack.c.b16 %v1502, %v1500
    %v1549 = vpack.c.b16 %v1505, %v1503
    %v1550 = vpack.c.b16 %v1506, %v1504
    %v1551 = vpack.c.b16 %v1509, %v1507
    %v1552 = vpack.c.b16 %v1510, %v1508
    %v1553 = vpack.c.b16 %v1513, %v1511
    %v1554 = vpack.c.b16 %v1514, %v1512
    %v1555 = vpack.c.b16 %v1517, %v1515
    %v1556 = vpack.c.b16 %v1518, %v1516
    %v1557 = vpack.c.b16 %v1521, %v1519
    %v1558 = vpack.c.b16 %v1522, %v1520
    %v1559 = vpack.c.b16 %v1525, %v1523
    %v1560 = vpack.c.b16 %v1526, %v1524
    %v1561 = vpack.c.b16 %v1529, %v1527
    %v1562 = vpack.c.b16 %v1530, %v1528
    %1595 = vmatprep.subr.bf16.mxu0 %v1532
    %1596 = vmatpush1.bf16.msra.mxu0 %v1531
    %1597 = vmatprep.subr.bf16.mxu0 %v1534
    %1598 = vmatpush1.bf16.msra.mxu0 %v1533
    %1599 = vmatprep.subr.bf16.mxu0 %v1536
    %1600 = vmatpush1.bf16.msra.mxu0 %v1535
    %1601 = vmatprep.subr.bf16.mxu0 %v1538
    %1602 = vmatpush1.bf16.msra.mxu0 %v1537
    %1603 = vmatprep.subr.bf16.mxu0 %v1540
    %1604 = vmatpush1.bf16.msra.mxu0 %v1539
    %1605 = vmatprep.subr.bf16.mxu0 %v1542
    %1606 = vmatpush1.bf16.msra.mxu0 %v1541
    %1607 = vmatprep.subr.bf16.mxu0 %v1544
    %1608 = vmatpush1.bf16.msra.mxu0 %v1543
    %1609 = vmatprep.subr.bf16.mxu0 %v1546
    %1610 = vmatpush1.bf16.msra.mxu0 %v1545
    %1611 = vmatprep.subr.bf16.mxu0 %v1548
    %1612 = vmatpush1.bf16.msra.mxu0 %v1547
    %1613 = vmatprep.subr.bf16.mxu0 %v1550
    %1614 = vmatpush1.bf16.msra.mxu0 %v1549
    %1615 = vmatprep.subr.bf16.mxu0 %v1552
    %1616 = vmatpush1.bf16.msra.mxu0 %v1551
    %1617 = vmatprep.subr.bf16.mxu0 %v1554
    %1618 = vmatpush1.bf16.msra.mxu0 %v1553
    %1619 = vmatprep.subr.bf16.mxu0 %v1556
    %1620 = vmatpush1.bf16.msra.mxu0 %v1555
    %1621 = vmatprep.subr.bf16.mxu0 %v1558
    %1622 = vmatpush1.bf16.msra.mxu0 %v1557
    %1623 = vmatprep.subr.bf16.mxu0 %v1560
    %1624 = vmatpush1.bf16.msra.mxu0 %v1559
    %1625 = vmatprep.subr.bf16.mxu0 %v1562
    %1626 = vmatpush1.bf16.msra.mxu0 %v1561
    %1627 = vmatprep.mubr.bf16.mxu0 %v1400
    %1628 = vmatmul.mubr.bf16.gmra.mrb[0].mxu0 %v1399
    %v1629 = vpop.f32.mrb[0].mxu0
    %v1630 = vadd.f32 %v1434, %v1629
    %v1631 = vpop.f32.mrb[0].mxu0
    %v1632 = vadd.f32 %v1434, %v1631
    %v1633 = vpop.f32.mrb[0].mxu0
    %v1634 = vpop.f32.mrb[0].mxu0
    %1635 = vdwg.mxu0
    %v1636 = vxor.u32 %v1630, 2147483648
    %v1637 = vxor.u32 %v1632, 2147483648
    %v1638 = vmul.f32 %v1636, 1.442695
    %v1639 = vpow.pop %v1638
    %v1640 = vmul.f32 %v1637, 1.442695
    %v1641 = vpow.pop %v1640
    %v1642 = vadd.f32 %v1639, 1.0
    %v1643 = vadd.f32 %v1641, 1.0
    %v1644 = vrcp.pop %v1642
    %v1645 = vmul.f32 1.0, %v1644
    %v1646 = vrcp.pop %v1643
    %v1647 = vmul.f32 1.0, %v1646
    %v1648 = vmul.f32 %v900, %v1645
    %v1649 = vmul.f32 %v902, %v1647
    %v1652 = vcombine.low %v1648, %v1649
    %v1654 = vunpack.c.l.s4 1966171168
    %v1655 = vunpack.c.0.s8 %v1654
    %v1656 = vlaneseq
    %v1657 = vshrl.u32 %v1656, 7
    %v1658 = vsub.s32 %v1655, %v1657
    %v1659 = vrot.slane %v1652, %v1658
    %v1660 = vcombine.high %v1659, %v1659
    %v1662 = vunpack.c.l.s4 1966171168
    %v1663 = vunpack.c.0.s8 %v1662
    %v1664 = vlaneseq
    %v1665 = vshrl.u32 %v1664, 7
    %v1666 = vsub.s32 %v1663, %v1665
    %v1667 = vrot.slane %v1659, %v1666
    %v1669 = vunpack.c.l.s4 1966171168
    %v1670 = vunpack.c.0.s8 %v1669
    %v1671 = vlaneseq
    %v1672 = vshrl.u32 %v1671, 7
    %v1673 = vsub.s32 %v1670, %v1672
    %v1674 = vrot.slane %v1660, %v1673
    %v1675 = vlaneseq
    %v1676 = vshrl.u32 %v1675, 7
    %v1677 = vsub.s32 0, %v1676
    %v1678 = vrot.slane %v1667, %v1677
    %v1679 = vlaneseq
    %v1680 = vshrl.u32 %v1679, 7
    %v1681 = vsub.s32 1, %v1680
    %v1682 = vrot.slane %v1667, %v1681
    %v1683 = vlaneseq
    %v1684 = vshrl.u32 %v1683, 7
    %v1685 = vsub.s32 0, %v1684
    %v1686 = vrot.slane %v1674, %v1685
    %v1687 = vlaneseq
    %v1688 = vshrl.u32 %v1687, 7
    %v1689 = vsub.s32 1, %v1688
    %v1690 = vrot.slane %v1674, %v1689
    %v1691 = vcombine.low %v1678, %v1682
    %v1692 = vcombine.low %v1686, %v1690
    %v1695 = vmul.f32 %v317, %v1691
    %v1696 = vmul.f32 %v318, %v1692
    %1697 = vst [vmem:[%s9] sm:$0xff] %v1695
    %1698 = vst [vmem:[%s9 + $0x8] sm:$0xff] %v1696
    // Predicated region
    $region62: #{_forward_impl.1} parent=1 // pred_check
      _
    $region63: #{_forward_impl.1} parent=1 // pred_check_branch
      %1700 = sbr.rel (0) target = $region65
    $region64: #{_forward_impl.1} parent=1 // pred_region
      _
    $region65: #{_forward_impl.1} parent=1 // pred_fallthru
      _
    // Predicated region
    $region66: #{_forward_impl.1} parent=1 // pred_check
      _
    $region67: #{_forward_impl.1} parent=1 // pred_check_branch
      %1702 = sbr.rel (0) target = $region69
    $region68: #{_forward_impl.1} parent=1 // pred_region
      _
    $region69: #{_forward_impl.1} parent=1 // pred_fallthru
      _
    %1703 = vsyncpa [#allocation3], 1
    %1704 = vsyncpa [#allocation6], 1
    %1705 = vsyncpa [#allocation9], 1
    %1706 = vsyncpa [#allocation4], 1

// kernel: _forward_impl.1
$region0: #{_forward_impl.1}
  #allocation0 [shape = 'u32[]', space=smem, size = 0x4, offset = 0x4, fixed_abs, tag = 'smem constant byte address 0x4 - core index']
  #allocation1 [shape = 'u32[144,128]{1,0:T(1,128)}', space=vmem, size = 0x12000, scoped, tag = 'internal scratch']
  %s0 = inlined_call_operand.vmem [shape: f32[2,4,256], index: 0, kind: input, shape index: {}]
  %s1 = inlined_call_operand.vmem [shape: bf16[4,2], index: 1, kind: input, shape index: {}]
  %s2 = inlined_call_operand.vmem [shape: bf16[2,4], index: 2, kind: input, shape index: {}]
  %s3 = inlined_call_operand.hbm [shape: bf16[256,256], index: 3, kind: input, shape index: {}]
  %s4 = inlined_call_operand.hbm [shape: bf16[256,256], index: 4, kind: input, shape index: {}]
  %s5 = inlined_call_operand.hbm [shape: bf16[256,256], index: 5, kind: input, shape index: {}]
  %s6 = inlined_call_operand.hbm [shape: bf16[256,256], index: 6, kind: input, shape index: {}]
  %s7 = inlined_call_operand.hbm [shape: bf16[256,256], index: 7, kind: input, shape index: {}]
  %s8 = inlined_call_operand.vmem [shape: f32[3], index: 8, kind: input, shape index: {}]
  %s9 = inlined_call_operand.vmem [shape: f32[2,4,256], index: 9, kind: output, shape index: {}]
  %s10 = sld [smem:[#allocation0]]
  $region70: #{_forward_impl.1} parent=0
    _
  %s12 = ssub.s32 1, %s10
  %s13 = scalar_select 0, %s12, %s10
  $region1: #{_forward_impl.1} parent=0
    #allocation2 [shape = 'u8[131072]{0}', space=vmem, size = 0x20000, scoped, tag = 'input window, operand 3, single buffered']
    #allocation3 [shape = 's32[1]{0}', space=sflag, size = 0x4, scoped, tag = 'scoped memory for _forward_impl.1']
    #allocation4 [shape = 's32[1]{0}', space=sflag, size = 0x4, scoped, tag = 'scoped memory for _forward_impl.1']
    #allocation5 [shape = 'u8[131072]{0}', space=vmem, size = 0x20000, scoped, tag = 'input window, operand 4, single buffered']
    #allocation6 [shape = 's32[1]{0}', space=sflag, size = 0x4, scoped, tag = 'scoped memory for _forward_impl.1']
    #allocation7 [shape = 'u8[131072]{0}', space=vmem, size = 0x20000, scoped, tag = 'input window, operand 5, single buffered']
    #allocation8 [shape = 'u8[131072]{0}', space=vmem, size = 0x20000, scoped, tag = 'input window, operand 6, single buffered']
    #allocation9 [shape = 's32[1]{0}', space=sflag, size = 0x4, scoped, tag = 'scoped memory for _forward_impl.1']
    #allocation10 [shape = 'u8[131072]{0}', space=vmem, size = 0x20000, scoped, tag = 'input window, operand 7, single buffered']
    #allocation11 [shape = 'u8[512]{0}', space=smem, size = 0x200, scoped, tag = 'input window, operand 8, single buffered']
    %14 = vsyncpa [#allocation3], 0
    %15 = vsyncpa [#allocation6], 0
    %16 = vsyncpa [#allocation9], 0
    %17 = vsyncpa [#allocation4], 0
    // Predicated region
    $region2: #{_forward_impl.1} parent=1 // pred_check
      _
    $region3: #{_forward_impl.1} parent=1 // pred_check_branch
      %19 = sbr.rel (0) target = $region5
    $region4: #{_forward_impl.1} parent=1 // pred_region
      _
    $region5: #{_forward_impl.1} parent=1 // pred_fallthru
      _
    // Predicated region
    $region6: #{_forward_impl.1} parent=1 // pred_check
      _
    $region7: #{_forward_impl.1} parent=1 // pred_check_branch
      %21 = sbr.rel (0) target = $region9
    $region8: #{_forward_impl.1} parent=1 // pred_region
      _
    $region9: #{_forward_impl.1} parent=1 // pred_fallthru
      _
    // Predicated region
    $region10: #{_forward_impl.1} parent=1 // pred_check
      _
    $region11: #{_forward_impl.1} parent=1 // pred_check_branch
      %23 = sbr.rel (0) target = $region13
    $region12: #{_forward_impl.1} parent=1 // pred_region
      _
    $region13: #{_forward_impl.1} parent=1 // pred_fallthru
      _
    // Predicated region
    $region14: #{_forward_impl.1} parent=1 // pred_check
      _
    $region15: #{_forward_impl.1} parent=1 // pred_check_branch
      %25 = sbr.rel (0) target = $region17
    $region16: #{_forward_impl.1} parent=1 // pred_region
      %s27 = ssub.s32 4096, 4096
      %28 = vsyncadd [#allocation3], %s27
      %s29 = sshll.u32 [#allocation2], 4
      %s30 = int_to_ptr.vmem [resolvable:$true] %s29
      %35 = dma.hbm_to_vmem [thread:$0]  %s3, 4096, %s30, [#allocation3], 128, 128, 8
    $region17: #{_forward_impl.1} parent=1 // pred_fallthru
      _
    // Predicated region
    $region18: #{_forward_impl.1} parent=1 // pred_check
      _
    $region19: #{_forward_impl.1} parent=1 // pred_check_branch
      %37 = sbr.rel (0) target = $region21
    $region20: #{_forward_impl.1} parent=1 // pred_region
      %s39 = ssub.s32 4096, 4096
      %40 = vsyncadd [#allocation6], %s39
      %s41 = sshll.u32 [#allocation5], 4
      %s42 = int_to_ptr.vmem [resolvable:$true] %s41
      %47 = dma.hbm_to_vmem [thread:$0]  %s4, 4096, %s42, [#allocation6], 128, 128, 8
    $region21: #{_forward_impl.1} parent=1 // pred_fallthru
      _
    // Predicated region
    $region22: #{_forward_impl.1} parent=1 // pred_check
      _
    $region23: #{_forward_impl.1} parent=1 // pred_check_branch
      %49 = sbr.rel (0) target = $region25
    $region24: #{_forward_impl.1} parent=1 // pred_region
      %s51 = ssub.s32 4096, 4096
      %52 = vsyncadd [#allocation6], %s51
      %s53 = sshll.u32 [#allocation7], 4
      %s54 = int_to_ptr.vmem [resolvable:$true] %s53
      %59 = dma.hbm_to_vmem [thread:$0]  %s5, 4096, %s54, [#allocation6], 128, 128, 8
    $region25: #{_forward_impl.1} parent=1 // pred_fallthru
      _
    // Predicated region
    $region26: #{_forward_impl.1} parent=1 // pred_check
      _
    $region27: #{_forward_impl.1} parent=1 // pred_check_branch
      %61 = sbr.rel (0) target = $region29
    $region28: #{_forward_impl.1} parent=1 // pred_region
      %s63 = ssub.s32 4096, 4096
      %64 = vsyncadd [#allocation9], %s63
      %s65 = sshll.u32 [#allocation8], 4
      %s66 = int_to_ptr.vmem [resolvable:$true] %s65
      %71 = dma.hbm_to_vmem [thread:$0]  %s6, 4096, %s66, [#allocation9], 128, 128, 8
    $region29: #{_forward_impl.1} parent=1 // pred_fallthru
      _
    // Predicated region
    $region30: #{_forward_impl.1} parent=1 // pred_check
      _
    $region31: #{_forward_impl.1} parent=1 // pred_check_branch
      %73 = sbr.rel (0) target = $region33
    $region32: #{_forward_impl.1} parent=1 // pred_region
      %s75 = ssub.s32 4096, 4096
      %76 = vsyncadd [#allocation9], %s75
      %s77 = sshll.u32 [#allocation10], 4
      %s78 = int_to_ptr.vmem [resolvable:$true] %s77
      %83 = dma.hbm_to_vmem [thread:$0]  %s7, 4096, %s78, [#allocation9], 128, 128, 8
    $region33: #{_forward_impl.1} parent=1 // pred_fallthru
      _
    // Predicated region
    $region34: #{_forward_impl.1} parent=1 // pred_check
      _
    $region35: #{_forward_impl.1} parent=1 // pred_check_branch
      %85 = sbr.rel (0) target = $region37
    $region36: #{_forward_impl.1} parent=1 // pred_region
      %s87 = ssub.s32 16, 16
      %88 = vsyncadd [#allocation4], %s87
      %s90 = sshll.u32 %s8, 4
      %s91 = int_to_ptr.vmem [resolvable:$true] %s90
      %93 = dma.vmem_to_smem %s91, 16, [#allocation11], [#allocation4]
    $region37: #{_forward_impl.1} parent=1 // pred_fallthru
      _
    // Predicated region
    $region38: #{_forward_impl.1} parent=1 // pred_check
      _
    $region39: #{_forward_impl.1} parent=1 // pred_check_branch
      %95 = sbr.rel (0) target = $region41
    $region40: #{_forward_impl.1} parent=1 // pred_region
      %96 = dma.done [#allocation3], 4096
    $region41: #{_forward_impl.1} parent=1 // pred_fallthru
      _
    // Predicated region
    $region42: #{_forward_impl.1} parent=1 // pred_check
      _
    $region43: #{_forward_impl.1} parent=1 // pred_check_branch
      %98 = sbr.rel (0) target = $region45
    $region44: #{_forward_impl.1} parent=1 // pred_region
      %99 = dma.done [#allocation6], 4096
    $region45: #{_forward_impl.1} parent=1 // pred_fallthru
      _
    // Predicated region
    $region46: #{_forward_impl.1} parent=1 // pred_check
      _
    $region47: #{_forward_impl.1} parent=1 // pred_check_branch
      %101 = sbr.rel (0) target = $region49
    $region48: #{_forward_impl.1} parent=1 // pred_region
      %102 = dma.done [#allocation6], 4096
    $region49: #{_forward_impl.1} parent=1 // pred_fallthru
      _
    // Predicated region
    $region50: #{_forward_impl.1} parent=1 // pred_check
      _
    $region51: #{_forward_impl.1} parent=1 // pred_check_branch
      %104 = sbr.rel (0) target = $region53
    $region52: #{_forward_impl.1} parent=1 // pred_region
      %105 = dma.done [#allocation9], 4096
    $region53: #{_forward_impl.1} parent=1 // pred_fallthru
      _
    // Predicated region
    $region54: #{_forward_impl.1} parent=1 // pred_check
      _
    $region55: #{_forward_impl.1} parent=1 // pred_check_branch
      %107 = sbr.rel (0) target = $region57
    $region56: #{_forward_impl.1} parent=1 // pred_region
      %108 = dma.done [#allocation9], 4096
    $region57: #{_forward_impl.1} parent=1 // pred_fallthru
      _
    // Predicated region
    $region58: #{_forward_impl.1} parent=1 // pred_check
      _
    $region59: #{_forward_impl.1} parent=1 // pred_check_branch
      %110 = sbr.rel (0) target = $region61
    $region60: #{_forward_impl.1} parent=1 // pred_region
      %111 = dma.done [#allocation4], 16
    $region61: #{_forward_impl.1} parent=1 // pred_fallthru
      _
    %112 = sfence
    %v114 = vld [vmem:[%s0] sm:$0xff]
    %v115 = vld [vmem:[%s0 + $0x8] sm:$0xff]
    %v118 = vcombine.high %v114, %v114
    %v119 = vcombine.high %v115, %v115
    %vm122 = vcmask 1043456
    %v123 = vsel %vm122, %v114, 0.0
    %v124 = vsel %vm122, %v118, 0.0
    %v125 = vadd.f32 %v123, %v124
    %126 = vadd.xlane.f32.xlu0 %v125
    %v127 = vpop.xlane.xlu0 %126
    %v128 = vsel %vm122, %v115, 0.0
    %v129 = vsel %vm122, %v119, 0.0
    %v130 = vadd.f32 %v128, %v129
    %131 = vadd.xlane.f32.xlu0 %v130
    %v132 = vpop.xlane.xlu0 %131
    %v133 = vmul.f32 %v127, 0.00390625
    %v134 = vmul.f32 %v132, 0.00390625
    %v135 = vsel %vm122, %v114, -inf
    %v136 = vsel %vm122, %v118, -inf
    %v137 = vmax.f32 %v135, %v136
    %138 = vmax.xlane.f32.xlu0 %v137
    %v139 = vpop.xlane.xlu0 %138
    %v140 = vsel %vm122, %v115, -inf
    %v141 = vsel %vm122, %v119, -inf
    %v142 = vmax.f32 %v140, %v141
    %143 = vmax.xlane.f32.xlu0 %v142
    %v144 = vpop.xlane.xlu0 %143
    %v147 = vlaneseq
    %v148 = vand.u32 %v147, 127
    %v149 = vlaneseq
    %v150 = vshrl.u32 %v149, 7
    %v151 = vsub.s32 %v148, %v150
    %v152 = vrot.slane %v133, %v151
    %v153 = vlaneseq
    %v154 = vshrl.u32 %v153, 7
    %v155 = vsub.s32 %v148, %v154
    %v156 = vrot.slane %v134, %v155
    %vm157 = vcmask 1041409
    %v158 = vsel %vm157, %v156, %v152
    %v162 = vlaneseq
    %v163 = vshrl.u32 %v162, 7
    %v164 = vsub.s32 %v148, %v163
    %v165 = vrot.slane %v139, %v164
    %v166 = vlaneseq
    %v167 = vshrl.u32 %v166, 7
    %v168 = vsub.s32 %v148, %v167
    %v169 = vrot.slane %v144, %v168
    %vm170 = vcmask 1043459
    %v171 = vsel %vm170, %v169, %v165
    %vm173 = vcmask 1041408
    %v174 = vsel %vm173, %v158, %v171
    %v175 = vpack.c.bf16 %v174, %v174
    %v176 = vld [vmem:[%s1] sm:$0x3]
    %vm177 = vcmask 31744
    %v179 = vsel %vm177, %v175, 0
    %v182 = vsel %vm173, %v176, 0
    %184 = vmatprep.subr.bf16.mxu0 0
    %185 = vmatpush1.bf16.msra.mxu0 %v182
    %186 = vmatprep.subr.bf16.mxu0 0
    %187 = vmatpush1.bf16.msra.mxu0 0
    %188 = vmatprep.subr.bf16.mxu0 0
    %189 = vmatpush1.bf16.msra.mxu0 0
    %190 = vmatprep.subr.bf16.mxu0 0
    %191 = vmatpush1.bf16.msra.mxu0 0
    %192 = vmatprep.subr.bf16.mxu0 0
    %193 = vmatpush1.bf16.msra.mxu0 0
    %194 = vmatprep.subr.bf16.mxu0 0
    %195 = vmatpush1.bf16.msra.mxu0 0
    %196 = vmatprep.subr.bf16.mxu0 0
    %197 = vmatpush1.bf16.msra.mxu0 0
    %198 = vmatprep.subr.bf16.mxu0 0
    %199 = vmatpush1.bf16.msra.mxu0 0
    %200 = vmatprep.subr.bf16.mxu0 0
    %201 = vmatpush1.bf16.msra.mxu0 0
    %202 = vmatprep.subr.bf16.mxu0 0
    %203 = vmatpush1.bf16.msra.mxu0 0
    %204 = vmatprep.subr.bf16.mxu0 0
    %205 = vmatpush1.bf16.msra.mxu0 0
    %206 = vmatprep.subr.bf16.mxu0 0
    %207 = vmatpush1.bf16.msra.mxu0 0
    %208 = vmatprep.subr.bf16.mxu0 0
    %209 = vmatpush1.bf16.msra.mxu0 0
    %210 = vmatprep.subr.bf16.mxu0 0
    %211 = vmatpush1.bf16.msra.mxu0 0
    %212 = vmatprep.subr.bf16.mxu0 0
    %213 = vmatpush1.bf16.msra.mxu0 0
    %214 = vmatprep.subr.bf16.mxu0 0
    %215 = vmatpush1.bf16.msra.mxu0 0
    %216 = vmatprep.mubr.bf16.mxu0 0
    %217 = vmatmul.mubr.bf16.gmra.mrb[0].mxu0 %v179
    %v218 = vpop.f32.mrb[0].mxu0
    %v219 = vadd.f32 0.0, %v218
    %v220 = vpop.f32.mrb[0].mxu0
    %v221 = vpop.f32.mrb[0].mxu0
    %v222 = vpop.f32.mrb[0].mxu0
    %223 = vdwg.mxu0
    %v224 = vmax.f32 %v219, 0.0
    %v225 = vpack.c.bf16 %v224, %v224
    %v226 = vld [vmem:[%s2] sm:$0x1]
    %vm227 = vcmask 15360
    %v229 = vsel %vm227, %v225, 0
    %vm231 = vcmask 1040384
    %v233 = vsel %vm231, %v226, 0
    %235 = vmatprep.subr.bf16.mxu0 0
    %236 = vmatpush1.bf16.msra.mxu0 %v233
    %237 = vmatprep.subr.bf16.mxu0 0
    %238 = vmatpush1.bf16.msra.mxu0 0
    %239 = vmatprep.subr.bf16.mxu0 0
    %240 = vmatpush1.bf16.msra.mxu0 0
    %241 = vmatprep.subr.bf16.mxu0 0
    %242 = vmatpush1.bf16.msra.mxu0 0
    %243 = vmatprep.subr.bf16.mxu0 0
    %244 = vmatpush1.bf16.msra.mxu0 0
    %245 = vmatprep.subr.bf16.mxu0 0
    %246 = vmatpush1.bf16.msra.mxu0 0
    %247 = vmatprep.subr.bf16.mxu0 0
    %248 = vmatpush1.bf16.msra.mxu0 0
    %249 = vmatprep.subr.bf16.mxu0 0
    %250 = vmatpush1.bf16.msra.mxu0 0
    %251 = vmatprep.subr.bf16.mxu0 0
    %252 = vmatpush1.bf16.msra.mxu0 0
    %253 = vmatprep.subr.bf16.mxu0 0
    %254 = vmatpush1.bf16.msra.mxu0 0
    %255 = vmatprep.subr.bf16.mxu0 0
    %256 = vmatpush1.bf16.msra.mxu0 0
    %257 = vmatprep.subr.bf16.mxu0 0
    %258 = vmatpush1.bf16.msra.mxu0 0
    %259 = vmatprep.subr.bf16.mxu0 0
    %260 = vmatpush1.bf16.msra.mxu0 0
    %261 = vmatprep.subr.bf16.mxu0 0
    %262 = vmatpush1.bf16.msra.mxu0 0
    %263 = vmatprep.subr.bf16.mxu0 0
    %264 = vmatpush1.bf16.msra.mxu0 0
    %265 = vmatprep.subr.bf16.mxu0 0
    %266 = vmatpush1.bf16.msra.mxu0 0
    %267 = vmatprep.mubr.bf16.mxu0 0
    %268 = vmatmul.mubr.bf16.gmra.mrb[0].mxu0 %v229
    %v269 = vpop.f32.mrb[0].mxu0
    %v270 = vadd.f32 0.0, %v269
    %v271 = vpop.f32.mrb[0].mxu0
    %v272 = vpop.f32.mrb[0].mxu0
    %v273 = vpop.f32.mrb[0].mxu0
    %274 = vdwg.mxu0
    %v276 = vrot.slane %v270, 2
    %v278 = vadd.f32 %v270, %v276
    %v279 = vxor.u32 %v278, 2147483648
    %v280 = vmul.f32 %v279, 1.442695
    %v281 = vpow.pop %v280
    %v282 = vadd.f32 %v281, 1.0
    %v283 = vrcp.pop %v282
    %v284 = vmul.f32 1.0, %v283
    %v285 = vlaneseq
    %v286 = vshrl.u32 %v285, 7
    %v287 = vsub.s32 0, %v286
    %v288 = vrot.slane %v284, %v287
    %290 = vbcast.lane.b32.xlu0 %v288, 256
    %v291 = vpop.permute.xlu0 %290
    %v292 = vlaneseq
    %v293 = vshrl.u32 %v292, 7
    %v294 = vsub.s32 1, %v293
    %v295 = vrot.slane %v284, %v294
    %297 = vbcast.lane.b32.xlu0 %v295, 256
    %v298 = vpop.permute.xlu0 %297
    %v302 = vunpack.c.l.s4 839922192
    %v303 = vunpack.c.0.s8 %v302
    %v304 = vlaneseq
    %v305 = vshrl.u32 %v304, 7
    %v306 = vsub.s32 %v303, %v305
    %v307 = vrot.slane %v291, %v306
    %v309 = vunpack.c.l.s4 839922192
    %v310 = vunpack.c.0.s8 %v309
    %v311 = vlaneseq
    %v312 = vshrl.u32 %v311, 7
    %v313 = vsub.s32 %v310, %v312
    %v314 = vrot.slane %v298, %v313
    %v317 = vmul.f32 %v114, %v307
    %v318 = vmul.f32 %v115, %v314
    %v321 = vcombine.high %v317, %v317
    %v322 = vcombine.high %v318, %v318
    %v325 = vsel %vm122, %v317, -inf
    %v326 = vrot.slane %v325, 4
    %v327 = vmax.f32 %v325, %v326
    %v328 = vrot.slane %v327, 2
    %v329 = vmax.f32 %v327, %v328
    %v330 = vrot.slane %v329, 1
    %v331 = vmax.f32 %v329, %v330
    %v332 = vsel %vm122, %v321, -inf
    %v333 = vrot.slane %v332, 4
    %v334 = vmax.f32 %v332, %v333
    %v335 = vrot.slane %v334, 2
    %v336 = vmax.f32 %v334, %v335
    %v337 = vrot.slane %v336, 1
    %v338 = vmax.f32 %v336, %v337
    %v339 = vsel %vm122, %v318, -inf
    %v340 = vrot.slane %v339, 4
    %v341 = vmax.f32 %v339, %v340
    %v342 = vrot.slane %v341, 2
    %v343 = vmax.f32 %v341, %v342
    %v344 = vrot.slane %v343, 1
    %v345 = vmax.f32 %v343, %v344
    %v346 = vsel %vm122, %v322, -inf
    %v347 = vrot.slane %v346, 4
    %v348 = vmax.f32 %v346, %v347
    %v349 = vrot.slane %v348, 2
    %v350 = vmax.f32 %v348, %v349
    %v351 = vrot.slane %v350, 1
    %v352 = vmax.f32 %v350, %v351
    %v353 = vsel %vm122, %v317, 0.0
    %v354 = vrot.slane %v353, 4
    %v355 = vadd.f32 %v353, %v354
    %v356 = vrot.slane %v355, 2
    %v357 = vadd.f32 %v355, %v356
    %v358 = vrot.slane %v357, 1
    %v359 = vadd.f32 %v357, %v358
    %v360 = vsel %vm122, %v321, 0.0
    %v361 = vrot.slane %v360, 4
    %v362 = vadd.f32 %v360, %v361
    %v363 = vrot.slane %v362, 2
    %v364 = vadd.f32 %v362, %v363
    %v365 = vrot.slane %v364, 1
    %v366 = vadd.f32 %v364, %v365
    %v367 = vsel %vm122, %v318, 0.0
    %v368 = vrot.slane %v367, 4
    %v369 = vadd.f32 %v367, %v368
    %v370 = vrot.slane %v369, 2
    %v371 = vadd.f32 %v369, %v370
    %v372 = vrot.slane %v371, 1
    %v373 = vadd.f32 %v371, %v372
    %v374 = vsel %vm122, %v322, 0.0
    %v375 = vrot.slane %v374, 4
    %v376 = vadd.f32 %v374, %v375
    %v377 = vrot.slane %v376, 2
    %v378 = vadd.f32 %v376, %v377
    %v379 = vrot.slane %v378, 1
    %v380 = vadd.f32 %v378, %v379
    %v381 = vmul.f32 %v359, 0.25
    %v382 = vmul.f32 %v366, 0.25
    %v383 = vmul.f32 %v373, 0.25
    %v384 = vmul.f32 %v380, 0.25
    %v385 = vpack.c.bf16 %v331, %v331
    %v386 = vpack.c.bf16 %v338, %v338
    %v387 = vpack.c.bf16 %v345, %v345
    %v388 = vpack.c.bf16 %v352, %v352
    %v389 = vld [vmem:[#allocation2] sm:$0xff]
    %v390 = vld [vmem:[#allocation2 + $0x8] sm:$0xff]
    %v391 = vld [vmem:[#allocation2 + $0x10] sm:$0xff]
    %v392 = vld [vmem:[#allocation2 + $0x18] sm:$0xff]
    %v393 = vld [vmem:[#allocation2 + $0x20] sm:$0xff]
    %v394 = vld [vmem:[#allocation2 + $0x28] sm:$0xff]
    %v395 = vld [vmem:[#allocation2 + $0x30] sm:$0xff]
    %v396 = vld [vmem:[#allocation2 + $0x38] sm:$0xff]
    %v397 = vld [vmem:[#allocation2 + $0x40] sm:$0xff]
    %v398 = vld [vmem:[#allocation2 + $0x48] sm:$0xff]
    %v399 = vld [vmem:[#allocation2 + $0x50] sm:$0xff]
    %v400 = vld [vmem:[#allocation2 + $0x58] sm:$0xff]
    %v401 = vld [vmem:[#allocation2 + $0x60] sm:$0xff]
    %v402 = vld [vmem:[#allocation2 + $0x68] sm:$0xff]
    %v403 = vld [vmem:[#allocation2 + $0x70] sm:$0xff]
    %v404 = vld [vmem:[#allocation2 + $0x78] sm:$0xff]
    %v405 = vld [vmem:[#allocation2 + $0x80] sm:$0xff]
    %v406 = vld [vmem:[#allocation2 + $0x88] sm:$0xff]
    %v407 = vld [vmem:[#allocation2 + $0x90] sm:$0xff]
    %v408 = vld [vmem:[#allocation2 + $0x98] sm:$0xff]
    %v409 = vld [vmem:[#allocation2 + $0xa0] sm:$0xff]
    %v410 = vld [vmem:[#allocation2 + $0xa8] sm:$0xff]
    %v411 = vld [vmem:[#allocation2 + $0xb0] sm:$0xff]
    %v412 = vld [vmem:[#allocation2 + $0xb8] sm:$0xff]
    %v413 = vld [vmem:[#allocation2 + $0xc0] sm:$0xff]
    %v414 = vld [vmem:[#allocation2 + $0xc8] sm:$0xff]
    %v415 = vld [vmem:[#allocation2 + $0xd0] sm:$0xff]
    %v416 = vld [vmem:[#allocation2 + $0xd8] sm:$0xff]
    %v417 = vld [vmem:[#allocation2 + $0xe0] sm:$0xff]
    %v418 = vld [vmem:[#allocation2 + $0xe8] sm:$0xff]
    %v419 = vld [vmem:[#allocation2 + $0xf0] sm:$0xff]
    %v420 = vld [vmem:[#allocation2 + $0xf8] sm:$0xff]
    %v421 = vpack.c.bf16 %v381, %v381
    %v422 = vpack.c.bf16 %v382, %v382
    %v423 = vpack.c.bf16 %v383, %v383
    %v424 = vpack.c.bf16 %v384, %v384
    %v425 = vld [vmem:[#allocation5] sm:$0xff]
    %v426 = vld [vmem:[#allocation5 + $0x8] sm:$0xff]
    %v427 = vld [vmem:[#allocation5 + $0x10] sm:$0xff]
    %v428 = vld [vmem:[#allocation5 + $0x18] sm:$0xff]
    %v429 = vld [vmem:[#allocation5 + $0x20] sm:$0xff]
    %v430 = vld [vmem:[#allocation5 + $0x28] sm:$0xff]
    %v431 = vld [vmem:[#allocation5 + $0x30] sm:$0xff]
    %v432 = vld [vmem:[#allocation5 + $0x38] sm:$0xff]
    %v433 = vld [vmem:[#allocation5 + $0x40] sm:$0xff]
    %v434 = vld [vmem:[#allocation5 + $0x48] sm:$0xff]
    %v435 = vld [vmem:[#allocation5 + $0x50] sm:$0xff]
    %v436 = vld [vmem:[#allocation5 + $0x58] sm:$0xff]
    %v437 = vld [vmem:[#allocation5 + $0x60] sm:$0xff]
    %v438 = vld [vmem:[#allocation5 + $0x68] sm:$0xff]
    %v439 = vld [vmem:[#allocation5 + $0x70] sm:$0xff]
    %v440 = vld [vmem:[#allocation5 + $0x78] sm:$0xff]
    %v441 = vld [vmem:[#allocation5 + $0x80] sm:$0xff]
    %v442 = vld [vmem:[#allocation5 + $0x88] sm:$0xff]
    %v443 = vld [vmem:[#allocation5 + $0x90] sm:$0xff]
    %v444 = vld [vmem:[#allocation5 + $0x98] sm:$0xff]
    %v445 = vld [vmem:[#allocation5 + $0xa0] sm:$0xff]
    %v446 = vld [vmem:[#allocation5 + $0xa8] sm:$0xff]
    %v447 = vld [vmem:[#allocation5 + $0xb0] sm:$0xff]
    %v448 = vld [vmem:[#allocation5 + $0xb8] sm:$0xff]
    %v449 = vld [vmem:[#allocation5 + $0xc0] sm:$0xff]
    %v450 = vld [vmem:[#allocation5 + $0xc8] sm:$0xff]
    %v451 = vld [vmem:[#allocation5 + $0xd0] sm:$0xff]
    %v452 = vld [vmem:[#allocation5 + $0xd8] sm:$0xff]
    %v453 = vld [vmem:[#allocation5 + $0xe0] sm:$0xff]
    %v454 = vld [vmem:[#allocation5 + $0xe8] sm:$0xff]
    %v455 = vld [vmem:[#allocation5 + $0xf0] sm:$0xff]
    %v456 = vld [vmem:[#allocation5 + $0xf8] sm:$0xff]
    %v461 = vunpack.c.l.b16 %v421
    %v462 = vunpack.c.l.b16 %v422
    %v463 = vunpack.c.l.b16 %v423
    %v464 = vunpack.c.l.b16 %v424
    %v465 = vsel %vm157, %v463, %v461
    %v466 = vsel %vm157, %v464, %v462
    %v467 = vpack.c.b16 %v465, %v465
    %v468 = vpack.c.b16 %v466, %v466
    %v503 = vunpack.c.l.b16 %v425
    %v504 = vunpack.c.h.b16 %v425
    %v505 = vunpack.c.l.b16 %v426
    %v506 = vunpack.c.h.b16 %v426
    %v507 = vunpack.c.l.b16 %v427
    %v508 = vunpack.c.h.b16 %v427
    %v509 = vunpack.c.l.b16 %v428
    %v510 = vunpack.c.h.b16 %v428
    %v511 = vunpack.c.l.b16 %v429
    %v512 = vunpack.c.h.b16 %v429
    %v513 = vunpack.c.l.b16 %v430
    %v514 = vunpack.c.h.b16 %v430
    %v515 = vunpack.c.l.b16 %v431
    %v516 = vunpack.c.h.b16 %v431
    %v517 = vunpack.c.l.b16 %v432
    %v518 = vunpack.c.h.b16 %v432
    %v519 = vunpack.c.l.b16 %v433
    %v520 = vunpack.c.h.b16 %v433
    %v521 = vunpack.c.l.b16 %v434
    %v522 = vunpack.c.h.b16 %v434
    %v523 = vunpack.c.l.b16 %v435
    %v524 = vunpack.c.h.b16 %v435
    %v525 = vunpack.c.l.b16 %v436
    %v526 = vunpack.c.h.b16 %v436
    %v527 = vunpack.c.l.b16 %v437
    %v528 = vunpack.c.h.b16 %v437
    %v529 = vunpack.c.l.b16 %v438
    %v530 = vunpack.c.h.b16 %v438
    %v531 = vunpack.c.l.b16 %v439
    %v532 = vunpack.c.h.b16 %v439
    %v533 = vunpack.c.l.b16 %v440
    %v534 = vunpack.c.h.b16 %v440
    %v535 = vunpack.c.l.b16 %v441
    %v536 = vunpack.c.h.b16 %v441
    %v537 = vunpack.c.l.b16 %v442
    %v538 = vunpack.c.h.b16 %v442
    %v539 = vunpack.c.l.b16 %v443
    %v540 = vunpack.c.h.b16 %v443
    %v541 = vunpack.c.l.b16 %v444
    %v542 = vunpack.c.h.b16 %v444
    %v543 = vunpack.c.l.b16 %v445
    %v544 = vunpack.c.h.b16 %v445
    %v545 = vunpack.c.l.b16 %v446
    %v546 = vunpack.c.h.b16 %v446
    %v547 = vunpack.c.l.b16 %v447
    %v548 = vunpack.c.h.b16 %v447
    %v549 = vunpack.c.l.b16 %v448
    %v550 = vunpack.c.h.b16 %v448
    %v551 = vunpack.c.l.b16 %v449
    %v552 = vunpack.c.h.b16 %v449
    %v553 = vunpack.c.l.b16 %v450
    %v554 = vunpack.c.h.b16 %v450
    %v555 = vunpack.c.l.b16 %v451
    %v556 = vunpack.c.h.b16 %v451
    %v557 = vunpack.c.l.b16 %v452
    %v558 = vunpack.c.h.b16 %v452
    %v559 = vunpack.c.l.b16 %v453
    %v560 = vunpack.c.h.b16 %v453
    %v561 = vunpack.c.l.b16 %v454
    %v562 = vunpack.c.h.b16 %v454
    %v563 = vunpack.c.l.b16 %v455
    %v564 = vunpack.c.h.b16 %v455
    %v565 = vunpack.c.l.b16 %v456
    %v566 = vunpack.c.h.b16 %v456
    %v567 = vpack.c.b16 %v505, %v503
    %v568 = vpack.c.b16 %v506, %v504
    %v569 = vpack.c.b16 %v509, %v507
    %v570 = vpack.c.b16 %v510, %v508
    %v571 = vpack.c.b16 %v513, %v511
    %v572 = vpack.c.b16 %v514, %v512
    %v573 = vpack.c.b16 %v517, %v515
    %v574 = vpack.c.b16 %v518, %v516
    %v575 = vpack.c.b16 %v521, %v519
    %v576 = vpack.c.b16 %v522, %v520
    %v577 = vpack.c.b16 %v525, %v523
    %v578 = vpack.c.b16 %v526, %v524
    %v579 = vpack.c.b16 %v529, %v527
    %v580 = vpack.c.b16 %v530, %v528
    %v581 = vpack.c.b16 %v533, %v531
    %v582 = vpack.c.b16 %v534, %v532
    %v583 = vpack.c.b16 %v537, %v535
    %v584 = vpack.c.b16 %v538, %v536
    %v585 = vpack.c.b16 %v541, %v539
    %v586 = vpack.c.b16 %v542, %v540
    %v587 = vpack.c.b16 %v545, %v543
    %v588 = vpack.c.b16 %v546, %v544
    %v589 = vpack.c.b16 %v549, %v547
    %v590 = vpack.c.b16 %v550, %v548
    %v591 = vpack.c.b16 %v553, %v551
    %v592 = vpack.c.b16 %v554, %v552
    %v593 = vpack.c.b16 %v557, %v555
    %v594 = vpack.c.b16 %v558, %v556
    %v595 = vpack.c.b16 %v561, %v559
    %v596 = vpack.c.b16 %v562, %v560
    %v597 = vpack.c.b16 %v565, %v563
    %v598 = vpack.c.b16 %v566, %v564
    %631 = vmatprep.subr.bf16.mxu0 %v568
    %632 = vmatpush1.bf16.msra.mxu0 %v567
    %633 = vmatprep.subr.bf16.mxu0 %v570
    %634 = vmatpush1.bf16.msra.mxu0 %v569
    %635 = vmatprep.subr.bf16.mxu0 %v572
    %636 = vmatpush1.bf16.msra.mxu0 %v571
    %637 = vmatprep.subr.bf16.mxu0 %v574
    %638 = vmatpush1.bf16.msra.mxu0 %v573
    %639 = vmatprep.subr.bf16.mxu0 %v576
    %640 = vmatpush1.bf16.msra.mxu0 %v575
    %641 = vmatprep.subr.bf16.mxu0 %v578
    %642 = vmatpush1.bf16.msra.mxu0 %v577
    %643 = vmatprep.subr.bf16.mxu0 %v580
    %644 = vmatpush1.bf16.msra.mxu0 %v579
    %645 = vmatprep.subr.bf16.mxu0 %v582
    %646 = vmatpush1.bf16.msra.mxu0 %v581
    %647 = vmatprep.subr.bf16.mxu0 %v584
    %648 = vmatpush1.bf16.msra.mxu0 %v583
    %649 = vmatprep.subr.bf16.mxu0 %v586
    %650 = vmatpush1.bf16.msra.mxu0 %v585
    %651 = vmatprep.subr.bf16.mxu0 %v588
    %652 = vmatpush1.bf16.msra.mxu0 %v587
    %653 = vmatprep.subr.bf16.mxu0 %v590
    %654 = vmatpush1.bf16.msra.mxu0 %v589
    %655 = vmatprep.subr.bf16.mxu0 %v592
    %656 = vmatpush1.bf16.msra.mxu0 %v591
    %657 = vmatprep.subr.bf16.mxu0 %v594
    %658 = vmatpush1.bf16.msra.mxu0 %v593
    %659 = vmatprep.subr.bf16.mxu0 %v596
    %660 = vmatpush1.bf16.msra.mxu0 %v595
    %661 = vmatprep.subr.bf16.mxu0 %v598
    %662 = vmatpush1.bf16.msra.mxu0 %v597
    %663 = vmatprep.mubr.bf16.mxu0 %v468
    %664 = vmatmul.mubr.bf16.gmra.mrb[0].mxu0 %v467
    %v665 = vpop.f32.mrb[0].mxu0
    %v666 = vadd.f32 0.0, %v665
    %v667 = vpop.f32.mrb[0].mxu0
    %v668 = vadd.f32 0.0, %v667
    %v669 = vpop.f32.mrb[0].mxu0
    %v670 = vpop.f32.mrb[0].mxu0
    %671 = vdwg.mxu0
    %v676 = vunpack.c.l.b16 %v385
    %v677 = vunpack.c.l.b16 %v386
    %v678 = vunpack.c.l.b16 %v387
    %v679 = vunpack.c.l.b16 %v388
    %v680 = vsel %vm157, %v678, %v676
    %v681 = vsel %vm157, %v679, %v677
    %v682 = vpack.c.b16 %v680, %v680
    %v683 = vpack.c.b16 %v681, %v681
    %v718 = vunpack.c.l.b16 %v389
    %v719 = vunpack.c.h.b16 %v389
    %v720 = vunpack.c.l.b16 %v390
    %v721 = vunpack.c.h.b16 %v390
    %v722 = vunpack.c.l.b16 %v391
    %v723 = vunpack.c.h.b16 %v391
    %v724 = vunpack.c.l.b16 %v392
    %v725 = vunpack.c.h.b16 %v392
    %v726 = vunpack.c.l.b16 %v393
    %v727 = vunpack.c.h.b16 %v393
    %v728 = vunpack.c.l.b16 %v394
    %v729 = vunpack.c.h.b16 %v394
    %v730 = vunpack.c.l.b16 %v395
    %v731 = vunpack.c.h.b16 %v395
    %v732 = vunpack.c.l.b16 %v396
    %v733 = vunpack.c.h.b16 %v396
    %v734 = vunpack.c.l.b16 %v397
    %v735 = vunpack.c.h.b16 %v397
    %v736 = vunpack.c.l.b16 %v398
    %v737 = vunpack.c.h.b16 %v398
    %v738 = vunpack.c.l.b16 %v399
    %v739 = vunpack.c.h.b16 %v399
    %v740 = vunpack.c.l.b16 %v400
    %v741 = vunpack.c.h.b16 %v400
    %v742 = vunpack.c.l.b16 %v401
    %v743 = vunpack.c.h.b16 %v401
    %v744 = vunpack.c.l.b16 %v402
    %v745 = vunpack.c.h.b16 %v402
    %v746 = vunpack.c.l.b16 %v403
    %v747 = vunpack.c.h.b16 %v403
    %v748 = vunpack.c.l.b16 %v404
    %v749 = vunpack.c.h.b16 %v404
    %v750 = vunpack.c.l.b16 %v405
    %v751 = vunpack.c.h.b16 %v405
    %v752 = vunpack.c.l.b16 %v406
    %v753 = vunpack.c.h.b16 %v406
    %v754 = vunpack.c.l.b16 %v407
    %v755 = vunpack.c.h.b16 %v407
    %v756 = vunpack.c.l.b16 %v408
    %v757 = vunpack.c.h.b16 %v408
    %v758 = vunpack.c.l.b16 %v409
    %v759 = vunpack.c.h.b16 %v409
    %v760 = vunpack.c.l.b16 %v410
    %v761 = vunpack.c.h.b16 %v410
    %v762 = vunpack.c.l.b16 %v411
    %v763 = vunpack.c.h.b16 %v411
    %v764 = vunpack.c.l.b16 %v412
    %v765 = vunpack.c.h.b16 %v412
    %v766 = vunpack.c.l.b16 %v413
    %v767 = vunpack.c.h.b16 %v413
    %v768 = vunpack.c.l.b16 %v414
    %v769 = vunpack.c.h.b16 %v414
    %v770 = vunpack.c.l.b16 %v415
    %v771 = vunpack.c.h.b16 %v415
    %v772 = vunpack.c.l.b16 %v416
    %v773 = vunpack.c.h.b16 %v416
    %v774 = vunpack.c.l.b16 %v417
    %v775 = vunpack.c.h.b16 %v417
    %v776 = vunpack.c.l.b16 %v418
    %v777 = vunpack.c.h.b16 %v418
    %v778 = vunpack.c.l.b16 %v419
    %v779 = vunpack.c.h.b16 %v419
    %v780 = vunpack.c.l.b16 %v420
    %v781 = vunpack.c.h.b16 %v420
    %v782 = vpack.c.b16 %v720, %v718
    %v783 = vpack.c.b16 %v721, %v719
    %v784 = vpack.c.b16 %v724, %v722
    %v785 = vpack.c.b16 %v725, %v723
    %v786 = vpack.c.b16 %v728, %v726
    %v787 = vpack.c.b16 %v729, %v727
    %v788 = vpack.c.b16 %v732, %v730
    %v789 = vpack.c.b16 %v733, %v731
    %v790 = vpack.c.b16 %v736, %v734
    %v791 = vpack.c.b16 %v737, %v735
    %v792 = vpack.c.b16 %v740, %v738
    %v793 = vpack.c.b16 %v741, %v739
    %v794 = vpack.c.b16 %v744, %v742
    %v795 = vpack.c.b16 %v745, %v743
    %v796 = vpack.c.b16 %v748, %v746
    %v797 = vpack.c.b16 %v749, %v747
    %v798 = vpack.c.b16 %v752, %v750
    %v799 = vpack.c.b16 %v753, %v751
    %v800 = vpack.c.b16 %v756, %v754
    %v801 = vpack.c.b16 %v757, %v755
    %v802 = vpack.c.b16 %v760, %v758
    %v803 = vpack.c.b16 %v761, %v759
    %v804 = vpack.c.b16 %v764, %v762
    %v805 = vpack.c.b16 %v765, %v763
    %v806 = vpack.c.b16 %v768, %v766
    %v807 = vpack.c.b16 %v769, %v767
    %v808 = vpack.c.b16 %v772, %v770
    %v809 = vpack.c.b16 %v773, %v771
    %v810 = vpack.c.b16 %v776, %v774
    %v811 = vpack.c.b16 %v777, %v775
    %v812 = vpack.c.b16 %v780, %v778
    %v813 = vpack.c.b16 %v781, %v779
    %846 = vmatprep.subr.bf16.mxu0 %v783
    %847 = vmatpush1.bf16.msra.mxu0 %v782
    %848 = vmatprep.subr.bf16.mxu0 %v785
    %849 = vmatpush1.bf16.msra.mxu0 %v784
    %850 = vmatprep.subr.bf16.mxu0 %v787
    %851 = vmatpush1.bf16.msra.mxu0 %v786
    %852 = vmatprep.subr.bf16.mxu0 %v789
    %853 = vmatpush1.bf16.msra.mxu0 %v788
    %854 = vmatprep.subr.bf16.mxu0 %v791
    %855 = vmatpush1.bf16.msra.mxu0 %v790
    %856 = vmatprep.subr.bf16.mxu0 %v793
    %857 = vmatpush1.bf16.msra.mxu0 %v792
    %858 = vmatprep.subr.bf16.mxu0 %v795
    %859 = vmatpush1.bf16.msra.mxu0 %v794
    %860 = vmatprep.subr.bf16.mxu0 %v797
    %861 = vmatpush1.bf16.msra.mxu0 %v796
    %862 = vmatprep.subr.bf16.mxu0 %v799
    %863 = vmatpush1.bf16.msra.mxu0 %v798
    %864 = vmatprep.subr.bf16.mxu0 %v801
    %865 = vmatpush1.bf16.msra.mxu0 %v800
    %866 = vmatprep.subr.bf16.mxu0 %v803
    %867 = vmatpush1.bf16.msra.mxu0 %v802
    %868 = vmatprep.subr.bf16.mxu0 %v805
    %869 = vmatpush1.bf16.msra.mxu0 %v804
    %870 = vmatprep.subr.bf16.mxu0 %v807
    %871 = vmatpush1.bf16.msra.mxu0 %v806
    %872 = vmatprep.subr.bf16.mxu0 %v809
    %873 = vmatpush1.bf16.msra.mxu0 %v808
    %874 = vmatprep.subr.bf16.mxu0 %v811
    %875 = vmatpush1.bf16.msra.mxu0 %v810
    %876 = vmatprep.subr.bf16.mxu0 %v813
    %877 = vmatpush1.bf16.msra.mxu0 %v812
    %878 = vmatprep.mubr.bf16.mxu0 %v683
    %879 = vmatmul.mubr.bf16.gmra.mrb[0].mxu0 %v682
    %v880 = vpop.f32.mrb[0].mxu0
    %v881 = vadd.f32 %v666, %v880
    %v882 = vpop.f32.mrb[0].mxu0
    %v883 = vadd.f32 %v668, %v882
    %v884 = vpop.f32.mrb[0].mxu0
    %v885 = vpop.f32.mrb[0].mxu0
    %886 = vdwg.mxu0
    %s887 = sld [smem:[#allocation11]]
    %v888 = vstv %s887
    %v889 = vadd.f32 %v881, %v888
    %v890 = vadd.f32 %v883, %v888
    %v891 = vxor.u32 %v889, 2147483648
    %v892 = vxor.u32 %v890, 2147483648
    %v893 = vmul.f32 %v891, 1.442695
    %v894 = vpow.pop %v893
    %v895 = vmul.f32 %v892, 1.442695
    %v896 = vpow.pop %v895
    %v897 = vadd.f32 %v894, 1.0
    %v898 = vadd.f32 %v896, 1.0
    %v899 = vrcp.pop %v897
    %v900 = vmul.f32 1.0, %v899
    %v901 = vrcp.pop %v898
    %v902 = vmul.f32 1.0, %v901
    %v907 = vsel %vm157, %v345, %v331
    %v908 = vsel %vm157, %v352, %v338
    %v911 = vmul.f32 %v900, %v907
    %v912 = vmul.f32 %v902, %v908
    %v917 = vsel %vm157, %v383, %v381
    %v918 = vsel %vm157, %v384, %v382
    %v921 = vmul.f32 %v900, %v917
    %v922 = vmul.f32 %v902, %v918
    %v923 = vpack.c.bf16 %v911, %v911
    %v924 = vpack.c.bf16 %v912, %v912
    %v925 = vld [vmem:[#allocation7] sm:$0xff]
    %v926 = vld [vmem:[#allocation7 + $0x8] sm:$0xff]
    %v927 = vld [vmem:[#allocation7 + $0x10] sm:$0xff]
    %v928 = vld [vmem:[#allocation7 + $0x18] sm:$0xff]
    %v929 = vld [vmem:[#allocation7 + $0x20] sm:$0xff]
    %v930 = vld [vmem:[#allocation7 + $0x28] sm:$0xff]
    %v931 = vld [vmem:[#allocation7 + $0x30] sm:$0xff]
    %v932 = vld [vmem:[#allocation7 + $0x38] sm:$0xff]
    %v933 = vld [vmem:[#allocation7 + $0x40] sm:$0xff]
    %v934 = vld [vmem:[#allocation7 + $0x48] sm:$0xff]
    %v935 = vld [vmem:[#allocation7 + $0x50] sm:$0xff]
    %v936 = vld [vmem:[#allocation7 + $0x58] sm:$0xff]
    %v937 = vld [vmem:[#allocation7 + $0x60] sm:$0xff]
    %v938 = vld [vmem:[#allocation7 + $0x68] sm:$0xff]
    %v939 = vld [vmem:[#allocation7 + $0x70] sm:$0xff]
    %v940 = vld [vmem:[#allocation7 + $0x78] sm:$0xff]
    %v941 = vld [vmem:[#allocation7 + $0x80] sm:$0xff]
    %v942 = vld [vmem:[#allocation7 + $0x88] sm:$0xff]
    %v943 = vld [vmem:[#allocation7 + $0x90] sm:$0xff]
    %v944 = vld [vmem:[#allocation7 + $0x98] sm:$0xff]
    %v945 = vld [vmem:[#allocation7 + $0xa0] sm:$0xff]
    %v946 = vld [vmem:[#allocation7 + $0xa8] sm:$0xff]
    %v947 = vld [vmem:[#allocation7 + $0xb0] sm:$0xff]
    %v948 = vld [vmem:[#allocation7 + $0xb8] sm:$0xff]
    %v949 = vld [vmem:[#allocation7 + $0xc0] sm:$0xff]
    %v950 = vld [vmem:[#allocation7 + $0xc8] sm:$0xff]
    %v951 = vld [vmem:[#allocation7 + $0xd0] sm:$0xff]
    %v952 = vld [vmem:[#allocation7 + $0xd8] sm:$0xff]
    %v953 = vld [vmem:[#allocation7 + $0xe0] sm:$0xff]
    %v954 = vld [vmem:[#allocation7 + $0xe8] sm:$0xff]
    %v955 = vld [vmem:[#allocation7 + $0xf0] sm:$0xff]
    %v956 = vld [vmem:[#allocation7 + $0xf8] sm:$0xff]
    %v957 = vpack.c.bf16 %v921, %v921
    %v958 = vpack.c.bf16 %v922, %v922
    %v959 = vld [vmem:[#allocation8] sm:$0xff]
    %v960 = vld [vmem:[#allocation8 + $0x8] sm:$0xff]
    %v961 = vld [vmem:[#allocation8 + $0x10] sm:$0xff]
    %v962 = vld [vmem:[#allocation8 + $0x18] sm:$0xff]
    %v963 = vld [vmem:[#allocation8 + $0x20] sm:$0xff]
    %v964 = vld [vmem:[#allocation8 + $0x28] sm:$0xff]
    %v965 = vld [vmem:[#allocation8 + $0x30] sm:$0xff]
    %v966 = vld [vmem:[#allocation8 + $0x38] sm:$0xff]
    %v967 = vld [vmem:[#allocation8 + $0x40] sm:$0xff]
    %v968 = vld [vmem:[#allocation8 + $0x48] sm:$0xff]
    %v969 = vld [vmem:[#allocation8 + $0x50] sm:$0xff]
    %v970 = vld [vmem:[#allocation8 + $0x58] sm:$0xff]
    %v971 = vld [vmem:[#allocation8 + $0x60] sm:$0xff]
    %v972 = vld [vmem:[#allocation8 + $0x68] sm:$0xff]
    %v973 = vld [vmem:[#allocation8 + $0x70] sm:$0xff]
    %v974 = vld [vmem:[#allocation8 + $0x78] sm:$0xff]
    %v975 = vld [vmem:[#allocation8 + $0x80] sm:$0xff]
    %v976 = vld [vmem:[#allocation8 + $0x88] sm:$0xff]
    %v977 = vld [vmem:[#allocation8 + $0x90] sm:$0xff]
    %v978 = vld [vmem:[#allocation8 + $0x98] sm:$0xff]
    %v979 = vld [vmem:[#allocation8 + $0xa0] sm:$0xff]
    %v980 = vld [vmem:[#allocation8 + $0xa8] sm:$0xff]
    %v981 = vld [vmem:[#allocation8 + $0xb0] sm:$0xff]
    %v982 = vld [vmem:[#allocation8 + $0xb8] sm:$0xff]
    %v983 = vld [vmem:[#allocation8 + $0xc0] sm:$0xff]
    %v984 = vld [vmem:[#allocation8 + $0xc8] sm:$0xff]
    %v985 = vld [vmem:[#allocation8 + $0xd0] sm:$0xff]
    %v986 = vld [vmem:[#allocation8 + $0xd8] sm:$0xff]
    %v987 = vld [vmem:[#allocation8 + $0xe0] sm:$0xff]
    %v988 = vld [vmem:[#allocation8 + $0xe8] sm:$0xff]
    %v989 = vld [vmem:[#allocation8 + $0xf0] sm:$0xff]
    %v990 = vld [vmem:[#allocation8 + $0xf8] sm:$0xff]
    %v1023 = vunpack.c.l.b16 %v959
    %v1024 = vunpack.c.h.b16 %v959
    %v1025 = vunpack.c.l.b16 %v960
    %v1026 = vunpack.c.h.b16 %v960
    %v1027 = vunpack.c.l.b16 %v961
    %v1028 = vunpack.c.h.b16 %v961
    %v1029 = vunpack.c.l.b16 %v962
    %v1030 = vunpack.c.h.b16 %v962
    %v1031 = vunpack.c.l.b16 %v963
    %v1032 = vunpack.c.h.b16 %v963
    %v1033 = vunpack.c.l.b16 %v964
    %v1034 = vunpack.c.h.b16 %v964
    %v1035 = vunpack.c.l.b16 %v965
    %v1036 = vunpack.c.h.b16 %v965
    %v1037 = vunpack.c.l.b16 %v966
    %v1038 = vunpack.c.h.b16 %v966
    %v1039 = vunpack.c.l.b16 %v967
    %v1040 = vunpack.c.h.b16 %v967
    %v1041 = vunpack.c.l.b16 %v968
    %v1042 = vunpack.c.h.b16 %v968
    %v1043 = vunpack.c.l.b16 %v969
    %v1044 = vunpack.c.h.b16 %v969
    %v1045 = vunpack.c.l.b16 %v970
    %v1046 = vunpack.c.h.b16 %v970
    %v1047 = vunpack.c.l.b16 %v971
    %v1048 = vunpack.c.h.b16 %v971
    %v1049 = vunpack.c.l.b16 %v972
    %v1050 = vunpack.c.h.b16 %v972
    %v1051 = vunpack.c.l.b16 %v973
    %v1052 = vunpack.c.h.b16 %v973
    %v1053 = vunpack.c.l.b16 %v974
    %v1054 = vunpack.c.h.b16 %v974
    %v1055 = vunpack.c.l.b16 %v975
    %v1056 = vunpack.c.h.b16 %v975
    %v1057 = vunpack.c.l.b16 %v976
    %v1058 = vunpack.c.h.b16 %v976
    %v1059 = vunpack.c.l.b16 %v977
    %v1060 = vunpack.c.h.b16 %v977
    %v1061 = vunpack.c.l.b16 %v978
    %v1062 = vunpack.c.h.b16 %v978
    %v1063 = vunpack.c.l.b16 %v979
    %v1064 = vunpack.c.h.b16 %v979
    %v1065 = vunpack.c.l.b16 %v980
    %v1066 = vunpack.c.h.b16 %v980
    %v1067 = vunpack.c.l.b16 %v981
    %v1068 = vunpack.c.h.b16 %v981
    %v1069 = vunpack.c.l.b16 %v982
    %v1070 = vunpack.c.h.b16 %v982
    %v1071 = vunpack.c.l.b16 %v983
    %v1072 = vunpack.c.h.b16 %v983
    %v1073 = vunpack.c.l.b16 %v984
    %v1074 = vunpack.c.h.b16 %v984
    %v1075 = vunpack.c.l.b16 %v985
    %v1076 = vunpack.c.h.b16 %v985
    %v1077 = vunpack.c.l.b16 %v986
    %v1078 = vunpack.c.h.b16 %v986
    %v1079 = vunpack.c.l.b16 %v987
    %v1080 = vunpack.c.h.b16 %v987
    %v1081 = vunpack.c.l.b16 %v988
    %v1082 = vunpack.c.h.b16 %v988
    %v1083 = vunpack.c.l.b16 %v989
    %v1084 = vunpack.c.h.b16 %v989
    %v1085 = vunpack.c.l.b16 %v990
    %v1086 = vunpack.c.h.b16 %v990
    %v1087 = vpack.c.b16 %v1025, %v1023
    %v1088 = vpack.c.b16 %v1026, %v1024
    %v1089 = vpack.c.b16 %v1029, %v1027
    %v1090 = vpack.c.b16 %v1030, %v1028
    %v1091 = vpack.c.b16 %v1033, %v1031
    %v1092 = vpack.c.b16 %v1034, %v1032
    %v1093 = vpack.c.b16 %v1037, %v1035
    %v1094 = vpack.c.b16 %v1038, %v1036
    %v1095 = vpack.c.b16 %v1041, %v1039
    %v1096 = vpack.c.b16 %v1042, %v1040
    %v1097 = vpack.c.b16 %v1045, %v1043
    %v1098 = vpack.c.b16 %v1046, %v1044
    %v1099 = vpack.c.b16 %v1049, %v1047
    %v1100 = vpack.c.b16 %v1050, %v1048
    %v1101 = vpack.c.b16 %v1053, %v1051
    %v1102 = vpack.c.b16 %v1054, %v1052
    %v1103 = vpack.c.b16 %v1057, %v1055
    %v1104 = vpack.c.b16 %v1058, %v1056
    %v1105 = vpack.c.b16 %v1061, %v1059
    %v1106 = vpack.c.b16 %v1062, %v1060
    %v1107 = vpack.c.b16 %v1065, %v1063
    %v1108 = vpack.c.b16 %v1066, %v1064
    %v1109 = vpack.c.b16 %v1069, %v1067
    %v1110 = vpack.c.b16 %v1070, %v1068
    %v1111 = vpack.c.b16 %v1073, %v1071
    %v1112 = vpack.c.b16 %v1074, %v1072
    %v1113 = vpack.c.b16 %v1077, %v1075
    %v1114 = vpack.c.b16 %v1078, %v1076
    %v1115 = vpack.c.b16 %v1081, %v1079
    %v1116 = vpack.c.b16 %v1082, %v1080
    %v1117 = vpack.c.b16 %v1085, %v1083
    %v1118 = vpack.c.b16 %v1086, %v1084
    %1151 = vmatprep.subr.bf16.mxu0 %v1088
    %1152 = vmatpush1.bf16.msra.mxu0 %v1087
    %1153 = vmatprep.subr.bf16.mxu0 %v1090
    %1154 = vmatpush1.bf16.msra.mxu0 %v1089
    %1155 = vmatprep.subr.bf16.mxu0 %v1092
    %1156 = vmatpush1.bf16.msra.mxu0 %v1091
    %1157 = vmatprep.subr.bf16.mxu0 %v1094
    %1158 = vmatpush1.bf16.msra.mxu0 %v1093
    %1159 = vmatprep.subr.bf16.mxu0 %v1096
    %1160 = vmatpush1.bf16.msra.mxu0 %v1095
    %1161 = vmatprep.subr.bf16.mxu0 %v1098
    %1162 = vmatpush1.bf16.msra.mxu0 %v1097
    %1163 = vmatprep.subr.bf16.mxu0 %v1100
    %1164 = vmatpush1.bf16.msra.mxu0 %v1099
    %1165 = vmatprep.subr.bf16.mxu0 %v1102
    %1166 = vmatpush1.bf16.msra.mxu0 %v1101
    %1167 = vmatprep.subr.bf16.mxu0 %v1104
    %1168 = vmatpush1.bf16.msra.mxu0 %v1103
    %1169 = vmatprep.subr.bf16.mxu0 %v1106
    %1170 = vmatpush1.bf16.msra.mxu0 %v1105
    %1171 = vmatprep.subr.bf16.mxu0 %v1108
    %1172 = vmatpush1.bf16.msra.mxu0 %v1107
    %1173 = vmatprep.subr.bf16.mxu0 %v1110
    %1174 = vmatpush1.bf16.msra.mxu0 %v1109
    %1175 = vmatprep.subr.bf16.mxu0 %v1112
    %1176 = vmatpush1.bf16.msra.mxu0 %v1111
    %1177 = vmatprep.subr.bf16.mxu0 %v1114
    %1178 = vmatpush1.bf16.msra.mxu0 %v1113
    %1179 = vmatprep.subr.bf16.mxu0 %v1116
    %1180 = vmatpush1.bf16.msra.mxu0 %v1115
    %1181 = vmatprep.subr.bf16.mxu0 %v1118
    %1182 = vmatpush1.bf16.msra.mxu0 %v1117
    %1183 = vmatprep.mubr.bf16.mxu0 %v958
    %1184 = vmatmul.mubr.bf16.gmra.mrb[0].mxu0 %v957
    %v1185 = vpop.f32.mrb[0].mxu0
    %v1186 = vadd.f32 0.0, %v1185
    %v1187 = vpop.f32.mrb[0].mxu0
    %v1188 = vadd.f32 0.0, %v1187
    %v1189 = vpop.f32.mrb[0].mxu0
    %v1190 = vpop.f32.mrb[0].mxu0
    %1191 = vdwg.mxu0
    %v1224 = vunpack.c.l.b16 %v925
    %v1225 = vunpack.c.h.b16 %v925
    %v1226 = vunpack.c.l.b16 %v926
    %v1227 = vunpack.c.h.b16 %v926
    %v1228 = vunpack.c.l.b16 %v927
    %v1229 = vunpack.c.h.b16 %v927
    %v1230 = vunpack.c.l.b16 %v928
    %v1231 = vunpack.c.h.b16 %v928
    %v1232 = vunpack.c.l.b16 %v929
    %v1233 = vunpack.c.h.b16 %v929
    %v1234 = vunpack.c.l.b16 %v930
    %v1235 = vunpack.c.h.b16 %v930
    %v1236 = vunpack.c.l.b16 %v931
    %v1237 = vunpack.c.h.b16 %v931
    %v1238 = vunpack.c.l.b16 %v932
    %v1239 = vunpack.c.h.b16 %v932
    %v1240 = vunpack.c.l.b16 %v933
    %v1241 = vunpack.c.h.b16 %v933
    %v1242 = vunpack.c.l.b16 %v934
    %v1243 = vunpack.c.h.b16 %v934
    %v1244 = vunpack.c.l.b16 %v935
    %v1245 = vunpack.c.h.b16 %v935
    %v1246 = vunpack.c.l.b16 %v936
    %v1247 = vunpack.c.h.b16 %v936
    %v1248 = vunpack.c.l.b16 %v937
    %v1249 = vunpack.c.h.b16 %v937
    %v1250 = vunpack.c.l.b16 %v938
    %v1251 = vunpack.c.h.b16 %v938
    %v1252 = vunpack.c.l.b16 %v939
    %v1253 = vunpack.c.h.b16 %v939
    %v1254 = vunpack.c.l.b16 %v940
    %v1255 = vunpack.c.h.b16 %v940
    %v1256 = vunpack.c.l.b16 %v941
    %v1257 = vunpack.c.h.b16 %v941
    %v1258 = vunpack.c.l.b16 %v942
    %v1259 = vunpack.c.h.b16 %v942
    %v1260 = vunpack.c.l.b16 %v943
    %v1261 = vunpack.c.h.b16 %v943
    %v1262 = vunpack.c.l.b16 %v944
    %v1263 = vunpack.c.h.b16 %v944
    %v1264 = vunpack.c.l.b16 %v945
    %v1265 = vunpack.c.h.b16 %v945
    %v1266 = vunpack.c.l.b16 %v946
    %v1267 = vunpack.c.h.b16 %v946
    %v1268 = vunpack.c.l.b16 %v947
    %v1269 = vunpack.c.h.b16 %v947
    %v1270 = vunpack.c.l.b16 %v948
    %v1271 = vunpack.c.h.b16 %v948
    %v1272 = vunpack.c.l.b16 %v949
    %v1273 = vunpack.c.h.b16 %v949
    %v1274 = vunpack.c.l.b16 %v950
    %v1275 = vunpack.c.h.b16 %v950
    %v1276 = vunpack.c.l.b16 %v951
    %v1277 = vunpack.c.h.b16 %v951
    %v1278 = vunpack.c.l.b16 %v952
    %v1279 = vunpack.c.h.b16 %v952
    %v1280 = vunpack.c.l.b16 %v953
    %v1281 = vunpack.c.h.b16 %v953
    %v1282 = vunpack.c.l.b16 %v954
    %v1283 = vunpack.c.h.b16 %v954
    %v1284 = vunpack.c.l.b16 %v955
    %v1285 = vunpack.c.h.b16 %v955
    %v1286 = vunpack.c.l.b16 %v956
    %v1287 = vunpack.c.h.b16 %v956
    %v1288 = vpack.c.b16 %v1226, %v1224
    %v1289 = vpack.c.b16 %v1227, %v1225
    %v1290 = vpack.c.b16 %v1230, %v1228
    %v1291 = vpack.c.b16 %v1231, %v1229
    %v1292 = vpack.c.b16 %v1234, %v1232
    %v1293 = vpack.c.b16 %v1235, %v1233
    %v1294 = vpack.c.b16 %v1238, %v1236
    %v1295 = vpack.c.b16 %v1239, %v1237
    %v1296 = vpack.c.b16 %v1242, %v1240
    %v1297 = vpack.c.b16 %v1243, %v1241
    %v1298 = vpack.c.b16 %v1246, %v1244
    %v1299 = vpack.c.b16 %v1247, %v1245
    %v1300 = vpack.c.b16 %v1250, %v1248
    %v1301 = vpack.c.b16 %v1251, %v1249
    %v1302 = vpack.c.b16 %v1254, %v1252
    %v1303 = vpack.c.b16 %v1255, %v1253
    %v1304 = vpack.c.b16 %v1258, %v1256
    %v1305 = vpack.c.b16 %v1259, %v1257
    %v1306 = vpack.c.b16 %v1262, %v1260
    %v1307 = vpack.c.b16 %v1263, %v1261
    %v1308 = vpack.c.b16 %v1266, %v1264
    %v1309 = vpack.c.b16 %v1267, %v1265
    %v1310 = vpack.c.b16 %v1270, %v1268
    %v1311 = vpack.c.b16 %v1271, %v1269
    %v1312 = vpack.c.b16 %v1274, %v1272
    %v1313 = vpack.c.b16 %v1275, %v1273
    %v1314 = vpack.c.b16 %v1278, %v1276
    %v1315 = vpack.c.b16 %v1279, %v1277
    %v1316 = vpack.c.b16 %v1282, %v1280
    %v1317 = vpack.c.b16 %v1283, %v1281
    %v1318 = vpack.c.b16 %v1286, %v1284
    %v1319 = vpack.c.b16 %v1287, %v1285
    %1352 = vmatprep.subr.bf16.mxu0 %v1289
    %1353 = vmatpush1.bf16.msra.mxu0 %v1288
    %1354 = vmatprep.subr.bf16.mxu0 %v1291
    %1355 = vmatpush1.bf16.msra.mxu0 %v1290
    %1356 = vmatprep.subr.bf16.mxu0 %v1293
    %1357 = vmatpush1.bf16.msra.mxu0 %v1292
    %1358 = vmatprep.subr.bf16.mxu0 %v1295
    %1359 = vmatpush1.bf16.msra.mxu0 %v1294
    %1360 = vmatprep.subr.bf16.mxu0 %v1297
    %1361 = vmatpush1.bf16.msra.mxu0 %v1296
    %1362 = vmatprep.subr.bf16.mxu0 %v1299
    %1363 = vmatpush1.bf16.msra.mxu0 %v1298
    %1364 = vmatprep.subr.bf16.mxu0 %v1301
    %1365 = vmatpush1.bf16.msra.mxu0 %v1300
    %1366 = vmatprep.subr.bf16.mxu0 %v1303
    %1367 = vmatpush1.bf16.msra.mxu0 %v1302
    %1368 = vmatprep.subr.bf16.mxu0 %v1305
    %1369 = vmatpush1.bf16.msra.mxu0 %v1304
    %1370 = vmatprep.subr.bf16.mxu0 %v1307
    %1371 = vmatpush1.bf16.msra.mxu0 %v1306
    %1372 = vmatprep.subr.bf16.mxu0 %v1309
    %1373 = vmatpush1.bf16.msra.mxu0 %v1308
    %1374 = vmatprep.subr.bf16.mxu0 %v1311
    %1375 = vmatpush1.bf16.msra.mxu0 %v1310
    %1376 = vmatprep.subr.bf16.mxu0 %v1313
    %1377 = vmatpush1.bf16.msra.mxu0 %v1312
    %1378 = vmatprep.subr.bf16.mxu0 %v1315
    %1379 = vmatpush1.bf16.msra.mxu0 %v1314
    %1380 = vmatprep.subr.bf16.mxu0 %v1317
    %1381 = vmatpush1.bf16.msra.mxu0 %v1316
    %1382 = vmatprep.subr.bf16.mxu0 %v1319
    %1383 = vmatpush1.bf16.msra.mxu0 %v1318
    %1384 = vmatprep.mubr.bf16.mxu0 %v924
    %1385 = vmatmul.mubr.bf16.gmra.mrb[0].mxu0 %v923
    %v1386 = vpop.f32.mrb[0].mxu0
    %v1387 = vadd.f32 %v1186, %v1386
    %v1388 = vpop.f32.mrb[0].mxu0
    %v1389 = vadd.f32 %v1188, %v1388
    %v1390 = vpop.f32.mrb[0].mxu0
    %v1391 = vpop.f32.mrb[0].mxu0
    %1392 = vdwg.mxu0
    %s1393 = sld [smem:[#allocation11 + $0x1]]
    %v1394 = vstv %s1393
    %v1395 = vadd.f32 %v1387, %v1394
    %v1396 = vadd.f32 %v1389, %v1394
    %v1397 = vmax.f32 %v1395, 0.0
    %v1398 = vmax.f32 %v1396, 0.0
    %v1399 = vpack.c.bf16 %v1397, %v1397
    %v1400 = vpack.c.bf16 %v1398, %v1398
    %v1401 = vld [vmem:[#allocation10] sm:$0xff]
    %v1402 = vld [vmem:[#allocation10 + $0x8] sm:$0xff]
    %v1403 = vld [vmem:[#allocation10 + $0x10] sm:$0xff]
    %v1404 = vld [vmem:[#allocation10 + $0x18] sm:$0xff]
    %v1405 = vld [vmem:[#allocation10 + $0x20] sm:$0xff]
    %v1406 = vld [vmem:[#allocation10 + $0x28] sm:$0xff]
    %v1407 = vld [vmem:[#allocation10 + $0x30] sm:$0xff]
    %v1408 = vld [vmem:[#allocation10 + $0x38] sm:$0xff]
    %v1409 = vld [vmem:[#allocation10 + $0x40] sm:$0xff]
    %v1410 = vld [vmem:[#allocation10 + $0x48] sm:$0xff]
    %v1411 = vld [vmem:[#allocation10 + $0x50] sm:$0xff]
    %v1412 = vld [vmem:[#allocation10 + $0x58] sm:$0xff]
    %v1413 = vld [vmem:[#allocation10 + $0x60] sm:$0xff]
    %v1414 = vld [vmem:[#allocation10 + $0x68] sm:$0xff]
    %v1415 = vld [vmem:[#allocation10 + $0x70] sm:$0xff]
    %v1416 = vld [vmem:[#allocation10 + $0x78] sm:$0xff]
    %v1417 = vld [vmem:[#allocation10 + $0x80] sm:$0xff]
    %v1418 = vld [vmem:[#allocation10 + $0x88] sm:$0xff]
    %v1419 = vld [vmem:[#allocation10 + $0x90] sm:$0xff]
    %v1420 = vld [vmem:[#allocation10 + $0x98] sm:$0xff]
    %v1421 = vld [vmem:[#allocation10 + $0xa0] sm:$0xff]
    %v1422 = vld [vmem:[#allocation10 + $0xa8] sm:$0xff]
    %v1423 = vld [vmem:[#allocation10 + $0xb0] sm:$0xff]
    %v1424 = vld [vmem:[#allocation10 + $0xb8] sm:$0xff]
    %v1425 = vld [vmem:[#allocation10 + $0xc0] sm:$0xff]
    %v1426 = vld [vmem:[#allocation10 + $0xc8] sm:$0xff]
    %v1427 = vld [vmem:[#allocation10 + $0xd0] sm:$0xff]
    %v1428 = vld [vmem:[#allocation10 + $0xd8] sm:$0xff]
    %v1429 = vld [vmem:[#allocation10 + $0xe0] sm:$0xff]
    %v1430 = vld [vmem:[#allocation10 + $0xe8] sm:$0xff]
    %v1431 = vld [vmem:[#allocation10 + $0xf0] sm:$0xff]
    %v1432 = vld [vmem:[#allocation10 + $0xf8] sm:$0xff]
    %s1433 = sld [smem:[#allocation11 + $0x2]]
    %v1434 = vstv %s1433
    %v1467 = vunpack.c.l.b16 %v1401
    %v1468 = vunpack.c.h.b16 %v1401
    %v1469 = vunpack.c.l.b16 %v1402
    %v1470 = vunpack.c.h.b16 %v1402
    %v1471 = vunpack.c.l.b16 %v1403
    %v1472 = vunpack.c.h.b16 %v1403
    %v1473 = vunpack.c.l.b16 %v1404
    %v1474 = vunpack.c.h.b16 %v1404
    %v1475 = vunpack.c.l.b16 %v1405
    %v1476 = vunpack.c.h.b16 %v1405
    %v1477 = vunpack.c.l.b16 %v1406
    %v1478 = vunpack.c.h.b16 %v1406
    %v1479 = vunpack.c.l.b16 %v1407
    %v1480 = vunpack.c.h.b16 %v1407
    %v1481 = vunpack.c.l.b16 %v1408
    %v1482 = vunpack.c.h.b16 %v1408
    %v1483 = vunpack.c.l.b16 %v1409
    %v1484 = vunpack.c.h.b16 %v1409
    %v1485 = vunpack.c.l.b16 %v1410
    %v1486 = vunpack.c.h.b16 %v1410
    %v1487 = vunpack.c.l.b16 %v1411
    %v1488 = vunpack.c.h.b16 %v1411
    %v1489 = vunpack.c.l.b16 %v1412
    %v1490 = vunpack.c.h.b16 %v1412
    %v1491 = vunpack.c.l.b16 %v1413
    %v1492 = vunpack.c.h.b16 %v1413
    %v1493 = vunpack.c.l.b16 %v1414
    %v1494 = vunpack.c.h.b16 %v1414
    %v1495 = vunpack.c.l.b16 %v1415
    %v1496 = vunpack.c.h.b16 %v1415
    %v1497 = vunpack.c.l.b16 %v1416
    %v1498 = vunpack.c.h.b16 %v1416
    %v1499 = vunpack.c.l.b16 %v1417
    %v1500 = vunpack.c.h.b16 %v1417
    %v1501 = vunpack.c.l.b16 %v1418
    %v1502 = vunpack.c.h.b16 %v1418
    %v1503 = vunpack.c.l.b16 %v1419
    %v1504 = vunpack.c.h.b16 %v1419
    %v1505 = vunpack.c.l.b16 %v1420
    %v1506 = vunpack.c.h.b16 %v1420
    %v1507 = vunpack.c.l.b16 %v1421
    %v1508 = vunpack.c.h.b16 %v1421
    %v1509 = vunpack.c.l.b16 %v1422
    %v1510 = vunpack.c.h.b16 %v1422
    %v1511 = vunpack.c.l.b16 %v1423
    %v1512 = vunpack.c.h.b16 %v1423
    %v1513 = vunpack.c.l.b16 %v1424
    %v1514 = vunpack.c.h.b16 %v1424
    %v1515 = vunpack.c.l.b16 %v1425
    %v1516 = vunpack.c.h.b16 %v1425
    %v1517 = vunpack.c.l.b16 %v1426
    %v1518 = vunpack.c.h.b16 %v1426
    %v1519 = vunpack.c.l.b16 %v1427
    %v1520 = vunpack.c.h.b16 %v1427
    %v1521 = vunpack.c.l.b16 %v1428
    %v1522 = vunpack.c.h.b16 %v1428
    %v1523 = vunpack.c.l.b16 %v1429
    %v1524 = vunpack.c.h.b16 %v1429
    %v1525 = vunpack.c.l.b16 %v1430
    %v1526 = vunpack.c.h.b16 %v1430
    %v1527 = vunpack.c.l.b16 %v1431
    %v1528 = vunpack.c.h.b16 %v1431
    %v1529 = vunpack.c.l.b16 %v1432
    %v1530 = vunpack.c.h.b16 %v1432
    %v1531 = vpack.c.b16 %v1469, %v1467
    %v1532 = vpack.c.b16 %v1470, %v1468
    %v1533 = vpack.c.b16 %v1473, %v1471
    %v1534 = vpack.c.b16 %v1474, %v1472
    %v1535 = vpack.c.b16 %v1477, %v1475
    %v1536 = vpack.c.b16 %v1478, %v1476
    %v1537 = vpack.c.b16 %v1481, %v1479
    %v1538 = vpack.c.b16 %v1482, %v1480
    %v1539 = vpack.c.b16 %v1485, %v1483
    %v1540 = vpack.c.b16 %v1486, %v1484
    %v1541 = vpack.c.b16 %v1489, %v1487
    %v1542 = vpack.c.b16 %v1490, %v1488
    %v1543 = vpack.c.b16 %v1493, %v1491
    %v1544 = vpack.c.b16 %v1494, %v1492
    %v1545 = vpack.c.b16 %v1497, %v1495
    %v1546 = vpack.c.b16 %v1498, %v1496
    %v1547 = vpack.c.b16 %v1501, %v1499
    %v1548 = vpack.c.b16 %v1502, %v1500
    %v1549 = vpack.c.b16 %v1505, %v1503
    %v1550 = vpack.c.b16 %v1506, %v1504
    %v1551 = vpack.c.b16 %v1509, %v1507
    %v1552 = vpack.c.b16 %v1510, %v1508
    %v1553 = vpack.c.b16 %v1513, %v1511
    %v1554 = vpack.c.b16 %v1514, %v1512
    %v1555 = vpack.c.b16 %v1517, %v1515
    %v1556 = vpack.c.b16 %v1518, %v1516
    %v1557 = vpack.c.b16 %v1521, %v1519
    %v1558 = vpack.c.b16 %v1522, %v1520
    %v1559 = vpack.c.b16 %v1525, %v1523
    %v1560 = vpack.c.b16 %v1526, %v1524
    %v1561 = vpack.c.b16 %v1529, %v1527
    %v1562 = vpack.c.b16 %v1530, %v1528
    %1595 = vmatprep.subr.bf16.mxu0 %v1532
    %1596 = vmatpush1.bf16.msra.mxu0 %v1531
    %1597 = vmatprep.subr.bf16.mxu0 %v1534
    %1598 = vmatpush1.bf16.msra.mxu0 %v1533
    %1599 = vmatprep.subr.bf16.mxu0 %v1536
    %1600 = vmatpush1.bf16.msra.mxu0 %v1535
    %1601 = vmatprep.subr.bf16.mxu0 %v1538
    %1602 = vmatpush1.bf16.msra.mxu0 %v1537
    %1603 = vmatprep.subr.bf16.mxu0 %v1540
    %1604 = vmatpush1.bf16.msra.mxu0 %v1539
    %1605 = vmatprep.subr.bf16.mxu0 %v1542
    %1606 = vmatpush1.bf16.msra.mxu0 %v1541
    %1607 = vmatprep.subr.bf16.mxu0 %v1544
    %1608 = vmatpush1.bf16.msra.mxu0 %v1543
    %1609 = vmatprep.subr.bf16.mxu0 %v1546
    %1610 = vmatpush1.bf16.msra.mxu0 %v1545
    %1611 = vmatprep.subr.bf16.mxu0 %v1548
    %1612 = vmatpush1.bf16.msra.mxu0 %v1547
    %1613 = vmatprep.subr.bf16.mxu0 %v1550
    %1614 = vmatpush1.bf16.msra.mxu0 %v1549
    %1615 = vmatprep.subr.bf16.mxu0 %v1552
    %1616 = vmatpush1.bf16.msra.mxu0 %v1551
    %1617 = vmatprep.subr.bf16.mxu0 %v1554
    %1618 = vmatpush1.bf16.msra.mxu0 %v1553
    %1619 = vmatprep.subr.bf16.mxu0 %v1556
    %1620 = vmatpush1.bf16.msra.mxu0 %v1555
    %1621 = vmatprep.subr.bf16.mxu0 %v1558
    %1622 = vmatpush1.bf16.msra.mxu0 %v1557
    %1623 = vmatprep.subr.bf16.mxu0 %v1560
    %1624 = vmatpush1.bf16.msra.mxu0 %v1559
    %1625 = vmatprep.subr.bf16.mxu0 %v1562
    %1626 = vmatpush1.bf16.msra.mxu0 %v1561
    %1627 = vmatprep.mubr.bf16.mxu0 %v1400
    %1628 = vmatmul.mubr.bf16.gmra.mrb[0].mxu0 %v1399
    %v1629 = vpop.f32.mrb[0].mxu0
    %v1630 = vadd.f32 %v1434, %v1629
    %v1631 = vpop.f32.mrb[0].mxu0
    %v1632 = vadd.f32 %v1434, %v1631
    %v1633 = vpop.f32.mrb[0].mxu0
    %v1634 = vpop.f32.mrb[0].mxu0
    %1635 = vdwg.mxu0
    %v1636 = vxor.u32 %v1630, 2147483648
    %v1637 = vxor.u32 %v1632, 2147483648
    %v1638 = vmul.f32 %v1636, 1.442695
    %v1639 = vpow.pop %v1638
    %v1640 = vmul.f32 %v1637, 1.442695
    %v1641 = vpow.pop %v1640
    %v1642 = vadd.f32 %v1639, 1.0
    %v1643 = vadd.f32 %v1641, 1.0
    %v1644 = vrcp.pop %v1642
    %v1645 = vmul.f32 1.0, %v1644
    %v1646 = vrcp.pop %v1643
    %v1647 = vmul.f32 1.0, %v1646
    %v1648 = vmul.f32 %v900, %v1645
    %v1649 = vmul.f32 %v902, %v1647
    %v1652 = vcombine.low %v1648, %v1649
    %v1654 = vunpack.c.l.s4 1966171168
    %v1655 = vunpack.c.0.s8 %v1654
    %v1656 = vlaneseq
    %v1657 = vshrl.u32 %v1656, 7
    %v1658 = vsub.s32 %v1655, %v1657
    %v1659 = vrot.slane %v1652, %v1658
    %v1660 = vcombine.high %v1659, %v1659
    %v1662 = vunpack.c.l.s4 1966171168
    %v1663 = vunpack.c.0.s8 %v1662
    %v1664 = vlaneseq
    %v1665 = vshrl.u32 %v1664, 7
    %v1666 = vsub.s32 %v1663, %v1665
    %v1667 = vrot.slane %v1659, %v1666
    %v1669 = vunpack.c.l.s4 1966171168
    %v1670 = vunpack.c.0.s8 %v1669
    %v1671 = vlaneseq
    %v1672 = vshrl.u32 %v1671, 7
    %v1673 = vsub.s32 %v1670, %v1672
    %v1674 = vrot.slane %v1660, %v1673
    %v1675 = vlaneseq
    %v1676 = vshrl.u32 %v1675, 7
    %v1677 = vsub.s32 0, %v1676
    %v1678 = vrot.slane %v1667, %v1677
    %v1679 = vlaneseq
    %v1680 = vshrl.u32 %v1679, 7
    %v1681 = vsub.s32 1, %v1680
    %v1682 = vrot.slane %v1667, %v1681
    %v1683 = vlaneseq
    %v1684 = vshrl.u32 %v1683, 7
    %v1685 = vsub.s32 0, %v1684
    %v1686 = vrot.slane %v1674, %v1685
    %v1687 = vlaneseq
    %v1688 = vshrl.u32 %v1687, 7
    %v1689 = vsub.s32 1, %v1688
    %v1690 = vrot.slane %v1674, %v1689
    %v1691 = vcombine.low %v1678, %v1682
    %v1692 = vcombine.low %v1686, %v1690
    %v1695 = vmul.f32 %v317, %v1691
    %v1696 = vmul.f32 %v318, %v1692
    %1697 = vst [vmem:[%s9] sm:$0xff] %v1695
    %1698 = vst [vmem:[%s9 + $0x8] sm:$0xff] %v1696
    // Predicated region
    $region62: #{_forward_impl.1} parent=1 // pred_check
      _
    $region63: #{_forward_impl.1} parent=1 // pred_check_branch
      %1700 = sbr.rel (0) target = $region65
    $region64: #{_forward_impl.1} parent=1 // pred_region
      _
    $region65: #{_forward_impl.1} parent=1 // pred_fallthru
      _
    // Predicated region
    $region66: #{_forward_impl.1} parent=1 // pred_check
      _
    $region67: #{_forward_impl.1} parent=1 // pred_check_branch
      %1702 = sbr.rel (0) target = $region69
    $region68: #{_forward_impl.1} parent=1 // pred_region
      _
    $region69: #{_forward_impl.1} parent=1 // pred_fallthru
      _
    %1703 = vsyncpa [#allocation3], 1
    %1704 = vsyncpa [#allocation6], 1
    %1705 = vsyncpa [#allocation9], 1
    %1706 = vsyncpa [#allocation4], 1

</llo_original>
